<compile_context>
chip_gen: v6e
topology: v6e:2x2x1
jax: 0.10.0
libtpu: 0.0.40
codegen_flags: <defaults>
</compile_context>

<pallas_src>
import jax
import jax.numpy as jnp
from jax.experimental import pallas as pl
from jax.experimental.pallas import tpu as pltpu


K_IN = 28 * 28        # 784
K_PAD = 896           # 7 * 128  (padded contraction dim for fc1)
HID = 512
N_OUT = 10
N_OUT_PAD = 128       # lane-dense padded final width
SMALL_BATCH = 256     # single-grid-step latency path at or below this


def mlp_kernel(x_ref, w1_ref, b1_ref, w2_ref, b2_ref,
               w3_ref, b3_ref, w4_ref, b4_ref, o_ref):
    # fc1 + relu   (bf16 operands on the MXU, f32 accumulation / epilogue)
    h = jnp.dot(x_ref[...], w1_ref[...], preferred_element_type=jnp.float32)
    h = jnp.maximum(h + b1_ref[...], 0.0).astype(jnp.bfloat16)
    # fc2 + relu
    h = jnp.dot(h, w2_ref[...], preferred_element_type=jnp.float32)
    h = jnp.maximum(h + b2_ref[...], 0.0).astype(jnp.bfloat16)
    # fc3 + relu   (the "cuda:1" half in the original module)
    h = jnp.dot(h, w3_ref[...], preferred_element_type=jnp.float32)
    h = jnp.maximum(h + b3_ref[...], 0.0).astype(jnp.bfloat16)
    # fc4 (no activation) -> lane-dense (tile_m, 128) store; real cols = 10
    o = jnp.dot(h, w4_ref[...], preferred_element_type=jnp.float32)
    o_ref[...] = (o + b4_ref[...]).astype(o_ref.dtype)


def _round_up(x, m):
    return (x + m - 1) // m * m


def prepare_params(params):
    """One-time weight prep: pad + cast matmul operands to bf16.

    Call once and cache the result; the per-call forward then does zero
    weight-side work (hoisted out of model_parallel_nn_forward per review).
    Biases stay f32 (epilogue runs in f32 on the VPU).
    """
    (w1, b1), (w2, b2), (w3, b3), (w4, b4) = params
    w1_p = jnp.pad(w1.astype(jnp.bfloat16), ((0, K_PAD - K_IN), (0, 0)))
    w2_b = w2.astype(jnp.bfloat16)
    w3_b = w3.astype(jnp.bfloat16)
    w4_p = jnp.pad(w4.astype(jnp.bfloat16), ((0, 0), (0, N_OUT_PAD - N_OUT)))
    b4_p = jnp.pad(b4, ((0, 0), (0, N_OUT_PAD - N_OUT)))
    return (w1_p, b1, w2_b, b2, w3_b, b3, w4_p, b4_p)


def _choose_tile(B, tile_m):
    """Batch tile: single step for small B (latency path); for large B pick a
    16-aligned tile capped so the grid has >= 2 steps (lets the "parallel"
    batch axis shard across both v7x TensorCores; no effect on v5e/v6e)."""
    B16 = _round_up(B, 16)            # bf16 packs 16 rows per sublane group
    if B16 <= SMALL_BATCH:
        return B16
    half = _round_up(pl.cdiv(B16, 2), 16)
    return min(tile_m, half)


def model_parallel_nn_forward(x, prepared, *, tile_m=512):
    """x: (B, 1, 28, 28) or (B, 784) float32. Returns (B, 10) float32.

    `prepared` is the output of prepare_params() (padded bf16 weights)."""
    w1_p, b1, w2_b, b2, w3_b, b3, w4_p, b4_p = prepared

    x2d = x.reshape(-1, K_IN)
    B = x2d.shape[0]

    tm = _choose_tile(B, tile_m)
    B_pad = _round_up(B, tm)

    # Single fused pad on an already-bf16 buffer (no f32 zeros intermediate).
    x_p = jnp.pad(x2d.astype(jnp.bfloat16),
                  ((0, B_pad - B), (0, K_PAD - K_IN)))

    # Weights/biases: constant block index -> DMA'd once, VMEM-resident
    # across the whole grid.
    full = lambda arr: pl.BlockSpec(arr.shape, lambda i: (0, 0))

    out = pl.pallas_call(
        mlp_kernel,
        out_shape=jax.ShapeDtypeStruct((B_pad, N_OUT_PAD), jnp.float32),
        grid_spec=pltpu.PrefetchScalarGridSpec(
            num_scalar_prefetch=0,
            grid=(B_pad // tm,),
            in_specs=[
                pl.BlockSpec((tm, K_PAD), lambda i: (i, 0)),    # x tile
                full(w1_p), full(b1),
                full(w2_b), full(b2),
                full(w3_b), full(b3),
                full(w4_p), full(b4_p),
            ],
            out_specs=pl.BlockSpec((tm, N_OUT_PAD), lambda i: (i, 0)),
        ),
        compiler_params=pltpu.CompilerParams(
            dimension_semantics=("parallel",),   # batch axis; shards across v7x TCs
        ),
    )(x_p, w1_p, b1, w2_b, b2, w3_b, b3, w4_p, b4_p)

    # Drop batch padding and the lane padding of the final layer.
    # (Latency-critical callers may instead consume `out` directly and fuse
    # this slice into their consumer.)
    return out[:B, :N_OUT]


def init_params(key):
    """Deterministic init mimicking nn.Linear's U(-1/sqrt(fan_in), 1/sqrt(fan_in)).
    Weights stored transposed as (in_features, out_features)."""
    dims = [(K_IN, HID), (HID, HID), (HID, HID), (HID, N_OUT)]
    params = []
    for (fan_in, fan_out) in dims:
        key, kw, kb = jax.random.split(key, 3)
        bound = 1.0 / jnp.sqrt(float(fan_in))
        w = jax.random.uniform(kw, (fan_in, fan_out), jnp.float32, -bound, bound)
        b = jax.random.uniform(kb, (1, fan_out), jnp.float32, -bound, bound)
        params.append((w, b))
    return params


def reference_forward(x, params):
    """Same math as the kernel (bf16 matmul operands, f32 accumulation)."""
    (w1, b1), (w2, b2), (w3, b3), (w4, b4) = params

    def mm(a, w):
        return jnp.dot(a.astype(jnp.bfloat16), w.astype(jnp.bfloat16),
                       preferred_element_type=jnp.float32)

    h = x.reshape(-1, K_IN).astype(jnp.float32)
    h = jnp.maximum(mm(h, w1) + b1, 0.0)
    h = jnp.maximum(mm(h, w2) + b2, 0.0)
    h = jnp.maximum(mm(h, w3) + b3, 0.0)
    return mm(h, w4) + b4


if __name__ == "__main__":
    key = jax.random.PRNGKey(0)
    key, kx = jax.random.split(key)
    params = init_params(key)

    # One-time weight prep (cached; reused across every forward call).
    prepared = prepare_params(params)
    prepared = jax.block_until_ready(prepared)

    fwd = jax.jit(model_parallel_nn_forward)

    # Small MNIST-like batch (latency path: one grid step), NCHW.
    x = jax.random.normal(kx, (8, 1, 28, 28), jnp.float32)
    out = jax.block_until_ready(fwd(x, prepared))
    ref = reference_forward(x, params)
    assert out.shape == (8, N_OUT)
    assert jnp.allclose(out, ref, atol=1e-2, rtol=1e-2), "small-batch mismatch"

    # Larger batch exercises the >=2-step tiled path (v7x dual-TC sharding).
    key, kx2 = jax.random.split(key)
    x_big = jax.random.normal(kx2, (384, 1, 28, 28), jnp.float32)
    out_big = jax.block_until_ready(fwd(x_big, prepared))
    ref_big = reference_forward(x_big, params)
    assert out_big.shape == (384, N_OUT)
    assert jnp.allclose(out_big, ref_big, atol=1e-2, rtol=1e-2), "big-batch mismatch"

    print("KERNEL_OK")
</pallas_src>

<mosaic_0001>
module attributes {stable_mosaic.version = 11 : i64} {
  func.func @mlp_kernel(%arg0: i32, %arg1: memref<16x896xbf16, #tpu.memory_space<vmem>>, %arg2: memref<896x512xbf16, #tpu.memory_space<vmem>>, %arg3: memref<1x512xf32, #tpu.memory_space<vmem>>, %arg4: memref<512x512xbf16, #tpu.memory_space<vmem>>, %arg5: memref<1x512xf32, #tpu.memory_space<vmem>>, %arg6: memref<512x512xbf16, #tpu.memory_space<vmem>>, %arg7: memref<1x512xf32, #tpu.memory_space<vmem>>, %arg8: memref<512x128xbf16, #tpu.memory_space<vmem>>, %arg9: memref<1x128xf32, #tpu.memory_space<vmem>>, %arg10: memref<16x128xf32, #tpu.memory_space<vmem>>) attributes {dimension_semantics = [#tpu.dimension_semantics<parallel>], iteration_bounds = array<i64: 1>, scalar_prefetch = 0 : i64, scratch_operands = 0 : i64, tpu.core_type = #tpu.core_type<tc>, window_params = [{transform_indices = @transform_0, window_bounds = array<i64: 16, 896>}, {pipeline_mode = #tpu.pipeline_mode<synchronous>, transform_indices = @transform_1, window_bounds = array<i64: 896, 512>}, {pipeline_mode = #tpu.pipeline_mode<synchronous>, transform_indices = @transform_2, window_bounds = array<i64: 1, 512>}, {pipeline_mode = #tpu.pipeline_mode<synchronous>, transform_indices = @transform_3, window_bounds = array<i64: 512, 512>}, {pipeline_mode = #tpu.pipeline_mode<synchronous>, transform_indices = @transform_4, window_bounds = array<i64: 1, 512>}, {pipeline_mode = #tpu.pipeline_mode<synchronous>, transform_indices = @transform_5, window_bounds = array<i64: 512, 512>}, {pipeline_mode = #tpu.pipeline_mode<synchronous>, transform_indices = @transform_6, window_bounds = array<i64: 1, 512>}, {pipeline_mode = #tpu.pipeline_mode<synchronous>, transform_indices = @transform_7, window_bounds = array<i64: 512, 128>}, {pipeline_mode = #tpu.pipeline_mode<synchronous>, transform_indices = @transform_8, window_bounds = array<i64: 1, 128>}, {transform_indices = @transform_9, window_bounds = array<i64: 16, 128>}]} {
    %c0 = arith.constant 0 : index
    %c0_0 = arith.constant 0 : index
    %0 = vector.load %arg1[%c0, %c0_0] : memref<16x896xbf16, #tpu.memory_space<vmem>>, vector<16x896xbf16>
    %c0_1 = arith.constant 0 : index
    %c0_2 = arith.constant 0 : index
    %1 = vector.load %arg2[%c0_1, %c0_2] : memref<896x512xbf16, #tpu.memory_space<vmem>>, vector<896x512xbf16>
    %cst = arith.constant dense<0.000000e+00> : vector<16x512xf32>
    %2 = tpu.matmul %0, %1, %cst {dimension_numbers = #tpu.dot_dimension_numbers<[1], [0], [0], [1], [0, 0, 1, 1], [], []>} : vector<16x896xbf16>, vector<896x512xbf16>, vector<16x512xf32> -> vector<16x512xf32>
    %c0_3 = arith.constant 0 : index
    %c0_4 = arith.constant 0 : index
    %3 = vector.load %arg3[%c0_3, %c0_4] : memref<1x512xf32, #tpu.memory_space<vmem>>, vector<1x512xf32>
    %4 = vector.broadcast %3 : vector<1x512xf32> to vector<16x512xf32>
    %5 = arith.addf %2, %4 : vector<16x512xf32>
    %cst_5 = arith.constant 0.000000e+00 : f32
    %6 = vector.broadcast %cst_5 : f32 to vector<16x512xf32>
    %7 = arith.maximumf %5, %6 : vector<16x512xf32>
    %8 = arith.truncf %7 : vector<16x512xf32> to vector<16x512xbf16>
    %c0_6 = arith.constant 0 : index
    %c0_7 = arith.constant 0 : index
    %9 = vector.load %arg4[%c0_6, %c0_7] : memref<512x512xbf16, #tpu.memory_space<vmem>>, vector<512x512xbf16>
    %cst_8 = arith.constant dense<0.000000e+00> : vector<16x512xf32>
    %10 = tpu.matmul %8, %9, %cst_8 {dimension_numbers = #tpu.dot_dimension_numbers<[1], [0], [0], [1], [0, 0, 1, 1], [], []>} : vector<16x512xbf16>, vector<512x512xbf16>, vector<16x512xf32> -> vector<16x512xf32>
    %c0_9 = arith.constant 0 : index
    %c0_10 = arith.constant 0 : index
    %11 = vector.load %arg5[%c0_9, %c0_10] : memref<1x512xf32, #tpu.memory_space<vmem>>, vector<1x512xf32>
    %12 = vector.broadcast %11 : vector<1x512xf32> to vector<16x512xf32>
    %13 = arith.addf %10, %12 : vector<16x512xf32>
    %cst_11 = arith.constant 0.000000e+00 : f32
    %14 = vector.broadcast %cst_11 : f32 to vector<16x512xf32>
    %15 = arith.maximumf %13, %14 : vector<16x512xf32>
    %16 = arith.truncf %15 : vector<16x512xf32> to vector<16x512xbf16>
    %c0_12 = arith.constant 0 : index
    %c0_13 = arith.constant 0 : index
    %17 = vector.load %arg6[%c0_12, %c0_13] : memref<512x512xbf16, #tpu.memory_space<vmem>>, vector<512x512xbf16>
    %cst_14 = arith.constant dense<0.000000e+00> : vector<16x512xf32>
    %18 = tpu.matmul %16, %17, %cst_14 {dimension_numbers = #tpu.dot_dimension_numbers<[1], [0], [0], [1], [0, 0, 1, 1], [], []>} : vector<16x512xbf16>, vector<512x512xbf16>, vector<16x512xf32> -> vector<16x512xf32>
    %c0_15 = arith.constant 0 : index
    %c0_16 = arith.constant 0 : index
    %19 = vector.load %arg7[%c0_15, %c0_16] : memref<1x512xf32, #tpu.memory_space<vmem>>, vector<1x512xf32>
    %20 = vector.broadcast %19 : vector<1x512xf32> to vector<16x512xf32>
    %21 = arith.addf %18, %20 : vector<16x512xf32>
    %cst_17 = arith.constant 0.000000e+00 : f32
    %22 = vector.broadcast %cst_17 : f32 to vector<16x512xf32>
    %23 = arith.maximumf %21, %22 : vector<16x512xf32>
    %24 = arith.truncf %23 : vector<16x512xf32> to vector<16x512xbf16>
    %c0_18 = arith.constant 0 : index
    %c0_19 = arith.constant 0 : index
    %25 = vector.load %arg8[%c0_18, %c0_19] : memref<512x128xbf16, #tpu.memory_space<vmem>>, vector<512x128xbf16>
    %cst_20 = arith.constant dense<0.000000e+00> : vector<16x128xf32>
    %26 = tpu.matmul %24, %25, %cst_20 {dimension_numbers = #tpu.dot_dimension_numbers<[1], [0], [0], [1], [0, 0, 1, 1], [], []>} : vector<16x512xbf16>, vector<512x128xbf16>, vector<16x128xf32> -> vector<16x128xf32>
    %c0_21 = arith.constant 0 : index
    %c0_22 = arith.constant 0 : index
    %27 = vector.load %arg9[%c0_21, %c0_22] : memref<1x128xf32, #tpu.memory_space<vmem>>, vector<1x128xf32>
    %28 = vector.broadcast %27 : vector<1x128xf32> to vector<16x128xf32>
    %29 = arith.addf %26, %28 : vector<16x128xf32>
    %c0_23 = arith.constant 0 : index
    %c0_24 = arith.constant 0 : index
    %30 = vector.load %arg10[%c0_23, %c0_24] : memref<16x128xf32, #tpu.memory_space<vmem>>, vector<16x128xf32>
    tpu.vector_store %arg10[%c0_23, %c0_24], %29 {strides = array<i32>} : memref<16x128xf32, #tpu.memory_space<vmem>>, vector<16x128xf32>,
    return
  }
  func.func @transform_0(%arg0: i32) -> (i32, i32) {
    %c0_i32 = arith.constant 0 : i32
    %c0_i32_0 = arith.constant 0 : i32
    return %arg0, %c0_i32 : i32, i32
  }
  func.func @transform_1(%arg0: i32) -> (i32, i32) {
    %c0_i32 = arith.constant 0 : i32
    %c0_i32_0 = arith.constant 0 : i32
    %c0_i32_1 = arith.constant 0 : i32
    return %c0_i32, %c0_i32_0 : i32, i32
  }
  func.func @transform_2(%arg0: i32) -> (i32, i32) {
    %c0_i32 = arith.constant 0 : i32
    %c0_i32_0 = arith.constant 0 : i32
    %c0_i32_1 = arith.constant 0 : i32
    return %c0_i32, %c0_i32_0 : i32, i32
  }
  func.func @transform_3(%arg0: i32) -> (i32, i32) {
    %c0_i32 = arith.constant 0 : i32
    %c0_i32_0 = arith.constant 0 : i32
    %c0_i32_1 = arith.constant 0 : i32
    return %c0_i32, %c0_i32_0 : i32, i32
  }
  func.func @transform_4(%arg0: i32) -> (i32, i32) {
    %c0_i32 = arith.constant 0 : i32
    %c0_i32_0 = arith.constant 0 : i32
    %c0_i32_1 = arith.constant 0 : i32
    return %c0_i32, %c0_i32_0 : i32, i32
  }
  func.func @transform_5(%arg0: i32) -> (i32, i32) {
    %c0_i32 = arith.constant 0 : i32
    %c0_i32_0 = arith.constant 0 : i32
    %c0_i32_1 = arith.constant 0 : i32
    return %c0_i32, %c0_i32_0 : i32, i32
  }
  func.func @transform_6(%arg0: i32) -> (i32, i32) {
    %c0_i32 = arith.constant 0 : i32
    %c0_i32_0 = arith.constant 0 : i32
    %c0_i32_1 = arith.constant 0 : i32
    return %c0_i32, %c0_i32_0 : i32, i32
  }
  func.func @transform_7(%arg0: i32) -> (i32, i32) {
    %c0_i32 = arith.constant 0 : i32
    %c0_i32_0 = arith.constant 0 : i32
    %c0_i32_1 = arith.constant 0 : i32
    return %c0_i32, %c0_i32_0 : i32, i32
  }
  func.func @transform_8(%arg0: i32) -> (i32, i32) {
    %c0_i32 = arith.constant 0 : i32
    %c0_i32_0 = arith.constant 0 : i32
    %c0_i32_1 = arith.constant 0 : i32
    return %c0_i32, %c0_i32_0 : i32, i32
  }
  func.func @transform_9(%arg0: i32) -> (i32, i32) {
    %c0_i32 = arith.constant 0 : i32
    %c0_i32_0 = arith.constant 0 : i32
    return %arg0, %c0_i32 : i32, i32
  }
}

</mosaic_0001>

<llo_original>
// kernel: model_parallel_nn_forward.1
$region0: #{model_parallel_nn_forward.1}
  #allocation0 [shape = 'u32[]', space=smem, size = 0x4, offset = 0x4, fixed_abs, tag = 'smem constant byte address 0x4 - core index']
  #allocation1 [shape = 'u32[144,128]{1,0:T(1,128)}', space=vmem, size = 0x12000, scoped, tag = 'internal scratch']
  %s0 = inlined_call_operand.vmem [shape: bf16[16,896], index: 0, kind: input, shape index: {}]
  %s1 = inlined_call_operand.hbm [shape: bf16[896,512], index: 1, kind: input, shape index: {}]
  %s2 = inlined_call_operand.vmem [shape: f32[1,512], index: 2, kind: input, shape index: {}]
  %s3 = inlined_call_operand.hbm [shape: bf16[512,512], index: 3, kind: input, shape index: {}]
  %s4 = inlined_call_operand.vmem [shape: f32[1,512], index: 4, kind: input, shape index: {}]
  %s5 = inlined_call_operand.hbm [shape: bf16[512,512], index: 5, kind: input, shape index: {}]
  %s6 = inlined_call_operand.vmem [shape: f32[1,512], index: 6, kind: input, shape index: {}]
  %s7 = inlined_call_operand.vmem [shape: bf16[512,128], index: 7, kind: input, shape index: {}]
  %s8 = inlined_call_operand.vmem [shape: f32[1,128], index: 8, kind: input, shape index: {}]
  %s9 = inlined_call_operand.vmem [shape: f32[16,128], index: 9, kind: output, shape index: {}]
  %s10 = sld [smem:[#allocation0]]
  $region58: #{model_parallel_nn_forward.1} parent=0
    _
  %s12 = ssub.s32 1, %s10
  %s13 = scalar_select 0, %s12, %s10
  $region1: #{model_parallel_nn_forward.1} parent=0
    #allocation2 [shape = 'u8[917504]{0}', space=vmem, size = 0xe0000, scoped, tag = 'input window, operand 1, single buffered']
    #allocation3 [shape = 's32[1]{0}', space=sflag, size = 0x4, scoped, tag = 'scoped memory for model_parallel_nn_forward.1']
    #allocation4 [shape = 'u8[524288]{0}', space=vmem, size = 0x80000, scoped, tag = 'input window, operand 3, single buffered']
    #allocation5 [shape = 's32[1]{0}', space=sflag, size = 0x4, scoped, tag = 'scoped memory for model_parallel_nn_forward.1']
    #allocation6 [shape = 'u8[524288]{0}', space=vmem, size = 0x80000, scoped, tag = 'input window, operand 5, single buffered']
    %14 = vsyncpa [#allocation3], 0
    %15 = vsyncpa [#allocation5], 0
    // Predicated region
    $region2: #{model_parallel_nn_forward.1} parent=1 // pred_check
      _
    $region3: #{model_parallel_nn_forward.1} parent=1 // pred_check_branch
      %17 = sbr.rel (0) target = $region5
    $region4: #{model_parallel_nn_forward.1} parent=1 // pred_region
      _
    $region5: #{model_parallel_nn_forward.1} parent=1 // pred_fallthru
      _
    // Predicated region
    $region6: #{model_parallel_nn_forward.1} parent=1 // pred_check
      _
    $region7: #{model_parallel_nn_forward.1} parent=1 // pred_check_branch
      %19 = sbr.rel (0) target = $region9
    $region8: #{model_parallel_nn_forward.1} parent=1 // pred_region
      %s21 = ssub.s32 28672, 28672
      %22 = vsyncadd [#allocation3], %s21
      %s23 = sshll.u32 [#allocation2], 4
      %s24 = int_to_ptr.vmem [resolvable:$true] %s23
      %29 = dma.hbm_to_vmem [thread:$0]  %s1, 28672, %s24, [#allocation3], 256, 256, 16
    $region9: #{model_parallel_nn_forward.1} parent=1 // pred_fallthru
      _
    // Predicated region
    $region10: #{model_parallel_nn_forward.1} parent=1 // pred_check
      _
    $region11: #{model_parallel_nn_forward.1} parent=1 // pred_check_branch
      %31 = sbr.rel (0) target = $region13
    $region12: #{model_parallel_nn_forward.1} parent=1 // pred_region
      _
    $region13: #{model_parallel_nn_forward.1} parent=1 // pred_fallthru
      _
    // Predicated region
    $region14: #{model_parallel_nn_forward.1} parent=1 // pred_check
      _
    $region15: #{model_parallel_nn_forward.1} parent=1 // pred_check_branch
      %33 = sbr.rel (0) target = $region17
    $region16: #{model_parallel_nn_forward.1} parent=1 // pred_region
      %s35 = ssub.s32 16384, 16384
      %36 = vsyncadd [#allocation5], %s35
      %s37 = sshll.u32 [#allocation4], 4
      %s38 = int_to_ptr.vmem [resolvable:$true] %s37
      %43 = dma.hbm_to_vmem [thread:$0]  %s3, 16384, %s38, [#allocation5], 256, 256, 16
    $region17: #{model_parallel_nn_forward.1} parent=1 // pred_fallthru
      _
    // Predicated region
    $region18: #{model_parallel_nn_forward.1} parent=1 // pred_check
      _
    $region19: #{model_parallel_nn_forward.1} parent=1 // pred_check_branch
      %45 = sbr.rel (0) target = $region21
    $region20: #{model_parallel_nn_forward.1} parent=1 // pred_region
      _
    $region21: #{model_parallel_nn_forward.1} parent=1 // pred_fallthru
      _
    // Predicated region
    $region22: #{model_parallel_nn_forward.1} parent=1 // pred_check
      _
    $region23: #{model_parallel_nn_forward.1} parent=1 // pred_check_branch
      %47 = sbr.rel (0) target = $region25
    $region24: #{model_parallel_nn_forward.1} parent=1 // pred_region
      %s49 = ssub.s32 16384, 16384
      %50 = vsyncadd [#allocation5], %s49
      %s51 = sshll.u32 [#allocation6], 4
      %s52 = int_to_ptr.vmem [resolvable:$true] %s51
      %57 = dma.hbm_to_vmem [thread:$0]  %s5, 16384, %s52, [#allocation5], 256, 256, 16
    $region25: #{model_parallel_nn_forward.1} parent=1 // pred_fallthru
      _
    // Predicated region
    $region26: #{model_parallel_nn_forward.1} parent=1 // pred_check
      _
    $region27: #{model_parallel_nn_forward.1} parent=1 // pred_check_branch
      %59 = sbr.rel (0) target = $region29
    $region28: #{model_parallel_nn_forward.1} parent=1 // pred_region
      _
    $region29: #{model_parallel_nn_forward.1} parent=1 // pred_fallthru
      _
    // Predicated region
    $region30: #{model_parallel_nn_forward.1} parent=1 // pred_check
      _
    $region31: #{model_parallel_nn_forward.1} parent=1 // pred_check_branch
      %61 = sbr.rel (0) target = $region33
    $region32: #{model_parallel_nn_forward.1} parent=1 // pred_region
      _
    $region33: #{model_parallel_nn_forward.1} parent=1 // pred_fallthru
      _
    // Predicated region
    $region34: #{model_parallel_nn_forward.1} parent=1 // pred_check
      _
    $region35: #{model_parallel_nn_forward.1} parent=1 // pred_check_branch
      %63 = sbr.rel (0) target = $region37
    $region36: #{model_parallel_nn_forward.1} parent=1 // pred_region
      _
    $region37: #{model_parallel_nn_forward.1} parent=1 // pred_fallthru
      _
    // Predicated region
    $region38: #{model_parallel_nn_forward.1} parent=1 // pred_check
      _
    $region39: #{model_parallel_nn_forward.1} parent=1 // pred_check_branch
      %65 = sbr.rel (0) target = $region41
    $region40: #{model_parallel_nn_forward.1} parent=1 // pred_region
      %66 = dma.done [#allocation3], 28672
    $region41: #{model_parallel_nn_forward.1} parent=1 // pred_fallthru
      _
    // Predicated region
    $region42: #{model_parallel_nn_forward.1} parent=1 // pred_check
      _
    $region43: #{model_parallel_nn_forward.1} parent=1 // pred_check_branch
      %68 = sbr.rel (0) target = $region45
    $region44: #{model_parallel_nn_forward.1} parent=1 // pred_region
      %69 = dma.done [#allocation5], 16384
    $region45: #{model_parallel_nn_forward.1} parent=1 // pred_fallthru
      _
    // Predicated region
    $region46: #{model_parallel_nn_forward.1} parent=1 // pred_check
      _
    $region47: #{model_parallel_nn_forward.1} parent=1 // pred_check_branch
      %71 = sbr.rel (0) target = $region49
    $region48: #{model_parallel_nn_forward.1} parent=1 // pred_region
      %72 = dma.done [#allocation5], 16384
    $region49: #{model_parallel_nn_forward.1} parent=1 // pred_fallthru
      _
    %v74 = vld [vmem:[%s0] sm:$0xff]
    %v75 = vld [vmem:[%s0 + $0x8] sm:$0xff]
    %v76 = vld [vmem:[%s0 + $0x10] sm:$0xff]
    %v77 = vld [vmem:[%s0 + $0x18] sm:$0xf]
    %v78 = vld [vmem:[%s0 + $0x1c] sm:$0xff]
    %v79 = vld [vmem:[%s0 + $0x24] sm:$0xff]
    %v80 = vld [vmem:[%s0 + $0x2c] sm:$0xff]
    %v81 = vld [vmem:[%s0 + $0x34] sm:$0xf]
    %v82 = vld [vmem:[#allocation2] sm:$0xff]
    %v83 = vld [vmem:[#allocation2 + $0x8] sm:$0xff]
    %v84 = vld [vmem:[#allocation2 + $0x10] sm:$0xff]
    %v85 = vld [vmem:[#allocation2 + $0x18] sm:$0xff]
    %v86 = vld [vmem:[#allocation2 + $0x20] sm:$0xff]
    %v87 = vld [vmem:[#allocation2 + $0x28] sm:$0xff]
    %v88 = vld [vmem:[#allocation2 + $0x30] sm:$0xff]
    %v89 = vld [vmem:[#allocation2 + $0x38] sm:$0xff]
    %v90 = vld [vmem:[#allocation2 + $0x40] sm:$0xff]
    %v91 = vld [vmem:[#allocation2 + $0x48] sm:$0xff]
    %v92 = vld [vmem:[#allocation2 + $0x50] sm:$0xff]
    %v93 = vld [vmem:[#allocation2 + $0x58] sm:$0xff]
    %v94 = vld [vmem:[#allocation2 + $0x60] sm:$0xff]
    %v95 = vld [vmem:[#allocation2 + $0x68] sm:$0xff]
    %v96 = vld [vmem:[#allocation2 + $0x70] sm:$0xff]
    %v97 = vld [vmem:[#allocation2 + $0x78] sm:$0xff]
    %v98 = vld [vmem:[#allocation2 + $0x80] sm:$0xff]
    %v99 = vld [vmem:[#allocation2 + $0x88] sm:$0xff]
    %v100 = vld [vmem:[#allocation2 + $0x90] sm:$0xff]
    %v101 = vld [vmem:[#allocation2 + $0x98] sm:$0xff]
    %v102 = vld [vmem:[#allocation2 + $0xa0] sm:$0xff]
    %v103 = vld [vmem:[#allocation2 + $0xa8] sm:$0xff]
    %v104 = vld [vmem:[#allocation2 + $0xb0] sm:$0xff]
    %v105 = vld [vmem:[#allocation2 + $0xb8] sm:$0xff]
    %v106 = vld [vmem:[#allocation2 + $0xc0] sm:$0xff]
    %v107 = vld [vmem:[#allocation2 + $0xc8] sm:$0xff]
    %v108 = vld [vmem:[#allocation2 + $0xd0] sm:$0xff]
    %v109 = vld [vmem:[#allocation2 + $0xd8] sm:$0xff]
    %v110 = vld [vmem:[#allocation2 + $0xe0] sm:$0xff]
    %v111 = vld [vmem:[#allocation2 + $0xe8] sm:$0xff]
    %v112 = vld [vmem:[#allocation2 + $0xf0] sm:$0xff]
    %v113 = vld [vmem:[#allocation2 + $0xf8] sm:$0xff]
    %v114 = vld [vmem:[#allocation2 + $0x100] sm:$0xff]
    %v115 = vld [vmem:[#allocation2 + $0x108] sm:$0xff]
    %v116 = vld [vmem:[#allocation2 + $0x110] sm:$0xff]
    %v117 = vld [vmem:[#allocation2 + $0x118] sm:$0xff]
    %v118 = vld [vmem:[#allocation2 + $0x120] sm:$0xff]
    %v119 = vld [vmem:[#allocation2 + $0x128] sm:$0xff]
    %v120 = vld [vmem:[#allocation2 + $0x130] sm:$0xff]
    %v121 = vld [vmem:[#allocation2 + $0x138] sm:$0xff]
    %v122 = vld [vmem:[#allocation2 + $0x140] sm:$0xff]
    %v123 = vld [vmem:[#allocation2 + $0x148] sm:$0xff]
    %v124 = vld [vmem:[#allocation2 + $0x150] sm:$0xff]
    %v125 = vld [vmem:[#allocation2 + $0x158] sm:$0xff]
    %v126 = vld [vmem:[#allocation2 + $0x160] sm:$0xff]
    %v127 = vld [vmem:[#allocation2 + $0x168] sm:$0xff]
    %v128 = vld [vmem:[#allocation2 + $0x170] sm:$0xff]
    %v129 = vld [vmem:[#allocation2 + $0x178] sm:$0xff]
    %v130 = vld [vmem:[#allocation2 + $0x180] sm:$0xff]
    %v131 = vld [vmem:[#allocation2 + $0x188] sm:$0xff]
    %v132 = vld [vmem:[#allocation2 + $0x190] sm:$0xff]
    %v133 = vld [vmem:[#allocation2 + $0x198] sm:$0xff]
    %v134 = vld [vmem:[#allocation2 + $0x1a0] sm:$0xff]
    %v135 = vld [vmem:[#allocation2 + $0x1a8] sm:$0xff]
    %v136 = vld [vmem:[#allocation2 + $0x1b0] sm:$0xff]
    %v137 = vld [vmem:[#allocation2 + $0x1b8] sm:$0xff]
    %v138 = vld [vmem:[#allocation2 + $0x1c0] sm:$0xff]
    %v139 = vld [vmem:[#allocation2 + $0x1c8] sm:$0xff]
    %v140 = vld [vmem:[#allocation2 + $0x1d0] sm:$0xff]
    %v141 = vld [vmem:[#allocation2 + $0x1d8] sm:$0xff]
    %v142 = vld [vmem:[#allocation2 + $0x1e0] sm:$0xff]
    %v143 = vld [vmem:[#allocation2 + $0x1e8] sm:$0xff]
    %v144 = vld [vmem:[#allocation2 + $0x1f0] sm:$0xff]
    %v145 = vld [vmem:[#allocation2 + $0x1f8] sm:$0xff]
    %v146 = vld [vmem:[#allocation2 + $0x200] sm:$0xff]
    %v147 = vld [vmem:[#allocation2 + $0x208] sm:$0xff]
    %v148 = vld [vmem:[#allocation2 + $0x210] sm:$0xff]
    %v149 = vld [vmem:[#allocation2 + $0x218] sm:$0xff]
    %v150 = vld [vmem:[#allocation2 + $0x220] sm:$0xff]
    %v151 = vld [vmem:[#allocation2 + $0x228] sm:$0xff]
    %v152 = vld [vmem:[#allocation2 + $0x230] sm:$0xff]
    %v153 = vld [vmem:[#allocation2 + $0x238] sm:$0xff]
    %v154 = vld [vmem:[#allocation2 + $0x240] sm:$0xff]
    %v155 = vld [vmem:[#allocation2 + $0x248] sm:$0xff]
    %v156 = vld [vmem:[#allocation2 + $0x250] sm:$0xff]
    %v157 = vld [vmem:[#allocation2 + $0x258] sm:$0xff]
    %v158 = vld [vmem:[#allocation2 + $0x260] sm:$0xff]
    %v159 = vld [vmem:[#allocation2 + $0x268] sm:$0xff]
    %v160 = vld [vmem:[#allocation2 + $0x270] sm:$0xff]
    %v161 = vld [vmem:[#allocation2 + $0x278] sm:$0xff]
    %v162 = vld [vmem:[#allocation2 + $0x280] sm:$0xff]
    %v163 = vld [vmem:[#allocation2 + $0x288] sm:$0xff]
    %v164 = vld [vmem:[#allocation2 + $0x290] sm:$0xff]
    %v165 = vld [vmem:[#allocation2 + $0x298] sm:$0xff]
    %v166 = vld [vmem:[#allocation2 + $0x2a0] sm:$0xff]
    %v167 = vld [vmem:[#allocation2 + $0x2a8] sm:$0xff]
    %v168 = vld [vmem:[#allocation2 + $0x2b0] sm:$0xff]
    %v169 = vld [vmem:[#allocation2 + $0x2b8] sm:$0xff]
    %v170 = vld [vmem:[#allocation2 + $0x2c0] sm:$0xff]
    %v171 = vld [vmem:[#allocation2 + $0x2c8] sm:$0xff]
    %v172 = vld [vmem:[#allocation2 + $0x2d0] sm:$0xff]
    %v173 = vld [vmem:[#allocation2 + $0x2d8] sm:$0xff]
    %v174 = vld [vmem:[#allocation2 + $0x2e0] sm:$0xff]
    %v175 = vld [vmem:[#allocation2 + $0x2e8] sm:$0xff]
    %v176 = vld [vmem:[#allocation2 + $0x2f0] sm:$0xff]
    %v177 = vld [vmem:[#allocation2 + $0x2f8] sm:$0xff]
    %v178 = vld [vmem:[#allocation2 + $0x300] sm:$0xff]
    %v179 = vld [vmem:[#allocation2 + $0x308] sm:$0xff]
    %v180 = vld [vmem:[#allocation2 + $0x310] sm:$0xff]
    %v181 = vld [vmem:[#allocation2 + $0x318] sm:$0xff]
    %v182 = vld [vmem:[#allocation2 + $0x320] sm:$0xff]
    %v183 = vld [vmem:[#allocation2 + $0x328] sm:$0xff]
    %v184 = vld [vmem:[#allocation2 + $0x330] sm:$0xff]
    %v185 = vld [vmem:[#allocation2 + $0x338] sm:$0xff]
    %v186 = vld [vmem:[#allocation2 + $0x340] sm:$0xff]
    %v187 = vld [vmem:[#allocation2 + $0x348] sm:$0xff]
    %v188 = vld [vmem:[#allocation2 + $0x350] sm:$0xff]
    %v189 = vld [vmem:[#allocation2 + $0x358] sm:$0xff]
    %v190 = vld [vmem:[#allocation2 + $0x360] sm:$0xff]
    %v191 = vld [vmem:[#allocation2 + $0x368] sm:$0xff]
    %v192 = vld [vmem:[#allocation2 + $0x370] sm:$0xff]
    %v193 = vld [vmem:[#allocation2 + $0x378] sm:$0xff]
    %v194 = vld [vmem:[#allocation2 + $0x380] sm:$0xff]
    %v195 = vld [vmem:[#allocation2 + $0x388] sm:$0xff]
    %v196 = vld [vmem:[#allocation2 + $0x390] sm:$0xff]
    %v197 = vld [vmem:[#allocation2 + $0x398] sm:$0xff]
    %v198 = vld [vmem:[#allocation2 + $0x3a0] sm:$0xff]
    %v199 = vld [vmem:[#allocation2 + $0x3a8] sm:$0xff]
    %v200 = vld [vmem:[#allocation2 + $0x3b0] sm:$0xff]
    %v201 = vld [vmem:[#allocation2 + $0x3b8] sm:$0xff]
    %v202 = vld [vmem:[#allocation2 + $0x3c0] sm:$0xff]
    %v203 = vld [vmem:[#allocation2 + $0x3c8] sm:$0xff]
    %v204 = vld [vmem:[#allocation2 + $0x3d0] sm:$0xff]
    %v205 = vld [vmem:[#allocation2 + $0x3d8] sm:$0xff]
    %v206 = vld [vmem:[#allocation2 + $0x3e0] sm:$0xff]
    %v207 = vld [vmem:[#allocation2 + $0x3e8] sm:$0xff]
    %v208 = vld [vmem:[#allocation2 + $0x3f0] sm:$0xff]
    %v209 = vld [vmem:[#allocation2 + $0x3f8] sm:$0xff]
    %v210 = vld [vmem:[#allocation2 + $0x400] sm:$0xff]
    %v211 = vld [vmem:[#allocation2 + $0x408] sm:$0xff]
    %v212 = vld [vmem:[#allocation2 + $0x410] sm:$0xff]
    %v213 = vld [vmem:[#allocation2 + $0x418] sm:$0xff]
    %v214 = vld [vmem:[#allocation2 + $0x420] sm:$0xff]
    %v215 = vld [vmem:[#allocation2 + $0x428] sm:$0xff]
    %v216 = vld [vmem:[#allocation2 + $0x430] sm:$0xff]
    %v217 = vld [vmem:[#allocation2 + $0x438] sm:$0xff]
    %v218 = vld [vmem:[#allocation2 + $0x440] sm:$0xff]
    %v219 = vld [vmem:[#allocation2 + $0x448] sm:$0xff]
    %v220 = vld [vmem:[#allocation2 + $0x450] sm:$0xff]
    %v221 = vld [vmem:[#allocation2 + $0x458] sm:$0xff]
    %v222 = vld [vmem:[#allocation2 + $0x460] sm:$0xff]
    %v223 = vld [vmem:[#allocation2 + $0x468] sm:$0xff]
    %v224 = vld [vmem:[#allocation2 + $0x470] sm:$0xff]
    %v225 = vld [vmem:[#allocation2 + $0x478] sm:$0xff]
    %v226 = vld [vmem:[#allocation2 + $0x480] sm:$0xff]
    %v227 = vld [vmem:[#allocation2 + $0x488] sm:$0xff]
    %v228 = vld [vmem:[#allocation2 + $0x490] sm:$0xff]
    %v229 = vld [vmem:[#allocation2 + $0x498] sm:$0xff]
    %v230 = vld [vmem:[#allocation2 + $0x4a0] sm:$0xff]
    %v231 = vld [vmem:[#allocation2 + $0x4a8] sm:$0xff]
    %v232 = vld [vmem:[#allocation2 + $0x4b0] sm:$0xff]
    %v233 = vld [vmem:[#allocation2 + $0x4b8] sm:$0xff]
    %v234 = vld [vmem:[#allocation2 + $0x4c0] sm:$0xff]
    %v235 = vld [vmem:[#allocation2 + $0x4c8] sm:$0xff]
    %v236 = vld [vmem:[#allocation2 + $0x4d0] sm:$0xff]
    %v237 = vld [vmem:[#allocation2 + $0x4d8] sm:$0xff]
    %v238 = vld [vmem:[#allocation2 + $0x4e0] sm:$0xff]
    %v239 = vld [vmem:[#allocation2 + $0x4e8] sm:$0xff]
    %v240 = vld [vmem:[#allocation2 + $0x4f0] sm:$0xff]
    %v241 = vld [vmem:[#allocation2 + $0x4f8] sm:$0xff]
    %v242 = vld [vmem:[#allocation2 + $0x500] sm:$0xff]
    %v243 = vld [vmem:[#allocation2 + $0x508] sm:$0xff]
    %v244 = vld [vmem:[#allocation2 + $0x510] sm:$0xff]
    %v245 = vld [vmem:[#allocation2 + $0x518] sm:$0xff]
    %v246 = vld [vmem:[#allocation2 + $0x520] sm:$0xff]
    %v247 = vld [vmem:[#allocation2 + $0x528] sm:$0xff]
    %v248 = vld [vmem:[#allocation2 + $0x530] sm:$0xff]
    %v249 = vld [vmem:[#allocation2 + $0x538] sm:$0xff]
    %v250 = vld [vmem:[#allocation2 + $0x540] sm:$0xff]
    %v251 = vld [vmem:[#allocation2 + $0x548] sm:$0xff]
    %v252 = vld [vmem:[#allocation2 + $0x550] sm:$0xff]
    %v253 = vld [vmem:[#allocation2 + $0x558] sm:$0xff]
    %v254 = vld [vmem:[#allocation2 + $0x560] sm:$0xff]
    %v255 = vld [vmem:[#allocation2 + $0x568] sm:$0xff]
    %v256 = vld [vmem:[#allocation2 + $0x570] sm:$0xff]
    %v257 = vld [vmem:[#allocation2 + $0x578] sm:$0xff]
    %v258 = vld [vmem:[#allocation2 + $0x580] sm:$0xff]
    %v259 = vld [vmem:[#allocation2 + $0x588] sm:$0xff]
    %v260 = vld [vmem:[#allocation2 + $0x590] sm:$0xff]
    %v261 = vld [vmem:[#allocation2 + $0x598] sm:$0xff]
    %v262 = vld [vmem:[#allocation2 + $0x5a0] sm:$0xff]
    %v263 = vld [vmem:[#allocation2 + $0x5a8] sm:$0xff]
    %v264 = vld [vmem:[#allocation2 + $0x5b0] sm:$0xff]
    %v265 = vld [vmem:[#allocation2 + $0x5b8] sm:$0xff]
    %v266 = vld [vmem:[#allocation2 + $0x5c0] sm:$0xff]
    %v267 = vld [vmem:[#allocation2 + $0x5c8] sm:$0xff]
    %v268 = vld [vmem:[#allocation2 + $0x5d0] sm:$0xff]
    %v269 = vld [vmem:[#allocation2 + $0x5d8] sm:$0xff]
    %v270 = vld [vmem:[#allocation2 + $0x5e0] sm:$0xff]
    %v271 = vld [vmem:[#allocation2 + $0x5e8] sm:$0xff]
    %v272 = vld [vmem:[#allocation2 + $0x5f0] sm:$0xff]
    %v273 = vld [vmem:[#allocation2 + $0x5f8] sm:$0xff]
    %v274 = vld [vmem:[#allocation2 + $0x600] sm:$0xff]
    %v275 = vld [vmem:[#allocation2 + $0x608] sm:$0xff]
    %v276 = vld [vmem:[#allocation2 + $0x610] sm:$0xff]
    %v277 = vld [vmem:[#allocation2 + $0x618] sm:$0xff]
    %v278 = vld [vmem:[#allocation2 + $0x620] sm:$0xff]
    %v279 = vld [vmem:[#allocation2 + $0x628] sm:$0xff]
    %v280 = vld [vmem:[#allocation2 + $0x630] sm:$0xff]
    %v281 = vld [vmem:[#allocation2 + $0x638] sm:$0xff]
    %v282 = vld [vmem:[#allocation2 + $0x640] sm:$0xff]
    %v283 = vld [vmem:[#allocation2 + $0x648] sm:$0xff]
    %v284 = vld [vmem:[#allocation2 + $0x650] sm:$0xff]
    %v285 = vld [vmem:[#allocation2 + $0x658] sm:$0xff]
    %v286 = vld [vmem:[#allocation2 + $0x660] sm:$0xff]
    %v287 = vld [vmem:[#allocation2 + $0x668] sm:$0xff]
    %v288 = vld [vmem:[#allocation2 + $0x670] sm:$0xff]
    %v289 = vld [vmem:[#allocation2 + $0x678] sm:$0xff]
    %v290 = vld [vmem:[#allocation2 + $0x680] sm:$0xff]
    %v291 = vld [vmem:[#allocation2 + $0x688] sm:$0xff]
    %v292 = vld [vmem:[#allocation2 + $0x690] sm:$0xff]
    %v293 = vld [vmem:[#allocation2 + $0x698] sm:$0xff]
    %v294 = vld [vmem:[#allocation2 + $0x6a0] sm:$0xff]
    %v295 = vld [vmem:[#allocation2 + $0x6a8] sm:$0xff]
    %v296 = vld [vmem:[#allocation2 + $0x6b0] sm:$0xff]
    %v297 = vld [vmem:[#allocation2 + $0x6b8] sm:$0xff]
    %v298 = vld [vmem:[#allocation2 + $0x6c0] sm:$0xff]
    %v299 = vld [vmem:[#allocation2 + $0x6c8] sm:$0xff]
    %v300 = vld [vmem:[#allocation2 + $0x6d0] sm:$0xff]
    %v301 = vld [vmem:[#allocation2 + $0x6d8] sm:$0xff]
    %v302 = vld [vmem:[#allocation2 + $0x6e0] sm:$0xff]
    %v303 = vld [vmem:[#allocation2 + $0x6e8] sm:$0xff]
    %v304 = vld [vmem:[#allocation2 + $0x6f0] sm:$0xff]
    %v305 = vld [vmem:[#allocation2 + $0x6f8] sm:$0xff]
    %v306 = vld [vmem:[%s2] sm:$0xf]
    %v308 = vlaneseq
    %v309 = vshrl.u32 %v308, 7
    %v310 = vsub.s32 0, %v309
    %v311 = vrot.slane %v306, %v310
    %v312 = vlaneseq
    %v313 = vshrl.u32 %v312, 7
    %v314 = vsub.s32 1, %v313
    %v315 = vrot.slane %v306, %v314
    %v316 = vlaneseq
    %v317 = vshrl.u32 %v316, 7
    %v318 = vsub.s32 2, %v317
    %v319 = vrot.slane %v306, %v318
    %v320 = vlaneseq
    %v321 = vshrl.u32 %v320, 7
    %v322 = vsub.s32 3, %v321
    %v323 = vrot.slane %v306, %v322
    %v336 = vunpack.c.l.b16 %v74
    %v337 = vunpack.c.h.b16 %v74
    %v338 = vunpack.c.l.b16 %v75
    %v339 = vunpack.c.h.b16 %v75
    %v340 = vunpack.c.l.b16 %v76
    %v341 = vunpack.c.h.b16 %v76
    %v342 = vunpack.c.l.b16 %v77
    %v343 = vunpack.c.l.b16 %v78
    %v344 = vunpack.c.h.b16 %v78
    %v345 = vunpack.c.l.b16 %v79
    %v346 = vunpack.c.h.b16 %v79
    %v347 = vunpack.c.l.b16 %v80
    %v348 = vunpack.c.h.b16 %v80
    %v349 = vunpack.c.l.b16 %v81
    %v350 = vpack.c.b16 %v343, %v336
    %v351 = vpack.c.b16 %v344, %v337
    %v352 = vpack.c.b16 %v345, %v338
    %v353 = vpack.c.b16 %v346, %v339
    %v354 = vpack.c.b16 %v347, %v340
    %v355 = vpack.c.b16 %v348, %v341
    %v356 = vpack.c.b16 %v349, %v342
    %v588 = vunpack.c.l.b16 %v82
    %v589 = vunpack.c.h.b16 %v82
    %v590 = vunpack.c.l.b16 %v83
    %v591 = vunpack.c.h.b16 %v83
    %v592 = vunpack.c.l.b16 %v84
    %v593 = vunpack.c.h.b16 %v84
    %v594 = vunpack.c.l.b16 %v85
    %v595 = vunpack.c.h.b16 %v85
    %v596 = vunpack.c.l.b16 %v86
    %v597 = vunpack.c.h.b16 %v86
    %v598 = vunpack.c.l.b16 %v87
    %v599 = vunpack.c.h.b16 %v87
    %v600 = vunpack.c.l.b16 %v88
    %v601 = vunpack.c.h.b16 %v88
    %v602 = vunpack.c.l.b16 %v89
    %v603 = vunpack.c.h.b16 %v89
    %v604 = vunpack.c.l.b16 %v90
    %v605 = vunpack.c.h.b16 %v90
    %v606 = vunpack.c.l.b16 %v91
    %v607 = vunpack.c.h.b16 %v91
    %v608 = vunpack.c.l.b16 %v92
    %v609 = vunpack.c.h.b16 %v92
    %v610 = vunpack.c.l.b16 %v93
    %v611 = vunpack.c.h.b16 %v93
    %v612 = vunpack.c.l.b16 %v94
    %v613 = vunpack.c.h.b16 %v94
    %v614 = vunpack.c.l.b16 %v95
    %v615 = vunpack.c.h.b16 %v95
    %v616 = vunpack.c.l.b16 %v96
    %v617 = vunpack.c.h.b16 %v96
    %v618 = vunpack.c.l.b16 %v97
    %v619 = vunpack.c.h.b16 %v97
    %v620 = vunpack.c.l.b16 %v98
    %v621 = vunpack.c.h.b16 %v98
    %v622 = vunpack.c.l.b16 %v99
    %v623 = vunpack.c.h.b16 %v99
    %v624 = vunpack.c.l.b16 %v100
    %v625 = vunpack.c.h.b16 %v100
    %v626 = vunpack.c.l.b16 %v101
    %v627 = vunpack.c.h.b16 %v101
    %v628 = vunpack.c.l.b16 %v102
    %v629 = vunpack.c.h.b16 %v102
    %v630 = vunpack.c.l.b16 %v103
    %v631 = vunpack.c.h.b16 %v103
    %v632 = vunpack.c.l.b16 %v104
    %v633 = vunpack.c.h.b16 %v104
    %v634 = vunpack.c.l.b16 %v105
    %v635 = vunpack.c.h.b16 %v105
    %v636 = vunpack.c.l.b16 %v106
    %v637 = vunpack.c.h.b16 %v106
    %v638 = vunpack.c.l.b16 %v107
    %v639 = vunpack.c.h.b16 %v107
    %v640 = vunpack.c.l.b16 %v108
    %v641 = vunpack.c.h.b16 %v108
    %v642 = vunpack.c.l.b16 %v109
    %v643 = vunpack.c.h.b16 %v109
    %v644 = vunpack.c.l.b16 %v110
    %v645 = vunpack.c.h.b16 %v110
    %v646 = vunpack.c.l.b16 %v111
    %v647 = vunpack.c.h.b16 %v111
    %v648 = vunpack.c.l.b16 %v112
    %v649 = vunpack.c.h.b16 %v112
    %v650 = vunpack.c.l.b16 %v113
    %v651 = vunpack.c.h.b16 %v113
    %v652 = vunpack.c.l.b16 %v114
    %v653 = vunpack.c.h.b16 %v114
    %v654 = vunpack.c.l.b16 %v115
    %v655 = vunpack.c.h.b16 %v115
    %v656 = vunpack.c.l.b16 %v116
    %v657 = vunpack.c.h.b16 %v116
    %v658 = vunpack.c.l.b16 %v117
    %v659 = vunpack.c.h.b16 %v117
    %v660 = vunpack.c.l.b16 %v118
    %v661 = vunpack.c.h.b16 %v118
    %v662 = vunpack.c.l.b16 %v119
    %v663 = vunpack.c.h.b16 %v119
    %v664 = vunpack.c.l.b16 %v120
    %v665 = vunpack.c.h.b16 %v120
    %v666 = vunpack.c.l.b16 %v121
    %v667 = vunpack.c.h.b16 %v121
    %v668 = vunpack.c.l.b16 %v122
    %v669 = vunpack.c.h.b16 %v122
    %v670 = vunpack.c.l.b16 %v123
    %v671 = vunpack.c.h.b16 %v123
    %v672 = vunpack.c.l.b16 %v124
    %v673 = vunpack.c.h.b16 %v124
    %v674 = vunpack.c.l.b16 %v125
    %v675 = vunpack.c.h.b16 %v125
    %v676 = vunpack.c.l.b16 %v126
    %v677 = vunpack.c.h.b16 %v126
    %v678 = vunpack.c.l.b16 %v127
    %v679 = vunpack.c.h.b16 %v127
    %v680 = vunpack.c.l.b16 %v128
    %v681 = vunpack.c.h.b16 %v128
    %v682 = vunpack.c.l.b16 %v129
    %v683 = vunpack.c.h.b16 %v129
    %v684 = vunpack.c.l.b16 %v130
    %v685 = vunpack.c.h.b16 %v130
    %v686 = vunpack.c.l.b16 %v131
    %v687 = vunpack.c.h.b16 %v131
    %v688 = vunpack.c.l.b16 %v132
    %v689 = vunpack.c.h.b16 %v132
    %v690 = vunpack.c.l.b16 %v133
    %v691 = vunpack.c.h.b16 %v133
    %v692 = vunpack.c.l.b16 %v134
    %v693 = vunpack.c.h.b16 %v134
    %v694 = vunpack.c.l.b16 %v135
    %v695 = vunpack.c.h.b16 %v135
    %v696 = vunpack.c.l.b16 %v136
    %v697 = vunpack.c.h.b16 %v136
    %v698 = vunpack.c.l.b16 %v137
    %v699 = vunpack.c.h.b16 %v137
    %v700 = vunpack.c.l.b16 %v138
    %v701 = vunpack.c.h.b16 %v138
    %v702 = vunpack.c.l.b16 %v139
    %v703 = vunpack.c.h.b16 %v139
    %v704 = vunpack.c.l.b16 %v140
    %v705 = vunpack.c.h.b16 %v140
    %v706 = vunpack.c.l.b16 %v141
    %v707 = vunpack.c.h.b16 %v141
    %v708 = vunpack.c.l.b16 %v142
    %v709 = vunpack.c.h.b16 %v142
    %v710 = vunpack.c.l.b16 %v143
    %v711 = vunpack.c.h.b16 %v143
    %v712 = vunpack.c.l.b16 %v144
    %v713 = vunpack.c.h.b16 %v144
    %v714 = vunpack.c.l.b16 %v145
    %v715 = vunpack.c.h.b16 %v145
    %v716 = vunpack.c.l.b16 %v146
    %v717 = vunpack.c.h.b16 %v146
    %v718 = vunpack.c.l.b16 %v147
    %v719 = vunpack.c.h.b16 %v147
    %v720 = vunpack.c.l.b16 %v148
    %v721 = vunpack.c.h.b16 %v148
    %v722 = vunpack.c.l.b16 %v149
    %v723 = vunpack.c.h.b16 %v149
    %v724 = vunpack.c.l.b16 %v150
    %v725 = vunpack.c.h.b16 %v150
    %v726 = vunpack.c.l.b16 %v151
    %v727 = vunpack.c.h.b16 %v151
    %v728 = vunpack.c.l.b16 %v152
    %v729 = vunpack.c.h.b16 %v152
    %v730 = vunpack.c.l.b16 %v153
    %v731 = vunpack.c.h.b16 %v153
    %v732 = vunpack.c.l.b16 %v154
    %v733 = vunpack.c.h.b16 %v154
    %v734 = vunpack.c.l.b16 %v155
    %v735 = vunpack.c.h.b16 %v155
    %v736 = vunpack.c.l.b16 %v156
    %v737 = vunpack.c.h.b16 %v156
    %v738 = vunpack.c.l.b16 %v157
    %v739 = vunpack.c.h.b16 %v157
    %v740 = vunpack.c.l.b16 %v158
    %v741 = vunpack.c.h.b16 %v158
    %v742 = vunpack.c.l.b16 %v159
    %v743 = vunpack.c.h.b16 %v159
    %v744 = vunpack.c.l.b16 %v160
    %v745 = vunpack.c.h.b16 %v160
    %v746 = vunpack.c.l.b16 %v161
    %v747 = vunpack.c.h.b16 %v161
    %v748 = vunpack.c.l.b16 %v162
    %v749 = vunpack.c.h.b16 %v162
    %v750 = vunpack.c.l.b16 %v163
    %v751 = vunpack.c.h.b16 %v163
    %v752 = vunpack.c.l.b16 %v164
    %v753 = vunpack.c.h.b16 %v164
    %v754 = vunpack.c.l.b16 %v165
    %v755 = vunpack.c.h.b16 %v165
    %v756 = vunpack.c.l.b16 %v166
    %v757 = vunpack.c.h.b16 %v166
    %v758 = vunpack.c.l.b16 %v167
    %v759 = vunpack.c.h.b16 %v167
    %v760 = vunpack.c.l.b16 %v168
    %v761 = vunpack.c.h.b16 %v168
    %v762 = vunpack.c.l.b16 %v169
    %v763 = vunpack.c.h.b16 %v169
    %v764 = vunpack.c.l.b16 %v170
    %v765 = vunpack.c.h.b16 %v170
    %v766 = vunpack.c.l.b16 %v171
    %v767 = vunpack.c.h.b16 %v171
    %v768 = vunpack.c.l.b16 %v172
    %v769 = vunpack.c.h.b16 %v172
    %v770 = vunpack.c.l.b16 %v173
    %v771 = vunpack.c.h.b16 %v173
    %v772 = vunpack.c.l.b16 %v174
    %v773 = vunpack.c.h.b16 %v174
    %v774 = vunpack.c.l.b16 %v175
    %v775 = vunpack.c.h.b16 %v175
    %v776 = vunpack.c.l.b16 %v176
    %v777 = vunpack.c.h.b16 %v176
    %v778 = vunpack.c.l.b16 %v177
    %v779 = vunpack.c.h.b16 %v177
    %v780 = vunpack.c.l.b16 %v178
    %v781 = vunpack.c.h.b16 %v178
    %v782 = vunpack.c.l.b16 %v179
    %v783 = vunpack.c.h.b16 %v179
    %v784 = vunpack.c.l.b16 %v180
    %v785 = vunpack.c.h.b16 %v180
    %v786 = vunpack.c.l.b16 %v181
    %v787 = vunpack.c.h.b16 %v181
    %v788 = vunpack.c.l.b16 %v182
    %v789 = vunpack.c.h.b16 %v182
    %v790 = vunpack.c.l.b16 %v183
    %v791 = vunpack.c.h.b16 %v183
    %v792 = vunpack.c.l.b16 %v184
    %v793 = vunpack.c.h.b16 %v184
    %v794 = vunpack.c.l.b16 %v185
    %v795 = vunpack.c.h.b16 %v185
    %v796 = vunpack.c.l.b16 %v186
    %v797 = vunpack.c.h.b16 %v186
    %v798 = vunpack.c.l.b16 %v187
    %v799 = vunpack.c.h.b16 %v187
    %v800 = vunpack.c.l.b16 %v188
    %v801 = vunpack.c.h.b16 %v188
    %v802 = vunpack.c.l.b16 %v189
    %v803 = vunpack.c.h.b16 %v189
    %v804 = vunpack.c.l.b16 %v190
    %v805 = vunpack.c.h.b16 %v190
    %v806 = vunpack.c.l.b16 %v191
    %v807 = vunpack.c.h.b16 %v191
    %v808 = vunpack.c.l.b16 %v192
    %v809 = vunpack.c.h.b16 %v192
    %v810 = vunpack.c.l.b16 %v193
    %v811 = vunpack.c.h.b16 %v193
    %v812 = vunpack.c.l.b16 %v194
    %v813 = vunpack.c.h.b16 %v194
    %v814 = vunpack.c.l.b16 %v195
    %v815 = vunpack.c.h.b16 %v195
    %v816 = vunpack.c.l.b16 %v196
    %v817 = vunpack.c.h.b16 %v196
    %v818 = vunpack.c.l.b16 %v197
    %v819 = vunpack.c.h.b16 %v197
    %v820 = vunpack.c.l.b16 %v198
    %v821 = vunpack.c.h.b16 %v198
    %v822 = vunpack.c.l.b16 %v199
    %v823 = vunpack.c.h.b16 %v199
    %v824 = vunpack.c.l.b16 %v200
    %v825 = vunpack.c.h.b16 %v200
    %v826 = vunpack.c.l.b16 %v201
    %v827 = vunpack.c.h.b16 %v201
    %v828 = vunpack.c.l.b16 %v202
    %v829 = vunpack.c.h.b16 %v202
    %v830 = vunpack.c.l.b16 %v203
    %v831 = vunpack.c.h.b16 %v203
    %v832 = vunpack.c.l.b16 %v204
    %v833 = vunpack.c.h.b16 %v204
    %v834 = vunpack.c.l.b16 %v205
    %v835 = vunpack.c.h.b16 %v205
    %v836 = vunpack.c.l.b16 %v206
    %v837 = vunpack.c.h.b16 %v206
    %v838 = vunpack.c.l.b16 %v207
    %v839 = vunpack.c.h.b16 %v207
    %v840 = vunpack.c.l.b16 %v208
    %v841 = vunpack.c.h.b16 %v208
    %v842 = vunpack.c.l.b16 %v209
    %v843 = vunpack.c.h.b16 %v209
    %v844 = vunpack.c.l.b16 %v210
    %v845 = vunpack.c.h.b16 %v210
    %v846 = vunpack.c.l.b16 %v211
    %v847 = vunpack.c.h.b16 %v211
    %v848 = vunpack.c.l.b16 %v212
    %v849 = vunpack.c.h.b16 %v212
    %v850 = vunpack.c.l.b16 %v213
    %v851 = vunpack.c.h.b16 %v213
    %v852 = vunpack.c.l.b16 %v214
    %v853 = vunpack.c.h.b16 %v214
    %v854 = vunpack.c.l.b16 %v215
    %v855 = vunpack.c.h.b16 %v215
    %v856 = vunpack.c.l.b16 %v216
    %v857 = vunpack.c.h.b16 %v216
    %v858 = vunpack.c.l.b16 %v217
    %v859 = vunpack.c.h.b16 %v217
    %v860 = vunpack.c.l.b16 %v218
    %v861 = vunpack.c.h.b16 %v218
    %v862 = vunpack.c.l.b16 %v219
    %v863 = vunpack.c.h.b16 %v219
    %v864 = vunpack.c.l.b16 %v220
    %v865 = vunpack.c.h.b16 %v220
    %v866 = vunpack.c.l.b16 %v221
    %v867 = vunpack.c.h.b16 %v221
    %v868 = vunpack.c.l.b16 %v222
    %v869 = vunpack.c.h.b16 %v222
    %v870 = vunpack.c.l.b16 %v223
    %v871 = vunpack.c.h.b16 %v223
    %v872 = vunpack.c.l.b16 %v224
    %v873 = vunpack.c.h.b16 %v224
    %v874 = vunpack.c.l.b16 %v225
    %v875 = vunpack.c.h.b16 %v225
    %v876 = vunpack.c.l.b16 %v226
    %v877 = vunpack.c.h.b16 %v226
    %v878 = vunpack.c.l.b16 %v227
    %v879 = vunpack.c.h.b16 %v227
    %v880 = vunpack.c.l.b16 %v228
    %v881 = vunpack.c.h.b16 %v228
    %v882 = vunpack.c.l.b16 %v229
    %v883 = vunpack.c.h.b16 %v229
    %v884 = vunpack.c.l.b16 %v230
    %v885 = vunpack.c.h.b16 %v230
    %v886 = vunpack.c.l.b16 %v231
    %v887 = vunpack.c.h.b16 %v231
    %v888 = vunpack.c.l.b16 %v232
    %v889 = vunpack.c.h.b16 %v232
    %v890 = vunpack.c.l.b16 %v233
    %v891 = vunpack.c.h.b16 %v233
    %v892 = vunpack.c.l.b16 %v234
    %v893 = vunpack.c.h.b16 %v234
    %v894 = vunpack.c.l.b16 %v235
    %v895 = vunpack.c.h.b16 %v235
    %v896 = vunpack.c.l.b16 %v236
    %v897 = vunpack.c.h.b16 %v236
    %v898 = vunpack.c.l.b16 %v237
    %v899 = vunpack.c.h.b16 %v237
    %v900 = vunpack.c.l.b16 %v238
    %v901 = vunpack.c.h.b16 %v238
    %v902 = vunpack.c.l.b16 %v239
    %v903 = vunpack.c.h.b16 %v239
    %v904 = vunpack.c.l.b16 %v240
    %v905 = vunpack.c.h.b16 %v240
    %v906 = vunpack.c.l.b16 %v241
    %v907 = vunpack.c.h.b16 %v241
    %v908 = vunpack.c.l.b16 %v242
    %v909 = vunpack.c.h.b16 %v242
    %v910 = vunpack.c.l.b16 %v243
    %v911 = vunpack.c.h.b16 %v243
    %v912 = vunpack.c.l.b16 %v244
    %v913 = vunpack.c.h.b16 %v244
    %v914 = vunpack.c.l.b16 %v245
    %v915 = vunpack.c.h.b16 %v245
    %v916 = vunpack.c.l.b16 %v246
    %v917 = vunpack.c.h.b16 %v246
    %v918 = vunpack.c.l.b16 %v247
    %v919 = vunpack.c.h.b16 %v247
    %v920 = vunpack.c.l.b16 %v248
    %v921 = vunpack.c.h.b16 %v248
    %v922 = vunpack.c.l.b16 %v249
    %v923 = vunpack.c.h.b16 %v249
    %v924 = vunpack.c.l.b16 %v250
    %v925 = vunpack.c.h.b16 %v250
    %v926 = vunpack.c.l.b16 %v251
    %v927 = vunpack.c.h.b16 %v251
    %v928 = vunpack.c.l.b16 %v252
    %v929 = vunpack.c.h.b16 %v252
    %v930 = vunpack.c.l.b16 %v253
    %v931 = vunpack.c.h.b16 %v253
    %v932 = vunpack.c.l.b16 %v254
    %v933 = vunpack.c.h.b16 %v254
    %v934 = vunpack.c.l.b16 %v255
    %v935 = vunpack.c.h.b16 %v255
    %v936 = vunpack.c.l.b16 %v256
    %v937 = vunpack.c.h.b16 %v256
    %v938 = vunpack.c.l.b16 %v257
    %v939 = vunpack.c.h.b16 %v257
    %v940 = vunpack.c.l.b16 %v258
    %v941 = vunpack.c.h.b16 %v258
    %v942 = vunpack.c.l.b16 %v259
    %v943 = vunpack.c.h.b16 %v259
    %v944 = vunpack.c.l.b16 %v260
    %v945 = vunpack.c.h.b16 %v260
    %v946 = vunpack.c.l.b16 %v261
    %v947 = vunpack.c.h.b16 %v261
    %v948 = vunpack.c.l.b16 %v262
    %v949 = vunpack.c.h.b16 %v262
    %v950 = vunpack.c.l.b16 %v263
    %v951 = vunpack.c.h.b16 %v263
    %v952 = vunpack.c.l.b16 %v264
    %v953 = vunpack.c.h.b16 %v264
    %v954 = vunpack.c.l.b16 %v265
    %v955 = vunpack.c.h.b16 %v265
    %v956 = vunpack.c.l.b16 %v266
    %v957 = vunpack.c.h.b16 %v266
    %v958 = vunpack.c.l.b16 %v267
    %v959 = vunpack.c.h.b16 %v267
    %v960 = vunpack.c.l.b16 %v268
    %v961 = vunpack.c.h.b16 %v268
    %v962 = vunpack.c.l.b16 %v269
    %v963 = vunpack.c.h.b16 %v269
    %v964 = vunpack.c.l.b16 %v270
    %v965 = vunpack.c.h.b16 %v270
    %v966 = vunpack.c.l.b16 %v271
    %v967 = vunpack.c.h.b16 %v271
    %v968 = vunpack.c.l.b16 %v272
    %v969 = vunpack.c.h.b16 %v272
    %v970 = vunpack.c.l.b16 %v273
    %v971 = vunpack.c.h.b16 %v273
    %v972 = vunpack.c.l.b16 %v274
    %v973 = vunpack.c.h.b16 %v274
    %v974 = vunpack.c.l.b16 %v275
    %v975 = vunpack.c.h.b16 %v275
    %v976 = vunpack.c.l.b16 %v276
    %v977 = vunpack.c.h.b16 %v276
    %v978 = vunpack.c.l.b16 %v277
    %v979 = vunpack.c.h.b16 %v277
    %v980 = vunpack.c.l.b16 %v278
    %v981 = vunpack.c.h.b16 %v278
    %v982 = vunpack.c.l.b16 %v279
    %v983 = vunpack.c.h.b16 %v279
    %v984 = vunpack.c.l.b16 %v280
    %v985 = vunpack.c.h.b16 %v280
    %v986 = vunpack.c.l.b16 %v281
    %v987 = vunpack.c.h.b16 %v281
    %v988 = vunpack.c.l.b16 %v282
    %v989 = vunpack.c.h.b16 %v282
    %v990 = vunpack.c.l.b16 %v283
    %v991 = vunpack.c.h.b16 %v283
    %v992 = vunpack.c.l.b16 %v284
    %v993 = vunpack.c.h.b16 %v284
    %v994 = vunpack.c.l.b16 %v285
    %v995 = vunpack.c.h.b16 %v285
    %v996 = vunpack.c.l.b16 %v286
    %v997 = vunpack.c.h.b16 %v286
    %v998 = vunpack.c.l.b16 %v287
    %v999 = vunpack.c.h.b16 %v287
    %v1000 = vunpack.c.l.b16 %v288
    %v1001 = vunpack.c.h.b16 %v288
    %v1002 = vunpack.c.l.b16 %v289
    %v1003 = vunpack.c.h.b16 %v289
    %v1004 = vunpack.c.l.b16 %v290
    %v1005 = vunpack.c.h.b16 %v290
    %v1006 = vunpack.c.l.b16 %v291
    %v1007 = vunpack.c.h.b16 %v291
    %v1008 = vunpack.c.l.b16 %v292
    %v1009 = vunpack.c.h.b16 %v292
    %v1010 = vunpack.c.l.b16 %v293
    %v1011 = vunpack.c.h.b16 %v293
    %v1012 = vunpack.c.l.b16 %v294
    %v1013 = vunpack.c.h.b16 %v294
    %v1014 = vunpack.c.l.b16 %v295
    %v1015 = vunpack.c.h.b16 %v295
    %v1016 = vunpack.c.l.b16 %v296
    %v1017 = vunpack.c.h.b16 %v296
    %v1018 = vunpack.c.l.b16 %v297
    %v1019 = vunpack.c.h.b16 %v297
    %v1020 = vunpack.c.l.b16 %v298
    %v1021 = vunpack.c.h.b16 %v298
    %v1022 = vunpack.c.l.b16 %v299
    %v1023 = vunpack.c.h.b16 %v299
    %v1024 = vunpack.c.l.b16 %v300
    %v1025 = vunpack.c.h.b16 %v300
    %v1026 = vunpack.c.l.b16 %v301
    %v1027 = vunpack.c.h.b16 %v301
    %v1028 = vunpack.c.l.b16 %v302
    %v1029 = vunpack.c.h.b16 %v302
    %v1030 = vunpack.c.l.b16 %v303
    %v1031 = vunpack.c.h.b16 %v303
    %v1032 = vunpack.c.l.b16 %v304
    %v1033 = vunpack.c.h.b16 %v304
    %v1034 = vunpack.c.l.b16 %v305
    %v1035 = vunpack.c.h.b16 %v305
    %v1036 = vpack.c.b16 %v592, %v588
    %v1037 = vpack.c.b16 %v593, %v589
    %v1038 = vpack.c.b16 %v594, %v590
    %v1039 = vpack.c.b16 %v595, %v591
    %v1040 = vpack.c.b16 %v600, %v596
    %v1041 = vpack.c.b16 %v601, %v597
    %v1042 = vpack.c.b16 %v602, %v598
    %v1043 = vpack.c.b16 %v603, %v599
    %v1044 = vpack.c.b16 %v608, %v604
    %v1045 = vpack.c.b16 %v609, %v605
    %v1046 = vpack.c.b16 %v610, %v606
    %v1047 = vpack.c.b16 %v611, %v607
    %v1048 = vpack.c.b16 %v616, %v612
    %v1049 = vpack.c.b16 %v617, %v613
    %v1050 = vpack.c.b16 %v618, %v614
    %v1051 = vpack.c.b16 %v619, %v615
    %v1052 = vpack.c.b16 %v624, %v620
    %v1053 = vpack.c.b16 %v625, %v621
    %v1054 = vpack.c.b16 %v626, %v622
    %v1055 = vpack.c.b16 %v627, %v623
    %v1056 = vpack.c.b16 %v632, %v628
    %v1057 = vpack.c.b16 %v633, %v629
    %v1058 = vpack.c.b16 %v634, %v630
    %v1059 = vpack.c.b16 %v635, %v631
    %v1060 = vpack.c.b16 %v640, %v636
    %v1061 = vpack.c.b16 %v641, %v637
    %v1062 = vpack.c.b16 %v642, %v638
    %v1063 = vpack.c.b16 %v643, %v639
    %v1064 = vpack.c.b16 %v648, %v644
    %v1065 = vpack.c.b16 %v649, %v645
    %v1066 = vpack.c.b16 %v650, %v646
    %v1067 = vpack.c.b16 %v651, %v647
    %v1068 = vpack.c.b16 %v656, %v652
    %v1069 = vpack.c.b16 %v657, %v653
    %v1070 = vpack.c.b16 %v658, %v654
    %v1071 = vpack.c.b16 %v659, %v655
    %v1072 = vpack.c.b16 %v664, %v660
    %v1073 = vpack.c.b16 %v665, %v661
    %v1074 = vpack.c.b16 %v666, %v662
    %v1075 = vpack.c.b16 %v667, %v663
    %v1076 = vpack.c.b16 %v672, %v668
    %v1077 = vpack.c.b16 %v673, %v669
    %v1078 = vpack.c.b16 %v674, %v670
    %v1079 = vpack.c.b16 %v675, %v671
    %v1080 = vpack.c.b16 %v680, %v676
    %v1081 = vpack.c.b16 %v681, %v677
    %v1082 = vpack.c.b16 %v682, %v678
    %v1083 = vpack.c.b16 %v683, %v679
    %v1084 = vpack.c.b16 %v688, %v684
    %v1085 = vpack.c.b16 %v689, %v685
    %v1086 = vpack.c.b16 %v690, %v686
    %v1087 = vpack.c.b16 %v691, %v687
    %v1088 = vpack.c.b16 %v696, %v692
    %v1089 = vpack.c.b16 %v697, %v693
    %v1090 = vpack.c.b16 %v698, %v694
    %v1091 = vpack.c.b16 %v699, %v695
    %v1092 = vpack.c.b16 %v704, %v700
    %v1093 = vpack.c.b16 %v705, %v701
    %v1094 = vpack.c.b16 %v706, %v702
    %v1095 = vpack.c.b16 %v707, %v703
    %v1096 = vpack.c.b16 %v712, %v708
    %v1097 = vpack.c.b16 %v713, %v709
    %v1098 = vpack.c.b16 %v714, %v710
    %v1099 = vpack.c.b16 %v715, %v711
    %v1100 = vpack.c.b16 %v720, %v716
    %v1101 = vpack.c.b16 %v721, %v717
    %v1102 = vpack.c.b16 %v722, %v718
    %v1103 = vpack.c.b16 %v723, %v719
    %v1104 = vpack.c.b16 %v728, %v724
    %v1105 = vpack.c.b16 %v729, %v725
    %v1106 = vpack.c.b16 %v730, %v726
    %v1107 = vpack.c.b16 %v731, %v727
    %v1108 = vpack.c.b16 %v736, %v732
    %v1109 = vpack.c.b16 %v737, %v733
    %v1110 = vpack.c.b16 %v738, %v734
    %v1111 = vpack.c.b16 %v739, %v735
    %v1112 = vpack.c.b16 %v744, %v740
    %v1113 = vpack.c.b16 %v745, %v741
    %v1114 = vpack.c.b16 %v746, %v742
    %v1115 = vpack.c.b16 %v747, %v743
    %v1116 = vpack.c.b16 %v752, %v748
    %v1117 = vpack.c.b16 %v753, %v749
    %v1118 = vpack.c.b16 %v754, %v750
    %v1119 = vpack.c.b16 %v755, %v751
    %v1120 = vpack.c.b16 %v760, %v756
    %v1121 = vpack.c.b16 %v761, %v757
    %v1122 = vpack.c.b16 %v762, %v758
    %v1123 = vpack.c.b16 %v763, %v759
    %v1124 = vpack.c.b16 %v768, %v764
    %v1125 = vpack.c.b16 %v769, %v765
    %v1126 = vpack.c.b16 %v770, %v766
    %v1127 = vpack.c.b16 %v771, %v767
    %v1128 = vpack.c.b16 %v776, %v772
    %v1129 = vpack.c.b16 %v777, %v773
    %v1130 = vpack.c.b16 %v778, %v774
    %v1131 = vpack.c.b16 %v779, %v775
    %v1132 = vpack.c.b16 %v784, %v780
    %v1133 = vpack.c.b16 %v785, %v781
    %v1134 = vpack.c.b16 %v786, %v782
    %v1135 = vpack.c.b16 %v787, %v783
    %v1136 = vpack.c.b16 %v792, %v788
    %v1137 = vpack.c.b16 %v793, %v789
    %v1138 = vpack.c.b16 %v794, %v790
    %v1139 = vpack.c.b16 %v795, %v791
    %v1140 = vpack.c.b16 %v800, %v796
    %v1141 = vpack.c.b16 %v801, %v797
    %v1142 = vpack.c.b16 %v802, %v798
    %v1143 = vpack.c.b16 %v803, %v799
    %v1144 = vpack.c.b16 %v808, %v804
    %v1145 = vpack.c.b16 %v809, %v805
    %v1146 = vpack.c.b16 %v810, %v806
    %v1147 = vpack.c.b16 %v811, %v807
    %v1148 = vpack.c.b16 %v816, %v812
    %v1149 = vpack.c.b16 %v817, %v813
    %v1150 = vpack.c.b16 %v818, %v814
    %v1151 = vpack.c.b16 %v819, %v815
    %v1152 = vpack.c.b16 %v824, %v820
    %v1153 = vpack.c.b16 %v825, %v821
    %v1154 = vpack.c.b16 %v826, %v822
    %v1155 = vpack.c.b16 %v827, %v823
    %v1156 = vpack.c.b16 %v832, %v828
    %v1157 = vpack.c.b16 %v833, %v829
    %v1158 = vpack.c.b16 %v834, %v830
    %v1159 = vpack.c.b16 %v835, %v831
    %v1160 = vpack.c.b16 %v840, %v836
    %v1161 = vpack.c.b16 %v841, %v837
    %v1162 = vpack.c.b16 %v842, %v838
    %v1163 = vpack.c.b16 %v843, %v839
    %v1164 = vpack.c.b16 %v848, %v844
    %v1165 = vpack.c.b16 %v849, %v845
    %v1166 = vpack.c.b16 %v850, %v846
    %v1167 = vpack.c.b16 %v851, %v847
    %v1168 = vpack.c.b16 %v856, %v852
    %v1169 = vpack.c.b16 %v857, %v853
    %v1170 = vpack.c.b16 %v858, %v854
    %v1171 = vpack.c.b16 %v859, %v855
    %v1172 = vpack.c.b16 %v864, %v860
    %v1173 = vpack.c.b16 %v865, %v861
    %v1174 = vpack.c.b16 %v866, %v862
    %v1175 = vpack.c.b16 %v867, %v863
    %v1176 = vpack.c.b16 %v872, %v868
    %v1177 = vpack.c.b16 %v873, %v869
    %v1178 = vpack.c.b16 %v874, %v870
    %v1179 = vpack.c.b16 %v875, %v871
    %v1180 = vpack.c.b16 %v880, %v876
    %v1181 = vpack.c.b16 %v881, %v877
    %v1182 = vpack.c.b16 %v882, %v878
    %v1183 = vpack.c.b16 %v883, %v879
    %v1184 = vpack.c.b16 %v888, %v884
    %v1185 = vpack.c.b16 %v889, %v885
    %v1186 = vpack.c.b16 %v890, %v886
    %v1187 = vpack.c.b16 %v891, %v887
    %v1188 = vpack.c.b16 %v896, %v892
    %v1189 = vpack.c.b16 %v897, %v893
    %v1190 = vpack.c.b16 %v898, %v894
    %v1191 = vpack.c.b16 %v899, %v895
    %v1192 = vpack.c.b16 %v904, %v900
    %v1193 = vpack.c.b16 %v905, %v901
    %v1194 = vpack.c.b16 %v906, %v902
    %v1195 = vpack.c.b16 %v907, %v903
    %v1196 = vpack.c.b16 %v912, %v908
    %v1197 = vpack.c.b16 %v913, %v909
    %v1198 = vpack.c.b16 %v914, %v910
    %v1199 = vpack.c.b16 %v915, %v911
    %v1200 = vpack.c.b16 %v920, %v916
    %v1201 = vpack.c.b16 %v921, %v917
    %v1202 = vpack.c.b16 %v922, %v918
    %v1203 = vpack.c.b16 %v923, %v919
    %v1204 = vpack.c.b16 %v928, %v924
    %v1205 = vpack.c.b16 %v929, %v925
    %v1206 = vpack.c.b16 %v930, %v926
    %v1207 = vpack.c.b16 %v931, %v927
    %v1208 = vpack.c.b16 %v936, %v932
    %v1209 = vpack.c.b16 %v937, %v933
    %v1210 = vpack.c.b16 %v938, %v934
    %v1211 = vpack.c.b16 %v939, %v935
    %v1212 = vpack.c.b16 %v944, %v940
    %v1213 = vpack.c.b16 %v945, %v941
    %v1214 = vpack.c.b16 %v946, %v942
    %v1215 = vpack.c.b16 %v947, %v943
    %v1216 = vpack.c.b16 %v952, %v948
    %v1217 = vpack.c.b16 %v953, %v949
    %v1218 = vpack.c.b16 %v954, %v950
    %v1219 = vpack.c.b16 %v955, %v951
    %v1220 = vpack.c.b16 %v960, %v956
    %v1221 = vpack.c.b16 %v961, %v957
    %v1222 = vpack.c.b16 %v962, %v958
    %v1223 = vpack.c.b16 %v963, %v959
    %v1224 = vpack.c.b16 %v968, %v964
    %v1225 = vpack.c.b16 %v969, %v965
    %v1226 = vpack.c.b16 %v970, %v966
    %v1227 = vpack.c.b16 %v971, %v967
    %v1228 = vpack.c.b16 %v976, %v972
    %v1229 = vpack.c.b16 %v977, %v973
    %v1230 = vpack.c.b16 %v978, %v974
    %v1231 = vpack.c.b16 %v979, %v975
    %v1232 = vpack.c.b16 %v984, %v980
    %v1233 = vpack.c.b16 %v985, %v981
    %v1234 = vpack.c.b16 %v986, %v982
    %v1235 = vpack.c.b16 %v987, %v983
    %v1236 = vpack.c.b16 %v992, %v988
    %v1237 = vpack.c.b16 %v993, %v989
    %v1238 = vpack.c.b16 %v994, %v990
    %v1239 = vpack.c.b16 %v995, %v991
    %v1240 = vpack.c.b16 %v1000, %v996
    %v1241 = vpack.c.b16 %v1001, %v997
    %v1242 = vpack.c.b16 %v1002, %v998
    %v1243 = vpack.c.b16 %v1003, %v999
    %v1244 = vpack.c.b16 %v1008, %v1004
    %v1245 = vpack.c.b16 %v1009, %v1005
    %v1246 = vpack.c.b16 %v1010, %v1006
    %v1247 = vpack.c.b16 %v1011, %v1007
    %v1248 = vpack.c.b16 %v1016, %v1012
    %v1249 = vpack.c.b16 %v1017, %v1013
    %v1250 = vpack.c.b16 %v1018, %v1014
    %v1251 = vpack.c.b16 %v1019, %v1015
    %v1252 = vpack.c.b16 %v1024, %v1020
    %v1253 = vpack.c.b16 %v1025, %v1021
    %v1254 = vpack.c.b16 %v1026, %v1022
    %v1255 = vpack.c.b16 %v1027, %v1023
    %v1256 = vpack.c.b16 %v1032, %v1028
    %v1257 = vpack.c.b16 %v1033, %v1029
    %v1258 = vpack.c.b16 %v1034, %v1030
    %v1259 = vpack.c.b16 %v1035, %v1031
    %1484 = vmatprep.subr.bf16.mxu0 %v1065
    %1485 = vmatpush1.bf16.msra.mxu0 %v1064
    %1486 = vmatprep.subr.bf16.mxu0 %v1061
    %1487 = vmatpush1.bf16.msra.mxu0 %v1060
    %1488 = vmatprep.subr.bf16.mxu0 %v1057
    %1489 = vmatpush1.bf16.msra.mxu0 %v1056
    %1490 = vmatprep.subr.bf16.mxu0 %v1053
    %1491 = vmatpush1.bf16.msra.mxu0 %v1052
    %1492 = vmatprep.subr.bf16.mxu0 %v1049
    %1493 = vmatpush1.bf16.msra.mxu0 %v1048
    %1494 = vmatprep.subr.bf16.mxu0 %v1045
    %1495 = vmatpush1.bf16.msra.mxu0 %v1044
    %1496 = vmatprep.subr.bf16.mxu0 %v1041
    %1497 = vmatpush1.bf16.msra.mxu0 %v1040
    %1498 = vmatprep.subr.bf16.mxu0 %v1037
    %1499 = vmatpush1.bf16.msra.mxu0 %v1036
    %1500 = vmatprep.subr.bf16.mxu0 %v1097
    %1501 = vmatpush2.bf16.msra.mxu0 %v1096
    %1502 = vmatprep.subr.bf16.mxu0 %v1093
    %1503 = vmatpush2.bf16.msra.mxu0 %v1092
    %1504 = vmatprep.subr.bf16.mxu0 %v1089
    %1505 = vmatpush2.bf16.msra.mxu0 %v1088
    %1506 = vmatprep.subr.bf16.mxu0 %v1085
    %1507 = vmatpush2.bf16.msra.mxu0 %v1084
    %1508 = vmatprep.subr.bf16.mxu0 %v1081
    %1509 = vmatpush2.bf16.msra.mxu0 %v1080
    %1510 = vmatprep.subr.bf16.mxu0 %v1077
    %1511 = vmatpush2.bf16.msra.mxu0 %v1076
    %1512 = vmatprep.subr.bf16.mxu0 %v1073
    %1513 = vmatpush2.bf16.msra.mxu0 %v1072
    %1514 = vmatprep.subr.bf16.mxu0 %v1069
    %1515 = vmatpush2.bf16.msra.mxu0 %v1068
    %1516 = vmatprep.mubr.bf16.mxu0 %v351
    %1517 = vmatmul.mubr.bf16.gmra.mxu0 %v350
    %v1518 = vpop.f32.mrf.mxu0
    %v1519 = vadd.f32 %v311, %v1518
    %v1520 = vpop.f32.mrf.mxu0
    %v1521 = vadd.f32 %v315, %v1520
    %v1522 = vpop.f32.mrf.mxu0
    %v1523 = vadd.f32 %v311, %v1522
    %v1524 = vpop.f32.mrf.mxu0
    %v1525 = vadd.f32 %v315, %v1524
    %1526 = vdwg.mxu0
    %1527 = vmatprep.subr.bf16.mxu0 %v1129
    %1528 = vmatpush1.bf16.msra.mxu0 %v1128
    %1529 = vmatprep.subr.bf16.mxu0 %v1125
    %1530 = vmatpush1.bf16.msra.mxu0 %v1124
    %1531 = vmatprep.subr.bf16.mxu0 %v1121
    %1532 = vmatpush1.bf16.msra.mxu0 %v1120
    %1533 = vmatprep.subr.bf16.mxu0 %v1117
    %1534 = vmatpush1.bf16.msra.mxu0 %v1116
    %1535 = vmatprep.subr.bf16.mxu0 %v1113
    %1536 = vmatpush1.bf16.msra.mxu0 %v1112
    %1537 = vmatprep.subr.bf16.mxu0 %v1109
    %1538 = vmatpush1.bf16.msra.mxu0 %v1108
    %1539 = vmatprep.subr.bf16.mxu0 %v1105
    %1540 = vmatpush1.bf16.msra.mxu0 %v1104
    %1541 = vmatprep.subr.bf16.mxu0 %v1101
    %1542 = vmatpush1.bf16.msra.mxu0 %v1100
    %1543 = vmatprep.subr.bf16.mxu0 %v1161
    %1544 = vmatpush2.bf16.msra.mxu0 %v1160
    %1545 = vmatprep.subr.bf16.mxu0 %v1157
    %1546 = vmatpush2.bf16.msra.mxu0 %v1156
    %1547 = vmatprep.subr.bf16.mxu0 %v1153
    %1548 = vmatpush2.bf16.msra.mxu0 %v1152
    %1549 = vmatprep.subr.bf16.mxu0 %v1149
    %1550 = vmatpush2.bf16.msra.mxu0 %v1148
    %1551 = vmatprep.subr.bf16.mxu0 %v1145
    %1552 = vmatpush2.bf16.msra.mxu0 %v1144
    %1553 = vmatprep.subr.bf16.mxu0 %v1141
    %1554 = vmatpush2.bf16.msra.mxu0 %v1140
    %1555 = vmatprep.subr.bf16.mxu0 %v1137
    %1556 = vmatpush2.bf16.msra.mxu0 %v1136
    %1557 = vmatprep.subr.bf16.mxu0 %v1133
    %1558 = vmatpush2.bf16.msra.mxu0 %v1132
    %1559 = vmatprep.mubr.bf16.mxu0 %v353
    %1560 = vmatmul.mubr.bf16.gmra.mxu0 %v352
    %v1561 = vpop.f32.mrf.mxu0
    %v1562 = vadd.f32 %v1519, %v1561
    %v1563 = vpop.f32.mrf.mxu0
    %v1564 = vadd.f32 %v1521, %v1563
    %v1565 = vpop.f32.mrf.mxu0
    %v1566 = vadd.f32 %v1523, %v1565
    %v1567 = vpop.f32.mrf.mxu0
    %v1568 = vadd.f32 %v1525, %v1567
    %1569 = vdwg.mxu0
    %1570 = vmatprep.subr.bf16.mxu0 %v1193
    %1571 = vmatpush1.bf16.msra.mxu0 %v1192
    %1572 = vmatprep.subr.bf16.mxu0 %v1189
    %1573 = vmatpush1.bf16.msra.mxu0 %v1188
    %1574 = vmatprep.subr.bf16.mxu0 %v1185
    %1575 = vmatpush1.bf16.msra.mxu0 %v1184
    %1576 = vmatprep.subr.bf16.mxu0 %v1181
    %1577 = vmatpush1.bf16.msra.mxu0 %v1180
    %1578 = vmatprep.subr.bf16.mxu0 %v1177
    %1579 = vmatpush1.bf16.msra.mxu0 %v1176
    %1580 = vmatprep.subr.bf16.mxu0 %v1173
    %1581 = vmatpush1.bf16.msra.mxu0 %v1172
    %1582 = vmatprep.subr.bf16.mxu0 %v1169
    %1583 = vmatpush1.bf16.msra.mxu0 %v1168
    %1584 = vmatprep.subr.bf16.mxu0 %v1165
    %1585 = vmatpush1.bf16.msra.mxu0 %v1164
    %1586 = vmatprep.subr.bf16.mxu0 %v1225
    %1587 = vmatpush2.bf16.msra.mxu0 %v1224
    %1588 = vmatprep.subr.bf16.mxu0 %v1221
    %1589 = vmatpush2.bf16.msra.mxu0 %v1220
    %1590 = vmatprep.subr.bf16.mxu0 %v1217
    %1591 = vmatpush2.bf16.msra.mxu0 %v1216
    %1592 = vmatprep.subr.bf16.mxu0 %v1213
    %1593 = vmatpush2.bf16.msra.mxu0 %v1212
    %1594 = vmatprep.subr.bf16.mxu0 %v1209
    %1595 = vmatpush2.bf16.msra.mxu0 %v1208
    %1596 = vmatprep.subr.bf16.mxu0 %v1205
    %1597 = vmatpush2.bf16.msra.mxu0 %v1204
    %1598 = vmatprep.subr.bf16.mxu0 %v1201
    %1599 = vmatpush2.bf16.msra.mxu0 %v1200
    %1600 = vmatprep.subr.bf16.mxu0 %v1197
    %1601 = vmatpush2.bf16.msra.mxu0 %v1196
    %1602 = vmatprep.mubr.bf16.mxu0 %v355
    %1603 = vmatmul.mubr.bf16.gmra.mxu0 %v354
    %v1604 = vpop.f32.mrf.mxu0
    %v1605 = vadd.f32 %v1562, %v1604
    %v1606 = vpop.f32.mrf.mxu0
    %v1607 = vadd.f32 %v1564, %v1606
    %v1608 = vpop.f32.mrf.mxu0
    %v1609 = vadd.f32 %v1566, %v1608
    %v1610 = vpop.f32.mrf.mxu0
    %v1611 = vadd.f32 %v1568, %v1610
    %1612 = vdwg.mxu0
    %1613 = vmatprep.subr.bf16.mxu0 %v1257
    %1614 = vmatpush1.bf16.msra.mxu0 %v1256
    %1615 = vmatprep.subr.bf16.mxu0 %v1253
    %1616 = vmatpush1.bf16.msra.mxu0 %v1252
    %1617 = vmatprep.subr.bf16.mxu0 %v1249
    %1618 = vmatpush1.bf16.msra.mxu0 %v1248
    %1619 = vmatprep.subr.bf16.mxu0 %v1245
    %1620 = vmatpush1.bf16.msra.mxu0 %v1244
    %1621 = vmatprep.subr.bf16.mxu0 %v1241
    %1622 = vmatpush1.bf16.msra.mxu0 %v1240
    %1623 = vmatprep.subr.bf16.mxu0 %v1237
    %1624 = vmatpush1.bf16.msra.mxu0 %v1236
    %1625 = vmatprep.subr.bf16.mxu0 %v1233
    %1626 = vmatpush1.bf16.msra.mxu0 %v1232
    %1627 = vmatprep.subr.bf16.mxu0 %v1229
    %1628 = vmatpush1.bf16.msra.mxu0 %v1228
    %1629 = vmatprep.subr.bf16.mxu0 0
    %1630 = vmatpush2.bf16.msra.mxu0 0
    %1631 = vmatprep.subr.bf16.mxu0 0
    %1632 = vmatpush2.bf16.msra.mxu0 0
    %1633 = vmatprep.subr.bf16.mxu0 0
    %1634 = vmatpush2.bf16.msra.mxu0 0
    %1635 = vmatprep.subr.bf16.mxu0 0
    %1636 = vmatpush2.bf16.msra.mxu0 0
    %1637 = vmatprep.subr.bf16.mxu0 0
    %1638 = vmatpush2.bf16.msra.mxu0 0
    %1639 = vmatprep.subr.bf16.mxu0 0
    %1640 = vmatpush2.bf16.msra.mxu0 0
    %1641 = vmatprep.subr.bf16.mxu0 0
    %1642 = vmatpush2.bf16.msra.mxu0 0
    %1643 = vmatprep.subr.bf16.mxu0 0
    %1644 = vmatpush2.bf16.msra.mxu0 0
    %1645 = vmatprep.mubr.bf16.mxu0 0
    %1646 = vmatmul.mubr.bf16.gmra.mxu0 %v356
    %v1647 = vpop.f32.mrf.mxu0
    %v1648 = vadd.f32 %v1605, %v1647
    %v1649 = vpop.f32.mrf.mxu0
    %v1650 = vadd.f32 %v1607, %v1649
    %v1651 = vpop.f32.mrf.mxu0
    %v1652 = vadd.f32 %v1609, %v1651
    %v1653 = vpop.f32.mrf.mxu0
    %v1654 = vadd.f32 %v1611, %v1653
    %1655 = vdwg.mxu0
    %1656 = vmatprep.subr.bf16.mxu0 %v1067
    %1657 = vmatpush1.bf16.msra.mxu0 %v1066
    %1658 = vmatprep.subr.bf16.mxu0 %v1063
    %1659 = vmatpush1.bf16.msra.mxu0 %v1062
    %1660 = vmatprep.subr.bf16.mxu0 %v1059
    %1661 = vmatpush1.bf16.msra.mxu0 %v1058
    %1662 = vmatprep.subr.bf16.mxu0 %v1055
    %1663 = vmatpush1.bf16.msra.mxu0 %v1054
    %1664 = vmatprep.subr.bf16.mxu0 %v1051
    %1665 = vmatpush1.bf16.msra.mxu0 %v1050
    %1666 = vmatprep.subr.bf16.mxu0 %v1047
    %1667 = vmatpush1.bf16.msra.mxu0 %v1046
    %1668 = vmatprep.subr.bf16.mxu0 %v1043
    %1669 = vmatpush1.bf16.msra.mxu0 %v1042
    %1670 = vmatprep.subr.bf16.mxu0 %v1039
    %1671 = vmatpush1.bf16.msra.mxu0 %v1038
    %1672 = vmatprep.subr.bf16.mxu0 %v1099
    %1673 = vmatpush2.bf16.msra.mxu0 %v1098
    %1674 = vmatprep.subr.bf16.mxu0 %v1095
    %1675 = vmatpush2.bf16.msra.mxu0 %v1094
    %1676 = vmatprep.subr.bf16.mxu0 %v1091
    %1677 = vmatpush2.bf16.msra.mxu0 %v1090
    %1678 = vmatprep.subr.bf16.mxu0 %v1087
    %1679 = vmatpush2.bf16.msra.mxu0 %v1086
    %1680 = vmatprep.subr.bf16.mxu0 %v1083
    %1681 = vmatpush2.bf16.msra.mxu0 %v1082
    %1682 = vmatprep.subr.bf16.mxu0 %v1079
    %1683 = vmatpush2.bf16.msra.mxu0 %v1078
    %1684 = vmatprep.subr.bf16.mxu0 %v1075
    %1685 = vmatpush2.bf16.msra.mxu0 %v1074
    %1686 = vmatprep.subr.bf16.mxu0 %v1071
    %1687 = vmatpush2.bf16.msra.mxu0 %v1070
    %1688 = vmatprep.mubr.bf16.mxu0 %v351
    %1689 = vmatmul.mubr.bf16.gmra.mxu0 %v350
    %v1690 = vpop.f32.mrf.mxu0
    %v1691 = vadd.f32 %v319, %v1690
    %v1692 = vpop.f32.mrf.mxu0
    %v1693 = vadd.f32 %v323, %v1692
    %v1694 = vpop.f32.mrf.mxu0
    %v1695 = vadd.f32 %v319, %v1694
    %v1696 = vpop.f32.mrf.mxu0
    %v1697 = vadd.f32 %v323, %v1696
    %1698 = vdwg.mxu0
    %1699 = vmatprep.subr.bf16.mxu0 %v1131
    %1700 = vmatpush1.bf16.msra.mxu0 %v1130
    %1701 = vmatprep.subr.bf16.mxu0 %v1127
    %1702 = vmatpush1.bf16.msra.mxu0 %v1126
    %1703 = vmatprep.subr.bf16.mxu0 %v1123
    %1704 = vmatpush1.bf16.msra.mxu0 %v1122
    %1705 = vmatprep.subr.bf16.mxu0 %v1119
    %1706 = vmatpush1.bf16.msra.mxu0 %v1118
    %1707 = vmatprep.subr.bf16.mxu0 %v1115
    %1708 = vmatpush1.bf16.msra.mxu0 %v1114
    %1709 = vmatprep.subr.bf16.mxu0 %v1111
    %1710 = vmatpush1.bf16.msra.mxu0 %v1110
    %1711 = vmatprep.subr.bf16.mxu0 %v1107
    %1712 = vmatpush1.bf16.msra.mxu0 %v1106
    %1713 = vmatprep.subr.bf16.mxu0 %v1103
    %1714 = vmatpush1.bf16.msra.mxu0 %v1102
    %1715 = vmatprep.subr.bf16.mxu0 %v1163
    %1716 = vmatpush2.bf16.msra.mxu0 %v1162
    %1717 = vmatprep.subr.bf16.mxu0 %v1159
    %1718 = vmatpush2.bf16.msra.mxu0 %v1158
    %1719 = vmatprep.subr.bf16.mxu0 %v1155
    %1720 = vmatpush2.bf16.msra.mxu0 %v1154
    %1721 = vmatprep.subr.bf16.mxu0 %v1151
    %1722 = vmatpush2.bf16.msra.mxu0 %v1150
    %1723 = vmatprep.subr.bf16.mxu0 %v1147
    %1724 = vmatpush2.bf16.msra.mxu0 %v1146
    %1725 = vmatprep.subr.bf16.mxu0 %v1143
    %1726 = vmatpush2.bf16.msra.mxu0 %v1142
    %1727 = vmatprep.subr.bf16.mxu0 %v1139
    %1728 = vmatpush2.bf16.msra.mxu0 %v1138
    %1729 = vmatprep.subr.bf16.mxu0 %v1135
    %1730 = vmatpush2.bf16.msra.mxu0 %v1134
    %1731 = vmatprep.mubr.bf16.mxu0 %v353
    %1732 = vmatmul.mubr.bf16.gmra.mxu0 %v352
    %v1733 = vpop.f32.mrf.mxu0
    %v1734 = vadd.f32 %v1691, %v1733
    %v1735 = vpop.f32.mrf.mxu0
    %v1736 = vadd.f32 %v1693, %v1735
    %v1737 = vpop.f32.mrf.mxu0
    %v1738 = vadd.f32 %v1695, %v1737
    %v1739 = vpop.f32.mrf.mxu0
    %v1740 = vadd.f32 %v1697, %v1739
    %1741 = vdwg.mxu0
    %1742 = vmatprep.subr.bf16.mxu0 %v1195
    %1743 = vmatpush1.bf16.msra.mxu0 %v1194
    %1744 = vmatprep.subr.bf16.mxu0 %v1191
    %1745 = vmatpush1.bf16.msra.mxu0 %v1190
    %1746 = vmatprep.subr.bf16.mxu0 %v1187
    %1747 = vmatpush1.bf16.msra.mxu0 %v1186
    %1748 = vmatprep.subr.bf16.mxu0 %v1183
    %1749 = vmatpush1.bf16.msra.mxu0 %v1182
    %1750 = vmatprep.subr.bf16.mxu0 %v1179
    %1751 = vmatpush1.bf16.msra.mxu0 %v1178
    %1752 = vmatprep.subr.bf16.mxu0 %v1175
    %1753 = vmatpush1.bf16.msra.mxu0 %v1174
    %1754 = vmatprep.subr.bf16.mxu0 %v1171
    %1755 = vmatpush1.bf16.msra.mxu0 %v1170
    %1756 = vmatprep.subr.bf16.mxu0 %v1167
    %1757 = vmatpush1.bf16.msra.mxu0 %v1166
    %1758 = vmatprep.subr.bf16.mxu0 %v1227
    %1759 = vmatpush2.bf16.msra.mxu0 %v1226
    %1760 = vmatprep.subr.bf16.mxu0 %v1223
    %1761 = vmatpush2.bf16.msra.mxu0 %v1222
    %1762 = vmatprep.subr.bf16.mxu0 %v1219
    %1763 = vmatpush2.bf16.msra.mxu0 %v1218
    %1764 = vmatprep.subr.bf16.mxu0 %v1215
    %1765 = vmatpush2.bf16.msra.mxu0 %v1214
    %1766 = vmatprep.subr.bf16.mxu0 %v1211
    %1767 = vmatpush2.bf16.msra.mxu0 %v1210
    %1768 = vmatprep.subr.bf16.mxu0 %v1207
    %1769 = vmatpush2.bf16.msra.mxu0 %v1206
    %1770 = vmatprep.subr.bf16.mxu0 %v1203
    %1771 = vmatpush2.bf16.msra.mxu0 %v1202
    %1772 = vmatprep.subr.bf16.mxu0 %v1199
    %1773 = vmatpush2.bf16.msra.mxu0 %v1198
    %1774 = vmatprep.mubr.bf16.mxu0 %v355
    %1775 = vmatmul.mubr.bf16.gmra.mxu0 %v354
    %v1776 = vpop.f32.mrf.mxu0
    %v1777 = vadd.f32 %v1734, %v1776
    %v1778 = vpop.f32.mrf.mxu0
    %v1779 = vadd.f32 %v1736, %v1778
    %v1780 = vpop.f32.mrf.mxu0
    %v1781 = vadd.f32 %v1738, %v1780
    %v1782 = vpop.f32.mrf.mxu0
    %v1783 = vadd.f32 %v1740, %v1782
    %1784 = vdwg.mxu0
    %1785 = vmatprep.subr.bf16.mxu0 %v1259
    %1786 = vmatpush1.bf16.msra.mxu0 %v1258
    %1787 = vmatprep.subr.bf16.mxu0 %v1255
    %1788 = vmatpush1.bf16.msra.mxu0 %v1254
    %1789 = vmatprep.subr.bf16.mxu0 %v1251
    %1790 = vmatpush1.bf16.msra.mxu0 %v1250
    %1791 = vmatprep.subr.bf16.mxu0 %v1247
    %1792 = vmatpush1.bf16.msra.mxu0 %v1246
    %1793 = vmatprep.subr.bf16.mxu0 %v1243
    %1794 = vmatpush1.bf16.msra.mxu0 %v1242
    %1795 = vmatprep.subr.bf16.mxu0 %v1239
    %1796 = vmatpush1.bf16.msra.mxu0 %v1238
    %1797 = vmatprep.subr.bf16.mxu0 %v1235
    %1798 = vmatpush1.bf16.msra.mxu0 %v1234
    %1799 = vmatprep.subr.bf16.mxu0 %v1231
    %1800 = vmatpush1.bf16.msra.mxu0 %v1230
    %1801 = vmatprep.subr.bf16.mxu0 0
    %1802 = vmatpush2.bf16.msra.mxu0 0
    %1803 = vmatprep.subr.bf16.mxu0 0
    %1804 = vmatpush2.bf16.msra.mxu0 0
    %1805 = vmatprep.subr.bf16.mxu0 0
    %1806 = vmatpush2.bf16.msra.mxu0 0
    %1807 = vmatprep.subr.bf16.mxu0 0
    %1808 = vmatpush2.bf16.msra.mxu0 0
    %1809 = vmatprep.subr.bf16.mxu0 0
    %1810 = vmatpush2.bf16.msra.mxu0 0
    %1811 = vmatprep.subr.bf16.mxu0 0
    %1812 = vmatpush2.bf16.msra.mxu0 0
    %1813 = vmatprep.subr.bf16.mxu0 0
    %1814 = vmatpush2.bf16.msra.mxu0 0
    %1815 = vmatprep.subr.bf16.mxu0 0
    %1816 = vmatpush2.bf16.msra.mxu0 0
    %1817 = vmatprep.mubr.bf16.mxu0 0
    %1818 = vmatmul.mubr.bf16.gmra.mxu0 %v356
    %v1819 = vpop.f32.mrf.mxu0
    %v1820 = vadd.f32 %v1777, %v1819
    %v1821 = vpop.f32.mrf.mxu0
    %v1822 = vadd.f32 %v1779, %v1821
    %v1823 = vpop.f32.mrf.mxu0
    %v1824 = vadd.f32 %v1781, %v1823
    %v1825 = vpop.f32.mrf.mxu0
    %v1826 = vadd.f32 %v1783, %v1825
    %1827 = vdwg.mxu0
    %v1828 = vmax.f32 %v1648, 0.0
    %v1829 = vmax.f32 %v1650, 0.0
    %v1830 = vmax.f32 %v1820, 0.0
    %v1831 = vmax.f32 %v1822, 0.0
    %v1832 = vmax.f32 %v1652, 0.0
    %v1833 = vmax.f32 %v1654, 0.0
    %v1834 = vmax.f32 %v1824, 0.0
    %v1835 = vmax.f32 %v1826, 0.0
    %v1836 = vpack.c.bf16 %v1832, %v1828
    %v1837 = vpack.c.bf16 %v1833, %v1829
    %v1838 = vpack.c.bf16 %v1834, %v1830
    %v1839 = vpack.c.bf16 %v1835, %v1831
    %v1840 = vld [vmem:[#allocation4] sm:$0xff]
    %v1841 = vld [vmem:[#allocation4 + $0x8] sm:$0xff]
    %v1842 = vld [vmem:[#allocation4 + $0x10] sm:$0xff]
    %v1843 = vld [vmem:[#allocation4 + $0x18] sm:$0xff]
    %v1844 = vld [vmem:[#allocation4 + $0x20] sm:$0xff]
    %v1845 = vld [vmem:[#allocation4 + $0x28] sm:$0xff]
    %v1846 = vld [vmem:[#allocation4 + $0x30] sm:$0xff]
    %v1847 = vld [vmem:[#allocation4 + $0x38] sm:$0xff]
    %v1848 = vld [vmem:[#allocation4 + $0x40] sm:$0xff]
    %v1849 = vld [vmem:[#allocation4 + $0x48] sm:$0xff]
    %v1850 = vld [vmem:[#allocation4 + $0x50] sm:$0xff]
    %v1851 = vld [vmem:[#allocation4 + $0x58] sm:$0xff]
    %v1852 = vld [vmem:[#allocation4 + $0x60] sm:$0xff]
    %v1853 = vld [vmem:[#allocation4 + $0x68] sm:$0xff]
    %v1854 = vld [vmem:[#allocation4 + $0x70] sm:$0xff]
    %v1855 = vld [vmem:[#allocation4 + $0x78] sm:$0xff]
    %v1856 = vld [vmem:[#allocation4 + $0x80] sm:$0xff]
    %v1857 = vld [vmem:[#allocation4 + $0x88] sm:$0xff]
    %v1858 = vld [vmem:[#allocation4 + $0x90] sm:$0xff]
    %v1859 = vld [vmem:[#allocation4 + $0x98] sm:$0xff]
    %v1860 = vld [vmem:[#allocation4 + $0xa0] sm:$0xff]
    %v1861 = vld [vmem:[#allocation4 + $0xa8] sm:$0xff]
    %v1862 = vld [vmem:[#allocation4 + $0xb0] sm:$0xff]
    %v1863 = vld [vmem:[#allocation4 + $0xb8] sm:$0xff]
    %v1864 = vld [vmem:[#allocation4 + $0xc0] sm:$0xff]
    %v1865 = vld [vmem:[#allocation4 + $0xc8] sm:$0xff]
    %v1866 = vld [vmem:[#allocation4 + $0xd0] sm:$0xff]
    %v1867 = vld [vmem:[#allocation4 + $0xd8] sm:$0xff]
    %v1868 = vld [vmem:[#allocation4 + $0xe0] sm:$0xff]
    %v1869 = vld [vmem:[#allocation4 + $0xe8] sm:$0xff]
    %v1870 = vld [vmem:[#allocation4 + $0xf0] sm:$0xff]
    %v1871 = vld [vmem:[#allocation4 + $0xf8] sm:$0xff]
    %v1872 = vld [vmem:[#allocation4 + $0x100] sm:$0xff]
    %v1873 = vld [vmem:[#allocation4 + $0x108] sm:$0xff]
    %v1874 = vld [vmem:[#allocation4 + $0x110] sm:$0xff]
    %v1875 = vld [vmem:[#allocation4 + $0x118] sm:$0xff]
    %v1876 = vld [vmem:[#allocation4 + $0x120] sm:$0xff]
    %v1877 = vld [vmem:[#allocation4 + $0x128] sm:$0xff]
    %v1878 = vld [vmem:[#allocation4 + $0x130] sm:$0xff]
    %v1879 = vld [vmem:[#allocation4 + $0x138] sm:$0xff]
    %v1880 = vld [vmem:[#allocation4 + $0x140] sm:$0xff]
    %v1881 = vld [vmem:[#allocation4 + $0x148] sm:$0xff]
    %v1882 = vld [vmem:[#allocation4 + $0x150] sm:$0xff]
    %v1883 = vld [vmem:[#allocation4 + $0x158] sm:$0xff]
    %v1884 = vld [vmem:[#allocation4 + $0x160] sm:$0xff]
    %v1885 = vld [vmem:[#allocation4 + $0x168] sm:$0xff]
    %v1886 = vld [vmem:[#allocation4 + $0x170] sm:$0xff]
    %v1887 = vld [vmem:[#allocation4 + $0x178] sm:$0xff]
    %v1888 = vld [vmem:[#allocation4 + $0x180] sm:$0xff]
    %v1889 = vld [vmem:[#allocation4 + $0x188] sm:$0xff]
    %v1890 = vld [vmem:[#allocation4 + $0x190] sm:$0xff]
    %v1891 = vld [vmem:[#allocation4 + $0x198] sm:$0xff]
    %v1892 = vld [vmem:[#allocation4 + $0x1a0] sm:$0xff]
    %v1893 = vld [vmem:[#allocation4 + $0x1a8] sm:$0xff]
    %v1894 = vld [vmem:[#allocation4 + $0x1b0] sm:$0xff]
    %v1895 = vld [vmem:[#allocation4 + $0x1b8] sm:$0xff]
    %v1896 = vld [vmem:[#allocation4 + $0x1c0] sm:$0xff]
    %v1897 = vld [vmem:[#allocation4 + $0x1c8] sm:$0xff]
    %v1898 = vld [vmem:[#allocation4 + $0x1d0] sm:$0xff]
    %v1899 = vld [vmem:[#allocation4 + $0x1d8] sm:$0xff]
    %v1900 = vld [vmem:[#allocation4 + $0x1e0] sm:$0xff]
    %v1901 = vld [vmem:[#allocation4 + $0x1e8] sm:$0xff]
    %v1902 = vld [vmem:[#allocation4 + $0x1f0] sm:$0xff]
    %v1903 = vld [vmem:[#allocation4 + $0x1f8] sm:$0xff]
    %v1904 = vld [vmem:[#allocation4 + $0x200] sm:$0xff]
    %v1905 = vld [vmem:[#allocation4 + $0x208] sm:$0xff]
    %v1906 = vld [vmem:[#allocation4 + $0x210] sm:$0xff]
    %v1907 = vld [vmem:[#allocation4 + $0x218] sm:$0xff]
    %v1908 = vld [vmem:[#allocation4 + $0x220] sm:$0xff]
    %v1909 = vld [vmem:[#allocation4 + $0x228] sm:$0xff]
    %v1910 = vld [vmem:[#allocation4 + $0x230] sm:$0xff]
    %v1911 = vld [vmem:[#allocation4 + $0x238] sm:$0xff]
    %v1912 = vld [vmem:[#allocation4 + $0x240] sm:$0xff]
    %v1913 = vld [vmem:[#allocation4 + $0x248] sm:$0xff]
    %v1914 = vld [vmem:[#allocation4 + $0x250] sm:$0xff]
    %v1915 = vld [vmem:[#allocation4 + $0x258] sm:$0xff]
    %v1916 = vld [vmem:[#allocation4 + $0x260] sm:$0xff]
    %v1917 = vld [vmem:[#allocation4 + $0x268] sm:$0xff]
    %v1918 = vld [vmem:[#allocation4 + $0x270] sm:$0xff]
    %v1919 = vld [vmem:[#allocation4 + $0x278] sm:$0xff]
    %v1920 = vld [vmem:[#allocation4 + $0x280] sm:$0xff]
    %v1921 = vld [vmem:[#allocation4 + $0x288] sm:$0xff]
    %v1922 = vld [vmem:[#allocation4 + $0x290] sm:$0xff]
    %v1923 = vld [vmem:[#allocation4 + $0x298] sm:$0xff]
    %v1924 = vld [vmem:[#allocation4 + $0x2a0] sm:$0xff]
    %v1925 = vld [vmem:[#allocation4 + $0x2a8] sm:$0xff]
    %v1926 = vld [vmem:[#allocation4 + $0x2b0] sm:$0xff]
    %v1927 = vld [vmem:[#allocation4 + $0x2b8] sm:$0xff]
    %v1928 = vld [vmem:[#allocation4 + $0x2c0] sm:$0xff]
    %v1929 = vld [vmem:[#allocation4 + $0x2c8] sm:$0xff]
    %v1930 = vld [vmem:[#allocation4 + $0x2d0] sm:$0xff]
    %v1931 = vld [vmem:[#allocation4 + $0x2d8] sm:$0xff]
    %v1932 = vld [vmem:[#allocation4 + $0x2e0] sm:$0xff]
    %v1933 = vld [vmem:[#allocation4 + $0x2e8] sm:$0xff]
    %v1934 = vld [vmem:[#allocation4 + $0x2f0] sm:$0xff]
    %v1935 = vld [vmem:[#allocation4 + $0x2f8] sm:$0xff]
    %v1936 = vld [vmem:[#allocation4 + $0x300] sm:$0xff]
    %v1937 = vld [vmem:[#allocation4 + $0x308] sm:$0xff]
    %v1938 = vld [vmem:[#allocation4 + $0x310] sm:$0xff]
    %v1939 = vld [vmem:[#allocation4 + $0x318] sm:$0xff]
    %v1940 = vld [vmem:[#allocation4 + $0x320] sm:$0xff]
    %v1941 = vld [vmem:[#allocation4 + $0x328] sm:$0xff]
    %v1942 = vld [vmem:[#allocation4 + $0x330] sm:$0xff]
    %v1943 = vld [vmem:[#allocation4 + $0x338] sm:$0xff]
    %v1944 = vld [vmem:[#allocation4 + $0x340] sm:$0xff]
    %v1945 = vld [vmem:[#allocation4 + $0x348] sm:$0xff]
    %v1946 = vld [vmem:[#allocation4 + $0x350] sm:$0xff]
    %v1947 = vld [vmem:[#allocation4 + $0x358] sm:$0xff]
    %v1948 = vld [vmem:[#allocation4 + $0x360] sm:$0xff]
    %v1949 = vld [vmem:[#allocation4 + $0x368] sm:$0xff]
    %v1950 = vld [vmem:[#allocation4 + $0x370] sm:$0xff]
    %v1951 = vld [vmem:[#allocation4 + $0x378] sm:$0xff]
    %v1952 = vld [vmem:[#allocation4 + $0x380] sm:$0xff]
    %v1953 = vld [vmem:[#allocation4 + $0x388] sm:$0xff]
    %v1954 = vld [vmem:[#allocation4 + $0x390] sm:$0xff]
    %v1955 = vld [vmem:[#allocation4 + $0x398] sm:$0xff]
    %v1956 = vld [vmem:[#allocation4 + $0x3a0] sm:$0xff]
    %v1957 = vld [vmem:[#allocation4 + $0x3a8] sm:$0xff]
    %v1958 = vld [vmem:[#allocation4 + $0x3b0] sm:$0xff]
    %v1959 = vld [vmem:[#allocation4 + $0x3b8] sm:$0xff]
    %v1960 = vld [vmem:[#allocation4 + $0x3c0] sm:$0xff]
    %v1961 = vld [vmem:[#allocation4 + $0x3c8] sm:$0xff]
    %v1962 = vld [vmem:[#allocation4 + $0x3d0] sm:$0xff]
    %v1963 = vld [vmem:[#allocation4 + $0x3d8] sm:$0xff]
    %v1964 = vld [vmem:[#allocation4 + $0x3e0] sm:$0xff]
    %v1965 = vld [vmem:[#allocation4 + $0x3e8] sm:$0xff]
    %v1966 = vld [vmem:[#allocation4 + $0x3f0] sm:$0xff]
    %v1967 = vld [vmem:[#allocation4 + $0x3f8] sm:$0xff]
    %v1968 = vld [vmem:[%s4] sm:$0xf]
    %v1970 = vlaneseq
    %v1971 = vshrl.u32 %v1970, 7
    %v1972 = vsub.s32 0, %v1971
    %v1973 = vrot.slane %v1968, %v1972
    %v1974 = vlaneseq
    %v1975 = vshrl.u32 %v1974, 7
    %v1976 = vsub.s32 1, %v1975
    %v1977 = vrot.slane %v1968, %v1976
    %v1978 = vlaneseq
    %v1979 = vshrl.u32 %v1978, 7
    %v1980 = vsub.s32 2, %v1979
    %v1981 = vrot.slane %v1968, %v1980
    %v1982 = vlaneseq
    %v1983 = vshrl.u32 %v1982, 7
    %v1984 = vsub.s32 3, %v1983
    %v1985 = vrot.slane %v1968, %v1984
    %v2118 = vunpack.c.l.b16 %v1840
    %v2119 = vunpack.c.h.b16 %v1840
    %v2120 = vunpack.c.l.b16 %v1841
    %v2121 = vunpack.c.h.b16 %v1841
    %v2122 = vunpack.c.l.b16 %v1842
    %v2123 = vunpack.c.h.b16 %v1842
    %v2124 = vunpack.c.l.b16 %v1843
    %v2125 = vunpack.c.h.b16 %v1843
    %v2126 = vunpack.c.l.b16 %v1844
    %v2127 = vunpack.c.h.b16 %v1844
    %v2128 = vunpack.c.l.b16 %v1845
    %v2129 = vunpack.c.h.b16 %v1845
    %v2130 = vunpack.c.l.b16 %v1846
    %v2131 = vunpack.c.h.b16 %v1846
    %v2132 = vunpack.c.l.b16 %v1847
    %v2133 = vunpack.c.h.b16 %v1847
    %v2134 = vunpack.c.l.b16 %v1848
    %v2135 = vunpack.c.h.b16 %v1848
    %v2136 = vunpack.c.l.b16 %v1849
    %v2137 = vunpack.c.h.b16 %v1849
    %v2138 = vunpack.c.l.b16 %v1850
    %v2139 = vunpack.c.h.b16 %v1850
    %v2140 = vunpack.c.l.b16 %v1851
    %v2141 = vunpack.c.h.b16 %v1851
    %v2142 = vunpack.c.l.b16 %v1852
    %v2143 = vunpack.c.h.b16 %v1852
    %v2144 = vunpack.c.l.b16 %v1853
    %v2145 = vunpack.c.h.b16 %v1853
    %v2146 = vunpack.c.l.b16 %v1854
    %v2147 = vunpack.c.h.b16 %v1854
    %v2148 = vunpack.c.l.b16 %v1855
    %v2149 = vunpack.c.h.b16 %v1855
    %v2150 = vunpack.c.l.b16 %v1856
    %v2151 = vunpack.c.h.b16 %v1856
    %v2152 = vunpack.c.l.b16 %v1857
    %v2153 = vunpack.c.h.b16 %v1857
    %v2154 = vunpack.c.l.b16 %v1858
    %v2155 = vunpack.c.h.b16 %v1858
    %v2156 = vunpack.c.l.b16 %v1859
    %v2157 = vunpack.c.h.b16 %v1859
    %v2158 = vunpack.c.l.b16 %v1860
    %v2159 = vunpack.c.h.b16 %v1860
    %v2160 = vunpack.c.l.b16 %v1861
    %v2161 = vunpack.c.h.b16 %v1861
    %v2162 = vunpack.c.l.b16 %v1862
    %v2163 = vunpack.c.h.b16 %v1862
    %v2164 = vunpack.c.l.b16 %v1863
    %v2165 = vunpack.c.h.b16 %v1863
    %v2166 = vunpack.c.l.b16 %v1864
    %v2167 = vunpack.c.h.b16 %v1864
    %v2168 = vunpack.c.l.b16 %v1865
    %v2169 = vunpack.c.h.b16 %v1865
    %v2170 = vunpack.c.l.b16 %v1866
    %v2171 = vunpack.c.h.b16 %v1866
    %v2172 = vunpack.c.l.b16 %v1867
    %v2173 = vunpack.c.h.b16 %v1867
    %v2174 = vunpack.c.l.b16 %v1868
    %v2175 = vunpack.c.h.b16 %v1868
    %v2176 = vunpack.c.l.b16 %v1869
    %v2177 = vunpack.c.h.b16 %v1869
    %v2178 = vunpack.c.l.b16 %v1870
    %v2179 = vunpack.c.h.b16 %v1870
    %v2180 = vunpack.c.l.b16 %v1871
    %v2181 = vunpack.c.h.b16 %v1871
    %v2182 = vunpack.c.l.b16 %v1872
    %v2183 = vunpack.c.h.b16 %v1872
    %v2184 = vunpack.c.l.b16 %v1873
    %v2185 = vunpack.c.h.b16 %v1873
    %v2186 = vunpack.c.l.b16 %v1874
    %v2187 = vunpack.c.h.b16 %v1874
    %v2188 = vunpack.c.l.b16 %v1875
    %v2189 = vunpack.c.h.b16 %v1875
    %v2190 = vunpack.c.l.b16 %v1876
    %v2191 = vunpack.c.h.b16 %v1876
    %v2192 = vunpack.c.l.b16 %v1877
    %v2193 = vunpack.c.h.b16 %v1877
    %v2194 = vunpack.c.l.b16 %v1878
    %v2195 = vunpack.c.h.b16 %v1878
    %v2196 = vunpack.c.l.b16 %v1879
    %v2197 = vunpack.c.h.b16 %v1879
    %v2198 = vunpack.c.l.b16 %v1880
    %v2199 = vunpack.c.h.b16 %v1880
    %v2200 = vunpack.c.l.b16 %v1881
    %v2201 = vunpack.c.h.b16 %v1881
    %v2202 = vunpack.c.l.b16 %v1882
    %v2203 = vunpack.c.h.b16 %v1882
    %v2204 = vunpack.c.l.b16 %v1883
    %v2205 = vunpack.c.h.b16 %v1883
    %v2206 = vunpack.c.l.b16 %v1884
    %v2207 = vunpack.c.h.b16 %v1884
    %v2208 = vunpack.c.l.b16 %v1885
    %v2209 = vunpack.c.h.b16 %v1885
    %v2210 = vunpack.c.l.b16 %v1886
    %v2211 = vunpack.c.h.b16 %v1886
    %v2212 = vunpack.c.l.b16 %v1887
    %v2213 = vunpack.c.h.b16 %v1887
    %v2214 = vunpack.c.l.b16 %v1888
    %v2215 = vunpack.c.h.b16 %v1888
    %v2216 = vunpack.c.l.b16 %v1889
    %v2217 = vunpack.c.h.b16 %v1889
    %v2218 = vunpack.c.l.b16 %v1890
    %v2219 = vunpack.c.h.b16 %v1890
    %v2220 = vunpack.c.l.b16 %v1891
    %v2221 = vunpack.c.h.b16 %v1891
    %v2222 = vunpack.c.l.b16 %v1892
    %v2223 = vunpack.c.h.b16 %v1892
    %v2224 = vunpack.c.l.b16 %v1893
    %v2225 = vunpack.c.h.b16 %v1893
    %v2226 = vunpack.c.l.b16 %v1894
    %v2227 = vunpack.c.h.b16 %v1894
    %v2228 = vunpack.c.l.b16 %v1895
    %v2229 = vunpack.c.h.b16 %v1895
    %v2230 = vunpack.c.l.b16 %v1896
    %v2231 = vunpack.c.h.b16 %v1896
    %v2232 = vunpack.c.l.b16 %v1897
    %v2233 = vunpack.c.h.b16 %v1897
    %v2234 = vunpack.c.l.b16 %v1898
    %v2235 = vunpack.c.h.b16 %v1898
    %v2236 = vunpack.c.l.b16 %v1899
    %v2237 = vunpack.c.h.b16 %v1899
    %v2238 = vunpack.c.l.b16 %v1900
    %v2239 = vunpack.c.h.b16 %v1900
    %v2240 = vunpack.c.l.b16 %v1901
    %v2241 = vunpack.c.h.b16 %v1901
    %v2242 = vunpack.c.l.b16 %v1902
    %v2243 = vunpack.c.h.b16 %v1902
    %v2244 = vunpack.c.l.b16 %v1903
    %v2245 = vunpack.c.h.b16 %v1903
    %v2246 = vunpack.c.l.b16 %v1904
    %v2247 = vunpack.c.h.b16 %v1904
    %v2248 = vunpack.c.l.b16 %v1905
    %v2249 = vunpack.c.h.b16 %v1905
    %v2250 = vunpack.c.l.b16 %v1906
    %v2251 = vunpack.c.h.b16 %v1906
    %v2252 = vunpack.c.l.b16 %v1907
    %v2253 = vunpack.c.h.b16 %v1907
    %v2254 = vunpack.c.l.b16 %v1908
    %v2255 = vunpack.c.h.b16 %v1908
    %v2256 = vunpack.c.l.b16 %v1909
    %v2257 = vunpack.c.h.b16 %v1909
    %v2258 = vunpack.c.l.b16 %v1910
    %v2259 = vunpack.c.h.b16 %v1910
    %v2260 = vunpack.c.l.b16 %v1911
    %v2261 = vunpack.c.h.b16 %v1911
    %v2262 = vunpack.c.l.b16 %v1912
    %v2263 = vunpack.c.h.b16 %v1912
    %v2264 = vunpack.c.l.b16 %v1913
    %v2265 = vunpack.c.h.b16 %v1913
    %v2266 = vunpack.c.l.b16 %v1914
    %v2267 = vunpack.c.h.b16 %v1914
    %v2268 = vunpack.c.l.b16 %v1915
    %v2269 = vunpack.c.h.b16 %v1915
    %v2270 = vunpack.c.l.b16 %v1916
    %v2271 = vunpack.c.h.b16 %v1916
    %v2272 = vunpack.c.l.b16 %v1917
    %v2273 = vunpack.c.h.b16 %v1917
    %v2274 = vunpack.c.l.b16 %v1918
    %v2275 = vunpack.c.h.b16 %v1918
    %v2276 = vunpack.c.l.b16 %v1919
    %v2277 = vunpack.c.h.b16 %v1919
    %v2278 = vunpack.c.l.b16 %v1920
    %v2279 = vunpack.c.h.b16 %v1920
    %v2280 = vunpack.c.l.b16 %v1921
    %v2281 = vunpack.c.h.b16 %v1921
    %v2282 = vunpack.c.l.b16 %v1922
    %v2283 = vunpack.c.h.b16 %v1922
    %v2284 = vunpack.c.l.b16 %v1923
    %v2285 = vunpack.c.h.b16 %v1923
    %v2286 = vunpack.c.l.b16 %v1924
    %v2287 = vunpack.c.h.b16 %v1924
    %v2288 = vunpack.c.l.b16 %v1925
    %v2289 = vunpack.c.h.b16 %v1925
    %v2290 = vunpack.c.l.b16 %v1926
    %v2291 = vunpack.c.h.b16 %v1926
    %v2292 = vunpack.c.l.b16 %v1927
    %v2293 = vunpack.c.h.b16 %v1927
    %v2294 = vunpack.c.l.b16 %v1928
    %v2295 = vunpack.c.h.b16 %v1928
    %v2296 = vunpack.c.l.b16 %v1929
    %v2297 = vunpack.c.h.b16 %v1929
    %v2298 = vunpack.c.l.b16 %v1930
    %v2299 = vunpack.c.h.b16 %v1930
    %v2300 = vunpack.c.l.b16 %v1931
    %v2301 = vunpack.c.h.b16 %v1931
    %v2302 = vunpack.c.l.b16 %v1932
    %v2303 = vunpack.c.h.b16 %v1932
    %v2304 = vunpack.c.l.b16 %v1933
    %v2305 = vunpack.c.h.b16 %v1933
    %v2306 = vunpack.c.l.b16 %v1934
    %v2307 = vunpack.c.h.b16 %v1934
    %v2308 = vunpack.c.l.b16 %v1935
    %v2309 = vunpack.c.h.b16 %v1935
    %v2310 = vunpack.c.l.b16 %v1936
    %v2311 = vunpack.c.h.b16 %v1936
    %v2312 = vunpack.c.l.b16 %v1937
    %v2313 = vunpack.c.h.b16 %v1937
    %v2314 = vunpack.c.l.b16 %v1938
    %v2315 = vunpack.c.h.b16 %v1938
    %v2316 = vunpack.c.l.b16 %v1939
    %v2317 = vunpack.c.h.b16 %v1939
    %v2318 = vunpack.c.l.b16 %v1940
    %v2319 = vunpack.c.h.b16 %v1940
    %v2320 = vunpack.c.l.b16 %v1941
    %v2321 = vunpack.c.h.b16 %v1941
    %v2322 = vunpack.c.l.b16 %v1942
    %v2323 = vunpack.c.h.b16 %v1942
    %v2324 = vunpack.c.l.b16 %v1943
    %v2325 = vunpack.c.h.b16 %v1943
    %v2326 = vunpack.c.l.b16 %v1944
    %v2327 = vunpack.c.h.b16 %v1944
    %v2328 = vunpack.c.l.b16 %v1945
    %v2329 = vunpack.c.h.b16 %v1945
    %v2330 = vunpack.c.l.b16 %v1946
    %v2331 = vunpack.c.h.b16 %v1946
    %v2332 = vunpack.c.l.b16 %v1947
    %v2333 = vunpack.c.h.b16 %v1947
    %v2334 = vunpack.c.l.b16 %v1948
    %v2335 = vunpack.c.h.b16 %v1948
    %v2336 = vunpack.c.l.b16 %v1949
    %v2337 = vunpack.c.h.b16 %v1949
    %v2338 = vunpack.c.l.b16 %v1950
    %v2339 = vunpack.c.h.b16 %v1950
    %v2340 = vunpack.c.l.b16 %v1951
    %v2341 = vunpack.c.h.b16 %v1951
    %v2342 = vunpack.c.l.b16 %v1952
    %v2343 = vunpack.c.h.b16 %v1952
    %v2344 = vunpack.c.l.b16 %v1953
    %v2345 = vunpack.c.h.b16 %v1953
    %v2346 = vunpack.c.l.b16 %v1954
    %v2347 = vunpack.c.h.b16 %v1954
    %v2348 = vunpack.c.l.b16 %v1955
    %v2349 = vunpack.c.h.b16 %v1955
    %v2350 = vunpack.c.l.b16 %v1956
    %v2351 = vunpack.c.h.b16 %v1956
    %v2352 = vunpack.c.l.b16 %v1957
    %v2353 = vunpack.c.h.b16 %v1957
    %v2354 = vunpack.c.l.b16 %v1958
    %v2355 = vunpack.c.h.b16 %v1958
    %v2356 = vunpack.c.l.b16 %v1959
    %v2357 = vunpack.c.h.b16 %v1959
    %v2358 = vunpack.c.l.b16 %v1960
    %v2359 = vunpack.c.h.b16 %v1960
    %v2360 = vunpack.c.l.b16 %v1961
    %v2361 = vunpack.c.h.b16 %v1961
    %v2362 = vunpack.c.l.b16 %v1962
    %v2363 = vunpack.c.h.b16 %v1962
    %v2364 = vunpack.c.l.b16 %v1963
    %v2365 = vunpack.c.h.b16 %v1963
    %v2366 = vunpack.c.l.b16 %v1964
    %v2367 = vunpack.c.h.b16 %v1964
    %v2368 = vunpack.c.l.b16 %v1965
    %v2369 = vunpack.c.h.b16 %v1965
    %v2370 = vunpack.c.l.b16 %v1966
    %v2371 = vunpack.c.h.b16 %v1966
    %v2372 = vunpack.c.l.b16 %v1967
    %v2373 = vunpack.c.h.b16 %v1967
    %v2374 = vpack.c.b16 %v2122, %v2118
    %v2375 = vpack.c.b16 %v2123, %v2119
    %v2376 = vpack.c.b16 %v2124, %v2120
    %v2377 = vpack.c.b16 %v2125, %v2121
    %v2378 = vpack.c.b16 %v2130, %v2126
    %v2379 = vpack.c.b16 %v2131, %v2127
    %v2380 = vpack.c.b16 %v2132, %v2128
    %v2381 = vpack.c.b16 %v2133, %v2129
    %v2382 = vpack.c.b16 %v2138, %v2134
    %v2383 = vpack.c.b16 %v2139, %v2135
    %v2384 = vpack.c.b16 %v2140, %v2136
    %v2385 = vpack.c.b16 %v2141, %v2137
    %v2386 = vpack.c.b16 %v2146, %v2142
    %v2387 = vpack.c.b16 %v2147, %v2143
    %v2388 = vpack.c.b16 %v2148, %v2144
    %v2389 = vpack.c.b16 %v2149, %v2145
    %v2390 = vpack.c.b16 %v2154, %v2150
    %v2391 = vpack.c.b16 %v2155, %v2151
    %v2392 = vpack.c.b16 %v2156, %v2152
    %v2393 = vpack.c.b16 %v2157, %v2153
    %v2394 = vpack.c.b16 %v2162, %v2158
    %v2395 = vpack.c.b16 %v2163, %v2159
    %v2396 = vpack.c.b16 %v2164, %v2160
    %v2397 = vpack.c.b16 %v2165, %v2161
    %v2398 = vpack.c.b16 %v2170, %v2166
    %v2399 = vpack.c.b16 %v2171, %v2167
    %v2400 = vpack.c.b16 %v2172, %v2168
    %v2401 = vpack.c.b16 %v2173, %v2169
    %v2402 = vpack.c.b16 %v2178, %v2174
    %v2403 = vpack.c.b16 %v2179, %v2175
    %v2404 = vpack.c.b16 %v2180, %v2176
    %v2405 = vpack.c.b16 %v2181, %v2177
    %v2406 = vpack.c.b16 %v2186, %v2182
    %v2407 = vpack.c.b16 %v2187, %v2183
    %v2408 = vpack.c.b16 %v2188, %v2184
    %v2409 = vpack.c.b16 %v2189, %v2185
    %v2410 = vpack.c.b16 %v2194, %v2190
    %v2411 = vpack.c.b16 %v2195, %v2191
    %v2412 = vpack.c.b16 %v2196, %v2192
    %v2413 = vpack.c.b16 %v2197, %v2193
    %v2414 = vpack.c.b16 %v2202, %v2198
    %v2415 = vpack.c.b16 %v2203, %v2199
    %v2416 = vpack.c.b16 %v2204, %v2200
    %v2417 = vpack.c.b16 %v2205, %v2201
    %v2418 = vpack.c.b16 %v2210, %v2206
    %v2419 = vpack.c.b16 %v2211, %v2207
    %v2420 = vpack.c.b16 %v2212, %v2208
    %v2421 = vpack.c.b16 %v2213, %v2209
    %v2422 = vpack.c.b16 %v2218, %v2214
    %v2423 = vpack.c.b16 %v2219, %v2215
    %v2424 = vpack.c.b16 %v2220, %v2216
    %v2425 = vpack.c.b16 %v2221, %v2217
    %v2426 = vpack.c.b16 %v2226, %v2222
    %v2427 = vpack.c.b16 %v2227, %v2223
    %v2428 = vpack.c.b16 %v2228, %v2224
    %v2429 = vpack.c.b16 %v2229, %v2225
    %v2430 = vpack.c.b16 %v2234, %v2230
    %v2431 = vpack.c.b16 %v2235, %v2231
    %v2432 = vpack.c.b16 %v2236, %v2232
    %v2433 = vpack.c.b16 %v2237, %v2233
    %v2434 = vpack.c.b16 %v2242, %v2238
    %v2435 = vpack.c.b16 %v2243, %v2239
    %v2436 = vpack.c.b16 %v2244, %v2240
    %v2437 = vpack.c.b16 %v2245, %v2241
    %v2438 = vpack.c.b16 %v2250, %v2246
    %v2439 = vpack.c.b16 %v2251, %v2247
    %v2440 = vpack.c.b16 %v2252, %v2248
    %v2441 = vpack.c.b16 %v2253, %v2249
    %v2442 = vpack.c.b16 %v2258, %v2254
    %v2443 = vpack.c.b16 %v2259, %v2255
    %v2444 = vpack.c.b16 %v2260, %v2256
    %v2445 = vpack.c.b16 %v2261, %v2257
    %v2446 = vpack.c.b16 %v2266, %v2262
    %v2447 = vpack.c.b16 %v2267, %v2263
    %v2448 = vpack.c.b16 %v2268, %v2264
    %v2449 = vpack.c.b16 %v2269, %v2265
    %v2450 = vpack.c.b16 %v2274, %v2270
    %v2451 = vpack.c.b16 %v2275, %v2271
    %v2452 = vpack.c.b16 %v2276, %v2272
    %v2453 = vpack.c.b16 %v2277, %v2273
    %v2454 = vpack.c.b16 %v2282, %v2278
    %v2455 = vpack.c.b16 %v2283, %v2279
    %v2456 = vpack.c.b16 %v2284, %v2280
    %v2457 = vpack.c.b16 %v2285, %v2281
    %v2458 = vpack.c.b16 %v2290, %v2286
    %v2459 = vpack.c.b16 %v2291, %v2287
    %v2460 = vpack.c.b16 %v2292, %v2288
    %v2461 = vpack.c.b16 %v2293, %v2289
    %v2462 = vpack.c.b16 %v2298, %v2294
    %v2463 = vpack.c.b16 %v2299, %v2295
    %v2464 = vpack.c.b16 %v2300, %v2296
    %v2465 = vpack.c.b16 %v2301, %v2297
    %v2466 = vpack.c.b16 %v2306, %v2302
    %v2467 = vpack.c.b16 %v2307, %v2303
    %v2468 = vpack.c.b16 %v2308, %v2304
    %v2469 = vpack.c.b16 %v2309, %v2305
    %v2470 = vpack.c.b16 %v2314, %v2310
    %v2471 = vpack.c.b16 %v2315, %v2311
    %v2472 = vpack.c.b16 %v2316, %v2312
    %v2473 = vpack.c.b16 %v2317, %v2313
    %v2474 = vpack.c.b16 %v2322, %v2318
    %v2475 = vpack.c.b16 %v2323, %v2319
    %v2476 = vpack.c.b16 %v2324, %v2320
    %v2477 = vpack.c.b16 %v2325, %v2321
    %v2478 = vpack.c.b16 %v2330, %v2326
    %v2479 = vpack.c.b16 %v2331, %v2327
    %v2480 = vpack.c.b16 %v2332, %v2328
    %v2481 = vpack.c.b16 %v2333, %v2329
    %v2482 = vpack.c.b16 %v2338, %v2334
    %v2483 = vpack.c.b16 %v2339, %v2335
    %v2484 = vpack.c.b16 %v2340, %v2336
    %v2485 = vpack.c.b16 %v2341, %v2337
    %v2486 = vpack.c.b16 %v2346, %v2342
    %v2487 = vpack.c.b16 %v2347, %v2343
    %v2488 = vpack.c.b16 %v2348, %v2344
    %v2489 = vpack.c.b16 %v2349, %v2345
    %v2490 = vpack.c.b16 %v2354, %v2350
    %v2491 = vpack.c.b16 %v2355, %v2351
    %v2492 = vpack.c.b16 %v2356, %v2352
    %v2493 = vpack.c.b16 %v2357, %v2353
    %v2494 = vpack.c.b16 %v2362, %v2358
    %v2495 = vpack.c.b16 %v2363, %v2359
    %v2496 = vpack.c.b16 %v2364, %v2360
    %v2497 = vpack.c.b16 %v2365, %v2361
    %v2498 = vpack.c.b16 %v2370, %v2366
    %v2499 = vpack.c.b16 %v2371, %v2367
    %v2500 = vpack.c.b16 %v2372, %v2368
    %v2501 = vpack.c.b16 %v2373, %v2369
    %2630 = vmatprep.subr.bf16.mxu0 %v2403
    %2631 = vmatpush1.bf16.msra.mxu0 %v2402
    %2632 = vmatprep.subr.bf16.mxu0 %v2399
    %2633 = vmatpush1.bf16.msra.mxu0 %v2398
    %2634 = vmatprep.subr.bf16.mxu0 %v2395
    %2635 = vmatpush1.bf16.msra.mxu0 %v2394
    %2636 = vmatprep.subr.bf16.mxu0 %v2391
    %2637 = vmatpush1.bf16.msra.mxu0 %v2390
    %2638 = vmatprep.subr.bf16.mxu0 %v2387
    %2639 = vmatpush1.bf16.msra.mxu0 %v2386
    %2640 = vmatprep.subr.bf16.mxu0 %v2383
    %2641 = vmatpush1.bf16.msra.mxu0 %v2382
    %2642 = vmatprep.subr.bf16.mxu0 %v2379
    %2643 = vmatpush1.bf16.msra.mxu0 %v2378
    %2644 = vmatprep.subr.bf16.mxu0 %v2375
    %2645 = vmatpush1.bf16.msra.mxu0 %v2374
    %2646 = vmatprep.subr.bf16.mxu0 %v2435
    %2647 = vmatpush2.bf16.msra.mxu0 %v2434
    %2648 = vmatprep.subr.bf16.mxu0 %v2431
    %2649 = vmatpush2.bf16.msra.mxu0 %v2430
    %2650 = vmatprep.subr.bf16.mxu0 %v2427
    %2651 = vmatpush2.bf16.msra.mxu0 %v2426
    %2652 = vmatprep.subr.bf16.mxu0 %v2423
    %2653 = vmatpush2.bf16.msra.mxu0 %v2422
    %2654 = vmatprep.subr.bf16.mxu0 %v2419
    %2655 = vmatpush2.bf16.msra.mxu0 %v2418
    %2656 = vmatprep.subr.bf16.mxu0 %v2415
    %2657 = vmatpush2.bf16.msra.mxu0 %v2414
    %2658 = vmatprep.subr.bf16.mxu0 %v2411
    %2659 = vmatpush2.bf16.msra.mxu0 %v2410
    %2660 = vmatprep.subr.bf16.mxu0 %v2407
    %2661 = vmatpush2.bf16.msra.mxu0 %v2406
    %2662 = vmatprep.mubr.bf16.mxu0 %v1837
    %2663 = vmatmul.mubr.bf16.gmra.mxu0 %v1836
    %v2664 = vpop.f32.mrf.mxu0
    %v2665 = vadd.f32 %v1973, %v2664
    %v2666 = vpop.f32.mrf.mxu0
    %v2667 = vadd.f32 %v1977, %v2666
    %v2668 = vpop.f32.mrf.mxu0
    %v2669 = vadd.f32 %v1973, %v2668
    %v2670 = vpop.f32.mrf.mxu0
    %v2671 = vadd.f32 %v1977, %v2670
    %2672 = vdwg.mxu0
    %2673 = vmatprep.subr.bf16.mxu0 %v2467
    %2674 = vmatpush1.bf16.msra.mxu0 %v2466
    %2675 = vmatprep.subr.bf16.mxu0 %v2463
    %2676 = vmatpush1.bf16.msra.mxu0 %v2462
    %2677 = vmatprep.subr.bf16.mxu0 %v2459
    %2678 = vmatpush1.bf16.msra.mxu0 %v2458
    %2679 = vmatprep.subr.bf16.mxu0 %v2455
    %2680 = vmatpush1.bf16.msra.mxu0 %v2454
    %2681 = vmatprep.subr.bf16.mxu0 %v2451
    %2682 = vmatpush1.bf16.msra.mxu0 %v2450
    %2683 = vmatprep.subr.bf16.mxu0 %v2447
    %2684 = vmatpush1.bf16.msra.mxu0 %v2446
    %2685 = vmatprep.subr.bf16.mxu0 %v2443
    %2686 = vmatpush1.bf16.msra.mxu0 %v2442
    %2687 = vmatprep.subr.bf16.mxu0 %v2439
    %2688 = vmatpush1.bf16.msra.mxu0 %v2438
    %2689 = vmatprep.subr.bf16.mxu0 %v2499
    %2690 = vmatpush2.bf16.msra.mxu0 %v2498
    %2691 = vmatprep.subr.bf16.mxu0 %v2495
    %2692 = vmatpush2.bf16.msra.mxu0 %v2494
    %2693 = vmatprep.subr.bf16.mxu0 %v2491
    %2694 = vmatpush2.bf16.msra.mxu0 %v2490
    %2695 = vmatprep.subr.bf16.mxu0 %v2487
    %2696 = vmatpush2.bf16.msra.mxu0 %v2486
    %2697 = vmatprep.subr.bf16.mxu0 %v2483
    %2698 = vmatpush2.bf16.msra.mxu0 %v2482
    %2699 = vmatprep.subr.bf16.mxu0 %v2479
    %2700 = vmatpush2.bf16.msra.mxu0 %v2478
    %2701 = vmatprep.subr.bf16.mxu0 %v2475
    %2702 = vmatpush2.bf16.msra.mxu0 %v2474
    %2703 = vmatprep.subr.bf16.mxu0 %v2471
    %2704 = vmatpush2.bf16.msra.mxu0 %v2470
    %2705 = vmatprep.mubr.bf16.mxu0 %v1839
    %2706 = vmatmul.mubr.bf16.gmra.mxu0 %v1838
    %v2707 = vpop.f32.mrf.mxu0
    %v2708 = vadd.f32 %v2665, %v2707
    %v2709 = vpop.f32.mrf.mxu0
    %v2710 = vadd.f32 %v2667, %v2709
    %v2711 = vpop.f32.mrf.mxu0
    %v2712 = vadd.f32 %v2669, %v2711
    %v2713 = vpop.f32.mrf.mxu0
    %v2714 = vadd.f32 %v2671, %v2713
    %2715 = vdwg.mxu0
    %2716 = vmatprep.subr.bf16.mxu0 %v2405
    %2717 = vmatpush1.bf16.msra.mxu0 %v2404
    %2718 = vmatprep.subr.bf16.mxu0 %v2401
    %2719 = vmatpush1.bf16.msra.mxu0 %v2400
    %2720 = vmatprep.subr.bf16.mxu0 %v2397
    %2721 = vmatpush1.bf16.msra.mxu0 %v2396
    %2722 = vmatprep.subr.bf16.mxu0 %v2393
    %2723 = vmatpush1.bf16.msra.mxu0 %v2392
    %2724 = vmatprep.subr.bf16.mxu0 %v2389
    %2725 = vmatpush1.bf16.msra.mxu0 %v2388
    %2726 = vmatprep.subr.bf16.mxu0 %v2385
    %2727 = vmatpush1.bf16.msra.mxu0 %v2384
    %2728 = vmatprep.subr.bf16.mxu0 %v2381
    %2729 = vmatpush1.bf16.msra.mxu0 %v2380
    %2730 = vmatprep.subr.bf16.mxu0 %v2377
    %2731 = vmatpush1.bf16.msra.mxu0 %v2376
    %2732 = vmatprep.subr.bf16.mxu0 %v2437
    %2733 = vmatpush2.bf16.msra.mxu0 %v2436
    %2734 = vmatprep.subr.bf16.mxu0 %v2433
    %2735 = vmatpush2.bf16.msra.mxu0 %v2432
    %2736 = vmatprep.subr.bf16.mxu0 %v2429
    %2737 = vmatpush2.bf16.msra.mxu0 %v2428
    %2738 = vmatprep.subr.bf16.mxu0 %v2425
    %2739 = vmatpush2.bf16.msra.mxu0 %v2424
    %2740 = vmatprep.subr.bf16.mxu0 %v2421
    %2741 = vmatpush2.bf16.msra.mxu0 %v2420
    %2742 = vmatprep.subr.bf16.mxu0 %v2417
    %2743 = vmatpush2.bf16.msra.mxu0 %v2416
    %2744 = vmatprep.subr.bf16.mxu0 %v2413
    %2745 = vmatpush2.bf16.msra.mxu0 %v2412
    %2746 = vmatprep.subr.bf16.mxu0 %v2409
    %2747 = vmatpush2.bf16.msra.mxu0 %v2408
    %2748 = vmatprep.mubr.bf16.mxu0 %v1837
    %2749 = vmatmul.mubr.bf16.gmra.mxu0 %v1836
    %v2750 = vpop.f32.mrf.mxu0
    %v2751 = vadd.f32 %v1981, %v2750
    %v2752 = vpop.f32.mrf.mxu0
    %v2753 = vadd.f32 %v1985, %v2752
    %v2754 = vpop.f32.mrf.mxu0
    %v2755 = vadd.f32 %v1981, %v2754
    %v2756 = vpop.f32.mrf.mxu0
    %v2757 = vadd.f32 %v1985, %v2756
    %2758 = vdwg.mxu0
    %2759 = vmatprep.subr.bf16.mxu0 %v2469
    %2760 = vmatpush1.bf16.msra.mxu0 %v2468
    %2761 = vmatprep.subr.bf16.mxu0 %v2465
    %2762 = vmatpush1.bf16.msra.mxu0 %v2464
    %2763 = vmatprep.subr.bf16.mxu0 %v2461
    %2764 = vmatpush1.bf16.msra.mxu0 %v2460
    %2765 = vmatprep.subr.bf16.mxu0 %v2457
    %2766 = vmatpush1.bf16.msra.mxu0 %v2456
    %2767 = vmatprep.subr.bf16.mxu0 %v2453
    %2768 = vmatpush1.bf16.msra.mxu0 %v2452
    %2769 = vmatprep.subr.bf16.mxu0 %v2449
    %2770 = vmatpush1.bf16.msra.mxu0 %v2448
    %2771 = vmatprep.subr.bf16.mxu0 %v2445
    %2772 = vmatpush1.bf16.msra.mxu0 %v2444
    %2773 = vmatprep.subr.bf16.mxu0 %v2441
    %2774 = vmatpush1.bf16.msra.mxu0 %v2440
    %2775 = vmatprep.subr.bf16.mxu0 %v2501
    %2776 = vmatpush2.bf16.msra.mxu0 %v2500
    %2777 = vmatprep.subr.bf16.mxu0 %v2497
    %2778 = vmatpush2.bf16.msra.mxu0 %v2496
    %2779 = vmatprep.subr.bf16.mxu0 %v2493
    %2780 = vmatpush2.bf16.msra.mxu0 %v2492
    %2781 = vmatprep.subr.bf16.mxu0 %v2489
    %2782 = vmatpush2.bf16.msra.mxu0 %v2488
    %2783 = vmatprep.subr.bf16.mxu0 %v2485
    %2784 = vmatpush2.bf16.msra.mxu0 %v2484
    %2785 = vmatprep.subr.bf16.mxu0 %v2481
    %2786 = vmatpush2.bf16.msra.mxu0 %v2480
    %2787 = vmatprep.subr.bf16.mxu0 %v2477
    %2788 = vmatpush2.bf16.msra.mxu0 %v2476
    %2789 = vmatprep.subr.bf16.mxu0 %v2473
    %2790 = vmatpush2.bf16.msra.mxu0 %v2472
    %2791 = vmatprep.mubr.bf16.mxu0 %v1839
    %2792 = vmatmul.mubr.bf16.gmra.mxu0 %v1838
    %v2793 = vpop.f32.mrf.mxu0
    %v2794 = vadd.f32 %v2751, %v2793
    %v2795 = vpop.f32.mrf.mxu0
    %v2796 = vadd.f32 %v2753, %v2795
    %v2797 = vpop.f32.mrf.mxu0
    %v2798 = vadd.f32 %v2755, %v2797
    %v2799 = vpop.f32.mrf.mxu0
    %v2800 = vadd.f32 %v2757, %v2799
    %2801 = vdwg.mxu0
    %v2802 = vmax.f32 %v2708, 0.0
    %v2803 = vmax.f32 %v2710, 0.0
    %v2804 = vmax.f32 %v2794, 0.0
    %v2805 = vmax.f32 %v2796, 0.0
    %v2806 = vmax.f32 %v2712, 0.0
    %v2807 = vmax.f32 %v2714, 0.0
    %v2808 = vmax.f32 %v2798, 0.0
    %v2809 = vmax.f32 %v2800, 0.0
    %v2810 = vpack.c.bf16 %v2806, %v2802
    %v2811 = vpack.c.bf16 %v2807, %v2803
    %v2812 = vpack.c.bf16 %v2808, %v2804
    %v2813 = vpack.c.bf16 %v2809, %v2805
    %v2814 = vld [vmem:[#allocation6] sm:$0xff]
    %v2815 = vld [vmem:[#allocation6 + $0x8] sm:$0xff]
    %v2816 = vld [vmem:[#allocation6 + $0x10] sm:$0xff]
    %v2817 = vld [vmem:[#allocation6 + $0x18] sm:$0xff]
    %v2818 = vld [vmem:[#allocation6 + $0x20] sm:$0xff]
    %v2819 = vld [vmem:[#allocation6 + $0x28] sm:$0xff]
    %v2820 = vld [vmem:[#allocation6 + $0x30] sm:$0xff]
    %v2821 = vld [vmem:[#allocation6 + $0x38] sm:$0xff]
    %v2822 = vld [vmem:[#allocation6 + $0x40] sm:$0xff]
    %v2823 = vld [vmem:[#allocation6 + $0x48] sm:$0xff]
    %v2824 = vld [vmem:[#allocation6 + $0x50] sm:$0xff]
    %v2825 = vld [vmem:[#allocation6 + $0x58] sm:$0xff]
    %v2826 = vld [vmem:[#allocation6 + $0x60] sm:$0xff]
    %v2827 = vld [vmem:[#allocation6 + $0x68] sm:$0xff]
    %v2828 = vld [vmem:[#allocation6 + $0x70] sm:$0xff]
    %v2829 = vld [vmem:[#allocation6 + $0x78] sm:$0xff]
    %v2830 = vld [vmem:[#allocation6 + $0x80] sm:$0xff]
    %v2831 = vld [vmem:[#allocation6 + $0x88] sm:$0xff]
    %v2832 = vld [vmem:[#allocation6 + $0x90] sm:$0xff]
    %v2833 = vld [vmem:[#allocation6 + $0x98] sm:$0xff]
    %v2834 = vld [vmem:[#allocation6 + $0xa0] sm:$0xff]
    %v2835 = vld [vmem:[#allocation6 + $0xa8] sm:$0xff]
    %v2836 = vld [vmem:[#allocation6 + $0xb0] sm:$0xff]
    %v2837 = vld [vmem:[#allocation6 + $0xb8] sm:$0xff]
    %v2838 = vld [vmem:[#allocation6 + $0xc0] sm:$0xff]
    %v2839 = vld [vmem:[#allocation6 + $0xc8] sm:$0xff]
    %v2840 = vld [vmem:[#allocation6 + $0xd0] sm:$0xff]
    %v2841 = vld [vmem:[#allocation6 + $0xd8] sm:$0xff]
    %v2842 = vld [vmem:[#allocation6 + $0xe0] sm:$0xff]
    %v2843 = vld [vmem:[#allocation6 + $0xe8] sm:$0xff]
    %v2844 = vld [vmem:[#allocation6 + $0xf0] sm:$0xff]
    %v2845 = vld [vmem:[#allocation6 + $0xf8] sm:$0xff]
    %v2846 = vld [vmem:[#allocation6 + $0x100] sm:$0xff]
    %v2847 = vld [vmem:[#allocation6 + $0x108] sm:$0xff]
    %v2848 = vld [vmem:[#allocation6 + $0x110] sm:$0xff]
    %v2849 = vld [vmem:[#allocation6 + $0x118] sm:$0xff]
    %v2850 = vld [vmem:[#allocation6 + $0x120] sm:$0xff]
    %v2851 = vld [vmem:[#allocation6 + $0x128] sm:$0xff]
    %v2852 = vld [vmem:[#allocation6 + $0x130] sm:$0xff]
    %v2853 = vld [vmem:[#allocation6 + $0x138] sm:$0xff]
    %v2854 = vld [vmem:[#allocation6 + $0x140] sm:$0xff]
    %v2855 = vld [vmem:[#allocation6 + $0x148] sm:$0xff]
    %v2856 = vld [vmem:[#allocation6 + $0x150] sm:$0xff]
    %v2857 = vld [vmem:[#allocation6 + $0x158] sm:$0xff]
    %v2858 = vld [vmem:[#allocation6 + $0x160] sm:$0xff]
    %v2859 = vld [vmem:[#allocation6 + $0x168] sm:$0xff]
    %v2860 = vld [vmem:[#allocation6 + $0x170] sm:$0xff]
    %v2861 = vld [vmem:[#allocation6 + $0x178] sm:$0xff]
    %v2862 = vld [vmem:[#allocation6 + $0x180] sm:$0xff]
    %v2863 = vld [vmem:[#allocation6 + $0x188] sm:$0xff]
    %v2864 = vld [vmem:[#allocation6 + $0x190] sm:$0xff]
    %v2865 = vld [vmem:[#allocation6 + $0x198] sm:$0xff]
    %v2866 = vld [vmem:[#allocation6 + $0x1a0] sm:$0xff]
    %v2867 = vld [vmem:[#allocation6 + $0x1a8] sm:$0xff]
    %v2868 = vld [vmem:[#allocation6 + $0x1b0] sm:$0xff]
    %v2869 = vld [vmem:[#allocation6 + $0x1b8] sm:$0xff]
    %v2870 = vld [vmem:[#allocation6 + $0x1c0] sm:$0xff]
    %v2871 = vld [vmem:[#allocation6 + $0x1c8] sm:$0xff]
    %v2872 = vld [vmem:[#allocation6 + $0x1d0] sm:$0xff]
    %v2873 = vld [vmem:[#allocation6 + $0x1d8] sm:$0xff]
    %v2874 = vld [vmem:[#allocation6 + $0x1e0] sm:$0xff]
    %v2875 = vld [vmem:[#allocation6 + $0x1e8] sm:$0xff]
    %v2876 = vld [vmem:[#allocation6 + $0x1f0] sm:$0xff]
    %v2877 = vld [vmem:[#allocation6 + $0x1f8] sm:$0xff]
    %v2878 = vld [vmem:[#allocation6 + $0x200] sm:$0xff]
    %v2879 = vld [vmem:[#allocation6 + $0x208] sm:$0xff]
    %v2880 = vld [vmem:[#allocation6 + $0x210] sm:$0xff]
    %v2881 = vld [vmem:[#allocation6 + $0x218] sm:$0xff]
    %v2882 = vld [vmem:[#allocation6 + $0x220] sm:$0xff]
    %v2883 = vld [vmem:[#allocation6 + $0x228] sm:$0xff]
    %v2884 = vld [vmem:[#allocation6 + $0x230] sm:$0xff]
    %v2885 = vld [vmem:[#allocation6 + $0x238] sm:$0xff]
    %v2886 = vld [vmem:[#allocation6 + $0x240] sm:$0xff]
    %v2887 = vld [vmem:[#allocation6 + $0x248] sm:$0xff]
    %v2888 = vld [vmem:[#allocation6 + $0x250] sm:$0xff]
    %v2889 = vld [vmem:[#allocation6 + $0x258] sm:$0xff]
    %v2890 = vld [vmem:[#allocation6 + $0x260] sm:$0xff]
    %v2891 = vld [vmem:[#allocation6 + $0x268] sm:$0xff]
    %v2892 = vld [vmem:[#allocation6 + $0x270] sm:$0xff]
    %v2893 = vld [vmem:[#allocation6 + $0x278] sm:$0xff]
    %v2894 = vld [vmem:[#allocation6 + $0x280] sm:$0xff]
    %v2895 = vld [vmem:[#allocation6 + $0x288] sm:$0xff]
    %v2896 = vld [vmem:[#allocation6 + $0x290] sm:$0xff]
    %v2897 = vld [vmem:[#allocation6 + $0x298] sm:$0xff]
    %v2898 = vld [vmem:[#allocation6 + $0x2a0] sm:$0xff]
    %v2899 = vld [vmem:[#allocation6 + $0x2a8] sm:$0xff]
    %v2900 = vld [vmem:[#allocation6 + $0x2b0] sm:$0xff]
    %v2901 = vld [vmem:[#allocation6 + $0x2b8] sm:$0xff]
    %v2902 = vld [vmem:[#allocation6 + $0x2c0] sm:$0xff]
    %v2903 = vld [vmem:[#allocation6 + $0x2c8] sm:$0xff]
    %v2904 = vld [vmem:[#allocation6 + $0x2d0] sm:$0xff]
    %v2905 = vld [vmem:[#allocation6 + $0x2d8] sm:$0xff]
    %v2906 = vld [vmem:[#allocation6 + $0x2e0] sm:$0xff]
    %v2907 = vld [vmem:[#allocation6 + $0x2e8] sm:$0xff]
    %v2908 = vld [vmem:[#allocation6 + $0x2f0] sm:$0xff]
    %v2909 = vld [vmem:[#allocation6 + $0x2f8] sm:$0xff]
    %v2910 = vld [vmem:[#allocation6 + $0x300] sm:$0xff]
    %v2911 = vld [vmem:[#allocation6 + $0x308] sm:$0xff]
    %v2912 = vld [vmem:[#allocation6 + $0x310] sm:$0xff]
    %v2913 = vld [vmem:[#allocation6 + $0x318] sm:$0xff]
    %v2914 = vld [vmem:[#allocation6 + $0x320] sm:$0xff]
    %v2915 = vld [vmem:[#allocation6 + $0x328] sm:$0xff]
    %v2916 = vld [vmem:[#allocation6 + $0x330] sm:$0xff]
    %v2917 = vld [vmem:[#allocation6 + $0x338] sm:$0xff]
    %v2918 = vld [vmem:[#allocation6 + $0x340] sm:$0xff]
    %v2919 = vld [vmem:[#allocation6 + $0x348] sm:$0xff]
    %v2920 = vld [vmem:[#allocation6 + $0x350] sm:$0xff]
    %v2921 = vld [vmem:[#allocation6 + $0x358] sm:$0xff]
    %v2922 = vld [vmem:[#allocation6 + $0x360] sm:$0xff]
    %v2923 = vld [vmem:[#allocation6 + $0x368] sm:$0xff]
    %v2924 = vld [vmem:[#allocation6 + $0x370] sm:$0xff]
    %v2925 = vld [vmem:[#allocation6 + $0x378] sm:$0xff]
    %v2926 = vld [vmem:[#allocation6 + $0x380] sm:$0xff]
    %v2927 = vld [vmem:[#allocation6 + $0x388] sm:$0xff]
    %v2928 = vld [vmem:[#allocation6 + $0x390] sm:$0xff]
    %v2929 = vld [vmem:[#allocation6 + $0x398] sm:$0xff]
    %v2930 = vld [vmem:[#allocation6 + $0x3a0] sm:$0xff]
    %v2931 = vld [vmem:[#allocation6 + $0x3a8] sm:$0xff]
    %v2932 = vld [vmem:[#allocation6 + $0x3b0] sm:$0xff]
    %v2933 = vld [vmem:[#allocation6 + $0x3b8] sm:$0xff]
    %v2934 = vld [vmem:[#allocation6 + $0x3c0] sm:$0xff]
    %v2935 = vld [vmem:[#allocation6 + $0x3c8] sm:$0xff]
    %v2936 = vld [vmem:[#allocation6 + $0x3d0] sm:$0xff]
    %v2937 = vld [vmem:[#allocation6 + $0x3d8] sm:$0xff]
    %v2938 = vld [vmem:[#allocation6 + $0x3e0] sm:$0xff]
    %v2939 = vld [vmem:[#allocation6 + $0x3e8] sm:$0xff]
    %v2940 = vld [vmem:[#allocation6 + $0x3f0] sm:$0xff]
    %v2941 = vld [vmem:[#allocation6 + $0x3f8] sm:$0xff]
    %v2942 = vld [vmem:[%s6] sm:$0xf]
    %v2944 = vlaneseq
    %v2945 = vshrl.u32 %v2944, 7
    %v2946 = vsub.s32 0, %v2945
    %v2947 = vrot.slane %v2942, %v2946
    %v2948 = vlaneseq
    %v2949 = vshrl.u32 %v2948, 7
    %v2950 = vsub.s32 1, %v2949
    %v2951 = vrot.slane %v2942, %v2950
    %v2952 = vlaneseq
    %v2953 = vshrl.u32 %v2952, 7
    %v2954 = vsub.s32 2, %v2953
    %v2955 = vrot.slane %v2942, %v2954
    %v2956 = vlaneseq
    %v2957 = vshrl.u32 %v2956, 7
    %v2958 = vsub.s32 3, %v2957
    %v2959 = vrot.slane %v2942, %v2958
    %v3092 = vunpack.c.l.b16 %v2814
    %v3093 = vunpack.c.h.b16 %v2814
    %v3094 = vunpack.c.l.b16 %v2815
    %v3095 = vunpack.c.h.b16 %v2815
    %v3096 = vunpack.c.l.b16 %v2816
    %v3097 = vunpack.c.h.b16 %v2816
    %v3098 = vunpack.c.l.b16 %v2817
    %v3099 = vunpack.c.h.b16 %v2817
    %v3100 = vunpack.c.l.b16 %v2818
    %v3101 = vunpack.c.h.b16 %v2818
    %v3102 = vunpack.c.l.b16 %v2819
    %v3103 = vunpack.c.h.b16 %v2819
    %v3104 = vunpack.c.l.b16 %v2820
    %v3105 = vunpack.c.h.b16 %v2820
    %v3106 = vunpack.c.l.b16 %v2821
    %v3107 = vunpack.c.h.b16 %v2821
    %v3108 = vunpack.c.l.b16 %v2822
    %v3109 = vunpack.c.h.b16 %v2822
    %v3110 = vunpack.c.l.b16 %v2823
    %v3111 = vunpack.c.h.b16 %v2823
    %v3112 = vunpack.c.l.b16 %v2824
    %v3113 = vunpack.c.h.b16 %v2824
    %v3114 = vunpack.c.l.b16 %v2825
    %v3115 = vunpack.c.h.b16 %v2825
    %v3116 = vunpack.c.l.b16 %v2826
    %v3117 = vunpack.c.h.b16 %v2826
    %v3118 = vunpack.c.l.b16 %v2827
    %v3119 = vunpack.c.h.b16 %v2827
    %v3120 = vunpack.c.l.b16 %v2828
    %v3121 = vunpack.c.h.b16 %v2828
    %v3122 = vunpack.c.l.b16 %v2829
    %v3123 = vunpack.c.h.b16 %v2829
    %v3124 = vunpack.c.l.b16 %v2830
    %v3125 = vunpack.c.h.b16 %v2830
    %v3126 = vunpack.c.l.b16 %v2831
    %v3127 = vunpack.c.h.b16 %v2831
    %v3128 = vunpack.c.l.b16 %v2832
    %v3129 = vunpack.c.h.b16 %v2832
    %v3130 = vunpack.c.l.b16 %v2833
    %v3131 = vunpack.c.h.b16 %v2833
    %v3132 = vunpack.c.l.b16 %v2834
    %v3133 = vunpack.c.h.b16 %v2834
    %v3134 = vunpack.c.l.b16 %v2835
    %v3135 = vunpack.c.h.b16 %v2835
    %v3136 = vunpack.c.l.b16 %v2836
    %v3137 = vunpack.c.h.b16 %v2836
    %v3138 = vunpack.c.l.b16 %v2837
    %v3139 = vunpack.c.h.b16 %v2837
    %v3140 = vunpack.c.l.b16 %v2838
    %v3141 = vunpack.c.h.b16 %v2838
    %v3142 = vunpack.c.l.b16 %v2839
    %v3143 = vunpack.c.h.b16 %v2839
    %v3144 = vunpack.c.l.b16 %v2840
    %v3145 = vunpack.c.h.b16 %v2840
    %v3146 = vunpack.c.l.b16 %v2841
    %v3147 = vunpack.c.h.b16 %v2841
    %v3148 = vunpack.c.l.b16 %v2842
    %v3149 = vunpack.c.h.b16 %v2842
    %v3150 = vunpack.c.l.b16 %v2843
    %v3151 = vunpack.c.h.b16 %v2843
    %v3152 = vunpack.c.l.b16 %v2844
    %v3153 = vunpack.c.h.b16 %v2844
    %v3154 = vunpack.c.l.b16 %v2845
    %v3155 = vunpack.c.h.b16 %v2845
    %v3156 = vunpack.c.l.b16 %v2846
    %v3157 = vunpack.c.h.b16 %v2846
    %v3158 = vunpack.c.l.b16 %v2847
    %v3159 = vunpack.c.h.b16 %v2847
    %v3160 = vunpack.c.l.b16 %v2848
    %v3161 = vunpack.c.h.b16 %v2848
    %v3162 = vunpack.c.l.b16 %v2849
    %v3163 = vunpack.c.h.b16 %v2849
    %v3164 = vunpack.c.l.b16 %v2850
    %v3165 = vunpack.c.h.b16 %v2850
    %v3166 = vunpack.c.l.b16 %v2851
    %v3167 = vunpack.c.h.b16 %v2851
    %v3168 = vunpack.c.l.b16 %v2852
    %v3169 = vunpack.c.h.b16 %v2852
    %v3170 = vunpack.c.l.b16 %v2853
    %v3171 = vunpack.c.h.b16 %v2853
    %v3172 = vunpack.c.l.b16 %v2854
    %v3173 = vunpack.c.h.b16 %v2854
    %v3174 = vunpack.c.l.b16 %v2855
    %v3175 = vunpack.c.h.b16 %v2855
    %v3176 = vunpack.c.l.b16 %v2856
    %v3177 = vunpack.c.h.b16 %v2856
    %v3178 = vunpack.c.l.b16 %v2857
    %v3179 = vunpack.c.h.b16 %v2857
    %v3180 = vunpack.c.l.b16 %v2858
    %v3181 = vunpack.c.h.b16 %v2858
    %v3182 = vunpack.c.l.b16 %v2859
    %v3183 = vunpack.c.h.b16 %v2859
    %v3184 = vunpack.c.l.b16 %v2860
    %v3185 = vunpack.c.h.b16 %v2860
    %v3186 = vunpack.c.l.b16 %v2861
    %v3187 = vunpack.c.h.b16 %v2861
    %v3188 = vunpack.c.l.b16 %v2862
    %v3189 = vunpack.c.h.b16 %v2862
    %v3190 = vunpack.c.l.b16 %v2863
    %v3191 = vunpack.c.h.b16 %v2863
    %v3192 = vunpack.c.l.b16 %v2864
    %v3193 = vunpack.c.h.b16 %v2864
    %v3194 = vunpack.c.l.b16 %v2865
    %v3195 = vunpack.c.h.b16 %v2865
    %v3196 = vunpack.c.l.b16 %v2866
    %v3197 = vunpack.c.h.b16 %v2866
    %v3198 = vunpack.c.l.b16 %v2867
    %v3199 = vunpack.c.h.b16 %v2867
    %v3200 = vunpack.c.l.b16 %v2868
    %v3201 = vunpack.c.h.b16 %v2868
    %v3202 = vunpack.c.l.b16 %v2869
    %v3203 = vunpack.c.h.b16 %v2869
    %v3204 = vunpack.c.l.b16 %v2870
    %v3205 = vunpack.c.h.b16 %v2870
    %v3206 = vunpack.c.l.b16 %v2871
    %v3207 = vunpack.c.h.b16 %v2871
    %v3208 = vunpack.c.l.b16 %v2872
    %v3209 = vunpack.c.h.b16 %v2872
    %v3210 = vunpack.c.l.b16 %v2873
    %v3211 = vunpack.c.h.b16 %v2873
    %v3212 = vunpack.c.l.b16 %v2874
    %v3213 = vunpack.c.h.b16 %v2874
    %v3214 = vunpack.c.l.b16 %v2875
    %v3215 = vunpack.c.h.b16 %v2875
    %v3216 = vunpack.c.l.b16 %v2876
    %v3217 = vunpack.c.h.b16 %v2876
    %v3218 = vunpack.c.l.b16 %v2877
    %v3219 = vunpack.c.h.b16 %v2877
    %v3220 = vunpack.c.l.b16 %v2878
    %v3221 = vunpack.c.h.b16 %v2878
    %v3222 = vunpack.c.l.b16 %v2879
    %v3223 = vunpack.c.h.b16 %v2879
    %v3224 = vunpack.c.l.b16 %v2880
    %v3225 = vunpack.c.h.b16 %v2880
    %v3226 = vunpack.c.l.b16 %v2881
    %v3227 = vunpack.c.h.b16 %v2881
    %v3228 = vunpack.c.l.b16 %v2882
    %v3229 = vunpack.c.h.b16 %v2882
    %v3230 = vunpack.c.l.b16 %v2883
    %v3231 = vunpack.c.h.b16 %v2883
    %v3232 = vunpack.c.l.b16 %v2884
    %v3233 = vunpack.c.h.b16 %v2884
    %v3234 = vunpack.c.l.b16 %v2885
    %v3235 = vunpack.c.h.b16 %v2885
    %v3236 = vunpack.c.l.b16 %v2886
    %v3237 = vunpack.c.h.b16 %v2886
    %v3238 = vunpack.c.l.b16 %v2887
    %v3239 = vunpack.c.h.b16 %v2887
    %v3240 = vunpack.c.l.b16 %v2888
    %v3241 = vunpack.c.h.b16 %v2888
    %v3242 = vunpack.c.l.b16 %v2889
    %v3243 = vunpack.c.h.b16 %v2889
    %v3244 = vunpack.c.l.b16 %v2890
    %v3245 = vunpack.c.h.b16 %v2890
    %v3246 = vunpack.c.l.b16 %v2891
    %v3247 = vunpack.c.h.b16 %v2891
    %v3248 = vunpack.c.l.b16 %v2892
    %v3249 = vunpack.c.h.b16 %v2892
    %v3250 = vunpack.c.l.b16 %v2893
    %v3251 = vunpack.c.h.b16 %v2893
    %v3252 = vunpack.c.l.b16 %v2894
    %v3253 = vunpack.c.h.b16 %v2894
    %v3254 = vunpack.c.l.b16 %v2895
    %v3255 = vunpack.c.h.b16 %v2895
    %v3256 = vunpack.c.l.b16 %v2896
    %v3257 = vunpack.c.h.b16 %v2896
    %v3258 = vunpack.c.l.b16 %v2897
    %v3259 = vunpack.c.h.b16 %v2897
    %v3260 = vunpack.c.l.b16 %v2898
    %v3261 = vunpack.c.h.b16 %v2898
    %v3262 = vunpack.c.l.b16 %v2899
    %v3263 = vunpack.c.h.b16 %v2899
    %v3264 = vunpack.c.l.b16 %v2900
    %v3265 = vunpack.c.h.b16 %v2900
    %v3266 = vunpack.c.l.b16 %v2901
    %v3267 = vunpack.c.h.b16 %v2901
    %v3268 = vunpack.c.l.b16 %v2902
    %v3269 = vunpack.c.h.b16 %v2902
    %v3270 = vunpack.c.l.b16 %v2903
    %v3271 = vunpack.c.h.b16 %v2903
    %v3272 = vunpack.c.l.b16 %v2904
    %v3273 = vunpack.c.h.b16 %v2904
    %v3274 = vunpack.c.l.b16 %v2905
    %v3275 = vunpack.c.h.b16 %v2905
    %v3276 = vunpack.c.l.b16 %v2906
    %v3277 = vunpack.c.h.b16 %v2906
    %v3278 = vunpack.c.l.b16 %v2907
    %v3279 = vunpack.c.h.b16 %v2907
    %v3280 = vunpack.c.l.b16 %v2908
    %v3281 = vunpack.c.h.b16 %v2908
    %v3282 = vunpack.c.l.b16 %v2909
    %v3283 = vunpack.c.h.b16 %v2909
    %v3284 = vunpack.c.l.b16 %v2910
    %v3285 = vunpack.c.h.b16 %v2910
    %v3286 = vunpack.c.l.b16 %v2911
    %v3287 = vunpack.c.h.b16 %v2911
    %v3288 = vunpack.c.l.b16 %v2912
    %v3289 = vunpack.c.h.b16 %v2912
    %v3290 = vunpack.c.l.b16 %v2913
    %v3291 = vunpack.c.h.b16 %v2913
    %v3292 = vunpack.c.l.b16 %v2914
    %v3293 = vunpack.c.h.b16 %v2914
    %v3294 = vunpack.c.l.b16 %v2915
    %v3295 = vunpack.c.h.b16 %v2915
    %v3296 = vunpack.c.l.b16 %v2916
    %v3297 = vunpack.c.h.b16 %v2916
    %v3298 = vunpack.c.l.b16 %v2917
    %v3299 = vunpack.c.h.b16 %v2917
    %v3300 = vunpack.c.l.b16 %v2918
    %v3301 = vunpack.c.h.b16 %v2918
    %v3302 = vunpack.c.l.b16 %v2919
    %v3303 = vunpack.c.h.b16 %v2919
    %v3304 = vunpack.c.l.b16 %v2920
    %v3305 = vunpack.c.h.b16 %v2920
    %v3306 = vunpack.c.l.b16 %v2921
    %v3307 = vunpack.c.h.b16 %v2921
    %v3308 = vunpack.c.l.b16 %v2922
    %v3309 = vunpack.c.h.b16 %v2922
    %v3310 = vunpack.c.l.b16 %v2923
    %v3311 = vunpack.c.h.b16 %v2923
    %v3312 = vunpack.c.l.b16 %v2924
    %v3313 = vunpack.c.h.b16 %v2924
    %v3314 = vunpack.c.l.b16 %v2925
    %v3315 = vunpack.c.h.b16 %v2925
    %v3316 = vunpack.c.l.b16 %v2926
    %v3317 = vunpack.c.h.b16 %v2926
    %v3318 = vunpack.c.l.b16 %v2927
    %v3319 = vunpack.c.h.b16 %v2927
    %v3320 = vunpack.c.l.b16 %v2928
    %v3321 = vunpack.c.h.b16 %v2928
    %v3322 = vunpack.c.l.b16 %v2929
    %v3323 = vunpack.c.h.b16 %v2929
    %v3324 = vunpack.c.l.b16 %v2930
    %v3325 = vunpack.c.h.b16 %v2930
    %v3326 = vunpack.c.l.b16 %v2931
    %v3327 = vunpack.c.h.b16 %v2931
    %v3328 = vunpack.c.l.b16 %v2932
    %v3329 = vunpack.c.h.b16 %v2932
    %v3330 = vunpack.c.l.b16 %v2933
    %v3331 = vunpack.c.h.b16 %v2933
    %v3332 = vunpack.c.l.b16 %v2934
    %v3333 = vunpack.c.h.b16 %v2934
    %v3334 = vunpack.c.l.b16 %v2935
    %v3335 = vunpack.c.h.b16 %v2935
    %v3336 = vunpack.c.l.b16 %v2936
    %v3337 = vunpack.c.h.b16 %v2936
    %v3338 = vunpack.c.l.b16 %v2937
    %v3339 = vunpack.c.h.b16 %v2937
    %v3340 = vunpack.c.l.b16 %v2938
    %v3341 = vunpack.c.h.b16 %v2938
    %v3342 = vunpack.c.l.b16 %v2939
    %v3343 = vunpack.c.h.b16 %v2939
    %v3344 = vunpack.c.l.b16 %v2940
    %v3345 = vunpack.c.h.b16 %v2940
    %v3346 = vunpack.c.l.b16 %v2941
    %v3347 = vunpack.c.h.b16 %v2941
    %v3348 = vpack.c.b16 %v3096, %v3092
    %v3349 = vpack.c.b16 %v3097, %v3093
    %v3350 = vpack.c.b16 %v3098, %v3094
    %v3351 = vpack.c.b16 %v3099, %v3095
    %v3352 = vpack.c.b16 %v3104, %v3100
    %v3353 = vpack.c.b16 %v3105, %v3101
    %v3354 = vpack.c.b16 %v3106, %v3102
    %v3355 = vpack.c.b16 %v3107, %v3103
    %v3356 = vpack.c.b16 %v3112, %v3108
    %v3357 = vpack.c.b16 %v3113, %v3109
    %v3358 = vpack.c.b16 %v3114, %v3110
    %v3359 = vpack.c.b16 %v3115, %v3111
    %v3360 = vpack.c.b16 %v3120, %v3116
    %v3361 = vpack.c.b16 %v3121, %v3117
    %v3362 = vpack.c.b16 %v3122, %v3118
    %v3363 = vpack.c.b16 %v3123, %v3119
    %v3364 = vpack.c.b16 %v3128, %v3124
    %v3365 = vpack.c.b16 %v3129, %v3125
    %v3366 = vpack.c.b16 %v3130, %v3126
    %v3367 = vpack.c.b16 %v3131, %v3127
    %v3368 = vpack.c.b16 %v3136, %v3132
    %v3369 = vpack.c.b16 %v3137, %v3133
    %v3370 = vpack.c.b16 %v3138, %v3134
    %v3371 = vpack.c.b16 %v3139, %v3135
    %v3372 = vpack.c.b16 %v3144, %v3140
    %v3373 = vpack.c.b16 %v3145, %v3141
    %v3374 = vpack.c.b16 %v3146, %v3142
    %v3375 = vpack.c.b16 %v3147, %v3143
    %v3376 = vpack.c.b16 %v3152, %v3148
    %v3377 = vpack.c.b16 %v3153, %v3149
    %v3378 = vpack.c.b16 %v3154, %v3150
    %v3379 = vpack.c.b16 %v3155, %v3151
    %v3380 = vpack.c.b16 %v3160, %v3156
    %v3381 = vpack.c.b16 %v3161, %v3157
    %v3382 = vpack.c.b16 %v3162, %v3158
    %v3383 = vpack.c.b16 %v3163, %v3159
    %v3384 = vpack.c.b16 %v3168, %v3164
    %v3385 = vpack.c.b16 %v3169, %v3165
    %v3386 = vpack.c.b16 %v3170, %v3166
    %v3387 = vpack.c.b16 %v3171, %v3167
    %v3388 = vpack.c.b16 %v3176, %v3172
    %v3389 = vpack.c.b16 %v3177, %v3173
    %v3390 = vpack.c.b16 %v3178, %v3174
    %v3391 = vpack.c.b16 %v3179, %v3175
    %v3392 = vpack.c.b16 %v3184, %v3180
    %v3393 = vpack.c.b16 %v3185, %v3181
    %v3394 = vpack.c.b16 %v3186, %v3182
    %v3395 = vpack.c.b16 %v3187, %v3183
    %v3396 = vpack.c.b16 %v3192, %v3188
    %v3397 = vpack.c.b16 %v3193, %v3189
    %v3398 = vpack.c.b16 %v3194, %v3190
    %v3399 = vpack.c.b16 %v3195, %v3191
    %v3400 = vpack.c.b16 %v3200, %v3196
    %v3401 = vpack.c.b16 %v3201, %v3197
    %v3402 = vpack.c.b16 %v3202, %v3198
    %v3403 = vpack.c.b16 %v3203, %v3199
    %v3404 = vpack.c.b16 %v3208, %v3204
    %v3405 = vpack.c.b16 %v3209, %v3205
    %v3406 = vpack.c.b16 %v3210, %v3206
    %v3407 = vpack.c.b16 %v3211, %v3207
    %v3408 = vpack.c.b16 %v3216, %v3212
    %v3409 = vpack.c.b16 %v3217, %v3213
    %v3410 = vpack.c.b16 %v3218, %v3214
    %v3411 = vpack.c.b16 %v3219, %v3215
    %v3412 = vpack.c.b16 %v3224, %v3220
    %v3413 = vpack.c.b16 %v3225, %v3221
    %v3414 = vpack.c.b16 %v3226, %v3222
    %v3415 = vpack.c.b16 %v3227, %v3223
    %v3416 = vpack.c.b16 %v3232, %v3228
    %v3417 = vpack.c.b16 %v3233, %v3229
    %v3418 = vpack.c.b16 %v3234, %v3230
    %v3419 = vpack.c.b16 %v3235, %v3231
    %v3420 = vpack.c.b16 %v3240, %v3236
    %v3421 = vpack.c.b16 %v3241, %v3237
    %v3422 = vpack.c.b16 %v3242, %v3238
    %v3423 = vpack.c.b16 %v3243, %v3239
    %v3424 = vpack.c.b16 %v3248, %v3244
    %v3425 = vpack.c.b16 %v3249, %v3245
    %v3426 = vpack.c.b16 %v3250, %v3246
    %v3427 = vpack.c.b16 %v3251, %v3247
    %v3428 = vpack.c.b16 %v3256, %v3252
    %v3429 = vpack.c.b16 %v3257, %v3253
    %v3430 = vpack.c.b16 %v3258, %v3254
    %v3431 = vpack.c.b16 %v3259, %v3255
    %v3432 = vpack.c.b16 %v3264, %v3260
    %v3433 = vpack.c.b16 %v3265, %v3261
    %v3434 = vpack.c.b16 %v3266, %v3262
    %v3435 = vpack.c.b16 %v3267, %v3263
    %v3436 = vpack.c.b16 %v3272, %v3268
    %v3437 = vpack.c.b16 %v3273, %v3269
    %v3438 = vpack.c.b16 %v3274, %v3270
    %v3439 = vpack.c.b16 %v3275, %v3271
    %v3440 = vpack.c.b16 %v3280, %v3276
    %v3441 = vpack.c.b16 %v3281, %v3277
    %v3442 = vpack.c.b16 %v3282, %v3278
    %v3443 = vpack.c.b16 %v3283, %v3279
    %v3444 = vpack.c.b16 %v3288, %v3284
    %v3445 = vpack.c.b16 %v3289, %v3285
    %v3446 = vpack.c.b16 %v3290, %v3286
    %v3447 = vpack.c.b16 %v3291, %v3287
    %v3448 = vpack.c.b16 %v3296, %v3292
    %v3449 = vpack.c.b16 %v3297, %v3293
    %v3450 = vpack.c.b16 %v3298, %v3294
    %v3451 = vpack.c.b16 %v3299, %v3295
    %v3452 = vpack.c.b16 %v3304, %v3300
    %v3453 = vpack.c.b16 %v3305, %v3301
    %v3454 = vpack.c.b16 %v3306, %v3302
    %v3455 = vpack.c.b16 %v3307, %v3303
    %v3456 = vpack.c.b16 %v3312, %v3308
    %v3457 = vpack.c.b16 %v3313, %v3309
    %v3458 = vpack.c.b16 %v3314, %v3310
    %v3459 = vpack.c.b16 %v3315, %v3311
    %v3460 = vpack.c.b16 %v3320, %v3316
    %v3461 = vpack.c.b16 %v3321, %v3317
    %v3462 = vpack.c.b16 %v3322, %v3318
    %v3463 = vpack.c.b16 %v3323, %v3319
    %v3464 = vpack.c.b16 %v3328, %v3324
    %v3465 = vpack.c.b16 %v3329, %v3325
    %v3466 = vpack.c.b16 %v3330, %v3326
    %v3467 = vpack.c.b16 %v3331, %v3327
    %v3468 = vpack.c.b16 %v3336, %v3332
    %v3469 = vpack.c.b16 %v3337, %v3333
    %v3470 = vpack.c.b16 %v3338, %v3334
    %v3471 = vpack.c.b16 %v3339, %v3335
    %v3472 = vpack.c.b16 %v3344, %v3340
    %v3473 = vpack.c.b16 %v3345, %v3341
    %v3474 = vpack.c.b16 %v3346, %v3342
    %v3475 = vpack.c.b16 %v3347, %v3343
    %3604 = vmatprep.subr.bf16.mxu0 %v3377
    %3605 = vmatpush1.bf16.msra.mxu0 %v3376
    %3606 = vmatprep.subr.bf16.mxu0 %v3373
    %3607 = vmatpush1.bf16.msra.mxu0 %v3372
    %3608 = vmatprep.subr.bf16.mxu0 %v3369
    %3609 = vmatpush1.bf16.msra.mxu0 %v3368
    %3610 = vmatprep.subr.bf16.mxu0 %v3365
    %3611 = vmatpush1.bf16.msra.mxu0 %v3364
    %3612 = vmatprep.subr.bf16.mxu0 %v3361
    %3613 = vmatpush1.bf16.msra.mxu0 %v3360
    %3614 = vmatprep.subr.bf16.mxu0 %v3357
    %3615 = vmatpush1.bf16.msra.mxu0 %v3356
    %3616 = vmatprep.subr.bf16.mxu0 %v3353
    %3617 = vmatpush1.bf16.msra.mxu0 %v3352
    %3618 = vmatprep.subr.bf16.mxu0 %v3349
    %3619 = vmatpush1.bf16.msra.mxu0 %v3348
    %3620 = vmatprep.subr.bf16.mxu0 %v3409
    %3621 = vmatpush2.bf16.msra.mxu0 %v3408
    %3622 = vmatprep.subr.bf16.mxu0 %v3405
    %3623 = vmatpush2.bf16.msra.mxu0 %v3404
    %3624 = vmatprep.subr.bf16.mxu0 %v3401
    %3625 = vmatpush2.bf16.msra.mxu0 %v3400
    %3626 = vmatprep.subr.bf16.mxu0 %v3397
    %3627 = vmatpush2.bf16.msra.mxu0 %v3396
    %3628 = vmatprep.subr.bf16.mxu0 %v3393
    %3629 = vmatpush2.bf16.msra.mxu0 %v3392
    %3630 = vmatprep.subr.bf16.mxu0 %v3389
    %3631 = vmatpush2.bf16.msra.mxu0 %v3388
    %3632 = vmatprep.subr.bf16.mxu0 %v3385
    %3633 = vmatpush2.bf16.msra.mxu0 %v3384
    %3634 = vmatprep.subr.bf16.mxu0 %v3381
    %3635 = vmatpush2.bf16.msra.mxu0 %v3380
    %3636 = vmatprep.mubr.bf16.mxu0 %v2811
    %3637 = vmatmul.mubr.bf16.gmra.mxu0 %v2810
    %v3638 = vpop.f32.mrf.mxu0
    %v3639 = vadd.f32 %v2947, %v3638
    %v3640 = vpop.f32.mrf.mxu0
    %v3641 = vadd.f32 %v2951, %v3640
    %v3642 = vpop.f32.mrf.mxu0
    %v3643 = vadd.f32 %v2947, %v3642
    %v3644 = vpop.f32.mrf.mxu0
    %v3645 = vadd.f32 %v2951, %v3644
    %3646 = vdwg.mxu0
    %3647 = vmatprep.subr.bf16.mxu0 %v3441
    %3648 = vmatpush1.bf16.msra.mxu0 %v3440
    %3649 = vmatprep.subr.bf16.mxu0 %v3437
    %3650 = vmatpush1.bf16.msra.mxu0 %v3436
    %3651 = vmatprep.subr.bf16.mxu0 %v3433
    %3652 = vmatpush1.bf16.msra.mxu0 %v3432
    %3653 = vmatprep.subr.bf16.mxu0 %v3429
    %3654 = vmatpush1.bf16.msra.mxu0 %v3428
    %3655 = vmatprep.subr.bf16.mxu0 %v3425
    %3656 = vmatpush1.bf16.msra.mxu0 %v3424
    %3657 = vmatprep.subr.bf16.mxu0 %v3421
    %3658 = vmatpush1.bf16.msra.mxu0 %v3420
    %3659 = vmatprep.subr.bf16.mxu0 %v3417
    %3660 = vmatpush1.bf16.msra.mxu0 %v3416
    %3661 = vmatprep.subr.bf16.mxu0 %v3413
    %3662 = vmatpush1.bf16.msra.mxu0 %v3412
    %3663 = vmatprep.subr.bf16.mxu0 %v3473
    %3664 = vmatpush2.bf16.msra.mxu0 %v3472
    %3665 = vmatprep.subr.bf16.mxu0 %v3469
    %3666 = vmatpush2.bf16.msra.mxu0 %v3468
    %3667 = vmatprep.subr.bf16.mxu0 %v3465
    %3668 = vmatpush2.bf16.msra.mxu0 %v3464
    %3669 = vmatprep.subr.bf16.mxu0 %v3461
    %3670 = vmatpush2.bf16.msra.mxu0 %v3460
    %3671 = vmatprep.subr.bf16.mxu0 %v3457
    %3672 = vmatpush2.bf16.msra.mxu0 %v3456
    %3673 = vmatprep.subr.bf16.mxu0 %v3453
    %3674 = vmatpush2.bf16.msra.mxu0 %v3452
    %3675 = vmatprep.subr.bf16.mxu0 %v3449
    %3676 = vmatpush2.bf16.msra.mxu0 %v3448
    %3677 = vmatprep.subr.bf16.mxu0 %v3445
    %3678 = vmatpush2.bf16.msra.mxu0 %v3444
    %3679 = vmatprep.mubr.bf16.mxu0 %v2813
    %3680 = vmatmul.mubr.bf16.gmra.mxu0 %v2812
    %v3681 = vpop.f32.mrf.mxu0
    %v3682 = vadd.f32 %v3639, %v3681
    %v3683 = vpop.f32.mrf.mxu0
    %v3684 = vadd.f32 %v3641, %v3683
    %v3685 = vpop.f32.mrf.mxu0
    %v3686 = vadd.f32 %v3643, %v3685
    %v3687 = vpop.f32.mrf.mxu0
    %v3688 = vadd.f32 %v3645, %v3687
    %3689 = vdwg.mxu0
    %3690 = vmatprep.subr.bf16.mxu0 %v3379
    %3691 = vmatpush1.bf16.msra.mxu0 %v3378
    %3692 = vmatprep.subr.bf16.mxu0 %v3375
    %3693 = vmatpush1.bf16.msra.mxu0 %v3374
    %3694 = vmatprep.subr.bf16.mxu0 %v3371
    %3695 = vmatpush1.bf16.msra.mxu0 %v3370
    %3696 = vmatprep.subr.bf16.mxu0 %v3367
    %3697 = vmatpush1.bf16.msra.mxu0 %v3366
    %3698 = vmatprep.subr.bf16.mxu0 %v3363
    %3699 = vmatpush1.bf16.msra.mxu0 %v3362
    %3700 = vmatprep.subr.bf16.mxu0 %v3359
    %3701 = vmatpush1.bf16.msra.mxu0 %v3358
    %3702 = vmatprep.subr.bf16.mxu0 %v3355
    %3703 = vmatpush1.bf16.msra.mxu0 %v3354
    %3704 = vmatprep.subr.bf16.mxu0 %v3351
    %3705 = vmatpush1.bf16.msra.mxu0 %v3350
    %3706 = vmatprep.subr.bf16.mxu0 %v3411
    %3707 = vmatpush2.bf16.msra.mxu0 %v3410
    %3708 = vmatprep.subr.bf16.mxu0 %v3407
    %3709 = vmatpush2.bf16.msra.mxu0 %v3406
    %3710 = vmatprep.subr.bf16.mxu0 %v3403
    %3711 = vmatpush2.bf16.msra.mxu0 %v3402
    %3712 = vmatprep.subr.bf16.mxu0 %v3399
    %3713 = vmatpush2.bf16.msra.mxu0 %v3398
    %3714 = vmatprep.subr.bf16.mxu0 %v3395
    %3715 = vmatpush2.bf16.msra.mxu0 %v3394
    %3716 = vmatprep.subr.bf16.mxu0 %v3391
    %3717 = vmatpush2.bf16.msra.mxu0 %v3390
    %3718 = vmatprep.subr.bf16.mxu0 %v3387
    %3719 = vmatpush2.bf16.msra.mxu0 %v3386
    %3720 = vmatprep.subr.bf16.mxu0 %v3383
    %3721 = vmatpush2.bf16.msra.mxu0 %v3382
    %3722 = vmatprep.mubr.bf16.mxu0 %v2811
    %3723 = vmatmul.mubr.bf16.gmra.mxu0 %v2810
    %v3724 = vpop.f32.mrf.mxu0
    %v3725 = vadd.f32 %v2955, %v3724
    %v3726 = vpop.f32.mrf.mxu0
    %v3727 = vadd.f32 %v2959, %v3726
    %v3728 = vpop.f32.mrf.mxu0
    %v3729 = vadd.f32 %v2955, %v3728
    %v3730 = vpop.f32.mrf.mxu0
    %v3731 = vadd.f32 %v2959, %v3730
    %3732 = vdwg.mxu0
    %3733 = vmatprep.subr.bf16.mxu0 %v3443
    %3734 = vmatpush1.bf16.msra.mxu0 %v3442
    %3735 = vmatprep.subr.bf16.mxu0 %v3439
    %3736 = vmatpush1.bf16.msra.mxu0 %v3438
    %3737 = vmatprep.subr.bf16.mxu0 %v3435
    %3738 = vmatpush1.bf16.msra.mxu0 %v3434
    %3739 = vmatprep.subr.bf16.mxu0 %v3431
    %3740 = vmatpush1.bf16.msra.mxu0 %v3430
    %3741 = vmatprep.subr.bf16.mxu0 %v3427
    %3742 = vmatpush1.bf16.msra.mxu0 %v3426
    %3743 = vmatprep.subr.bf16.mxu0 %v3423
    %3744 = vmatpush1.bf16.msra.mxu0 %v3422
    %3745 = vmatprep.subr.bf16.mxu0 %v3419
    %3746 = vmatpush1.bf16.msra.mxu0 %v3418
    %3747 = vmatprep.subr.bf16.mxu0 %v3415
    %3748 = vmatpush1.bf16.msra.mxu0 %v3414
    %3749 = vmatprep.subr.bf16.mxu0 %v3475
    %3750 = vmatpush2.bf16.msra.mxu0 %v3474
    %3751 = vmatprep.subr.bf16.mxu0 %v3471
    %3752 = vmatpush2.bf16.msra.mxu0 %v3470
    %3753 = vmatprep.subr.bf16.mxu0 %v3467
    %3754 = vmatpush2.bf16.msra.mxu0 %v3466
    %3755 = vmatprep.subr.bf16.mxu0 %v3463
    %3756 = vmatpush2.bf16.msra.mxu0 %v3462
    %3757 = vmatprep.subr.bf16.mxu0 %v3459
    %3758 = vmatpush2.bf16.msra.mxu0 %v3458
    %3759 = vmatprep.subr.bf16.mxu0 %v3455
    %3760 = vmatpush2.bf16.msra.mxu0 %v3454
    %3761 = vmatprep.subr.bf16.mxu0 %v3451
    %3762 = vmatpush2.bf16.msra.mxu0 %v3450
    %3763 = vmatprep.subr.bf16.mxu0 %v3447
    %3764 = vmatpush2.bf16.msra.mxu0 %v3446
    %3765 = vmatprep.mubr.bf16.mxu0 %v2813
    %3766 = vmatmul.mubr.bf16.gmra.mxu0 %v2812
    %v3767 = vpop.f32.mrf.mxu0
    %v3768 = vadd.f32 %v3725, %v3767
    %v3769 = vpop.f32.mrf.mxu0
    %v3770 = vadd.f32 %v3727, %v3769
    %v3771 = vpop.f32.mrf.mxu0
    %v3772 = vadd.f32 %v3729, %v3771
    %v3773 = vpop.f32.mrf.mxu0
    %v3774 = vadd.f32 %v3731, %v3773
    %3775 = vdwg.mxu0
    %v3776 = vmax.f32 %v3682, 0.0
    %v3777 = vmax.f32 %v3684, 0.0
    %v3778 = vmax.f32 %v3768, 0.0
    %v3779 = vmax.f32 %v3770, 0.0
    %v3780 = vmax.f32 %v3686, 0.0
    %v3781 = vmax.f32 %v3688, 0.0
    %v3782 = vmax.f32 %v3772, 0.0
    %v3783 = vmax.f32 %v3774, 0.0
    %v3784 = vpack.c.bf16 %v3780, %v3776
    %v3785 = vpack.c.bf16 %v3781, %v3777
    %v3786 = vpack.c.bf16 %v3782, %v3778
    %v3787 = vpack.c.bf16 %v3783, %v3779
    %v3788 = vld [vmem:[%s7] sm:$0xf]
    %v3789 = vld [vmem:[%s7 + $0x4] sm:$0xf]
    %v3790 = vld [vmem:[%s7 + $0x8] sm:$0xf]
    %v3791 = vld [vmem:[%s7 + $0xc] sm:$0xf]
    %v3792 = vld [vmem:[%s7 + $0x10] sm:$0xf]
    %v3793 = vld [vmem:[%s7 + $0x14] sm:$0xf]
    %v3794 = vld [vmem:[%s7 + $0x18] sm:$0xf]
    %v3795 = vld [vmem:[%s7 + $0x1c] sm:$0xf]
    %v3796 = vld [vmem:[%s7 + $0x20] sm:$0xf]
    %v3797 = vld [vmem:[%s7 + $0x24] sm:$0xf]
    %v3798 = vld [vmem:[%s7 + $0x28] sm:$0xf]
    %v3799 = vld [vmem:[%s7 + $0x2c] sm:$0xf]
    %v3800 = vld [vmem:[%s7 + $0x30] sm:$0xf]
    %v3801 = vld [vmem:[%s7 + $0x34] sm:$0xf]
    %v3802 = vld [vmem:[%s7 + $0x38] sm:$0xf]
    %v3803 = vld [vmem:[%s7 + $0x3c] sm:$0xf]
    %v3804 = vld [vmem:[%s7 + $0x40] sm:$0xf]
    %v3805 = vld [vmem:[%s7 + $0x44] sm:$0xf]
    %v3806 = vld [vmem:[%s7 + $0x48] sm:$0xf]
    %v3807 = vld [vmem:[%s7 + $0x4c] sm:$0xf]
    %v3808 = vld [vmem:[%s7 + $0x50] sm:$0xf]
    %v3809 = vld [vmem:[%s7 + $0x54] sm:$0xf]
    %v3810 = vld [vmem:[%s7 + $0x58] sm:$0xf]
    %v3811 = vld [vmem:[%s7 + $0x5c] sm:$0xf]
    %v3812 = vld [vmem:[%s7 + $0x60] sm:$0xf]
    %v3813 = vld [vmem:[%s7 + $0x64] sm:$0xf]
    %v3814 = vld [vmem:[%s7 + $0x68] sm:$0xf]
    %v3815 = vld [vmem:[%s7 + $0x6c] sm:$0xf]
    %v3816 = vld [vmem:[%s7 + $0x70] sm:$0xf]
    %v3817 = vld [vmem:[%s7 + $0x74] sm:$0xf]
    %v3818 = vld [vmem:[%s7 + $0x78] sm:$0xf]
    %v3819 = vld [vmem:[%s7 + $0x7c] sm:$0xf]
    %v3820 = vld [vmem:[%s7 + $0x80] sm:$0xf]
    %v3821 = vld [vmem:[%s7 + $0x84] sm:$0xf]
    %v3822 = vld [vmem:[%s7 + $0x88] sm:$0xf]
    %v3823 = vld [vmem:[%s7 + $0x8c] sm:$0xf]
    %v3824 = vld [vmem:[%s7 + $0x90] sm:$0xf]
    %v3825 = vld [vmem:[%s7 + $0x94] sm:$0xf]
    %v3826 = vld [vmem:[%s7 + $0x98] sm:$0xf]
    %v3827 = vld [vmem:[%s7 + $0x9c] sm:$0xf]
    %v3828 = vld [vmem:[%s7 + $0xa0] sm:$0xf]
    %v3829 = vld [vmem:[%s7 + $0xa4] sm:$0xf]
    %v3830 = vld [vmem:[%s7 + $0xa8] sm:$0xf]
    %v3831 = vld [vmem:[%s7 + $0xac] sm:$0xf]
    %v3832 = vld [vmem:[%s7 + $0xb0] sm:$0xf]
    %v3833 = vld [vmem:[%s7 + $0xb4] sm:$0xf]
    %v3834 = vld [vmem:[%s7 + $0xb8] sm:$0xf]
    %v3835 = vld [vmem:[%s7 + $0xbc] sm:$0xf]
    %v3836 = vld [vmem:[%s7 + $0xc0] sm:$0xf]
    %v3837 = vld [vmem:[%s7 + $0xc4] sm:$0xf]
    %v3838 = vld [vmem:[%s7 + $0xc8] sm:$0xf]
    %v3839 = vld [vmem:[%s7 + $0xcc] sm:$0xf]
    %v3840 = vld [vmem:[%s7 + $0xd0] sm:$0xf]
    %v3841 = vld [vmem:[%s7 + $0xd4] sm:$0xf]
    %v3842 = vld [vmem:[%s7 + $0xd8] sm:$0xf]
    %v3843 = vld [vmem:[%s7 + $0xdc] sm:$0xf]
    %v3844 = vld [vmem:[%s7 + $0xe0] sm:$0xf]
    %v3845 = vld [vmem:[%s7 + $0xe4] sm:$0xf]
    %v3846 = vld [vmem:[%s7 + $0xe8] sm:$0xf]
    %v3847 = vld [vmem:[%s7 + $0xec] sm:$0xf]
    %v3848 = vld [vmem:[%s7 + $0xf0] sm:$0xf]
    %v3849 = vld [vmem:[%s7 + $0xf4] sm:$0xf]
    %v3850 = vld [vmem:[%s7 + $0xf8] sm:$0xf]
    %v3851 = vld [vmem:[%s7 + $0xfc] sm:$0xf]
    %v3852 = vld [vmem:[%s8] sm:$0x1]
    %v3854 = vlaneseq
    %v3855 = vshrl.u32 %v3854, 7
    %v3856 = vsub.s32 0, %v3855
    %v3857 = vrot.slane %v3852, %v3856
    %v3923 = vunpack.c.l.b16 %v3788
    %v3924 = vunpack.c.l.b16 %v3789
    %v3925 = vunpack.c.l.b16 %v3790
    %v3926 = vunpack.c.l.b16 %v3791
    %v3927 = vunpack.c.l.b16 %v3792
    %v3928 = vunpack.c.l.b16 %v3793
    %v3929 = vunpack.c.l.b16 %v3794
    %v3930 = vunpack.c.l.b16 %v3795
    %v3931 = vunpack.c.l.b16 %v3796
    %v3932 = vunpack.c.l.b16 %v3797
    %v3933 = vunpack.c.l.b16 %v3798
    %v3934 = vunpack.c.l.b16 %v3799
    %v3935 = vunpack.c.l.b16 %v3800
    %v3936 = vunpack.c.l.b16 %v3801
    %v3937 = vunpack.c.l.b16 %v3802
    %v3938 = vunpack.c.l.b16 %v3803
    %v3939 = vunpack.c.l.b16 %v3804
    %v3940 = vunpack.c.l.b16 %v3805
    %v3941 = vunpack.c.l.b16 %v3806
    %v3942 = vunpack.c.l.b16 %v3807
    %v3943 = vunpack.c.l.b16 %v3808
    %v3944 = vunpack.c.l.b16 %v3809
    %v3945 = vunpack.c.l.b16 %v3810
    %v3946 = vunpack.c.l.b16 %v3811
    %v3947 = vunpack.c.l.b16 %v3812
    %v3948 = vunpack.c.l.b16 %v3813
    %v3949 = vunpack.c.l.b16 %v3814
    %v3950 = vunpack.c.l.b16 %v3815
    %v3951 = vunpack.c.l.b16 %v3816
    %v3952 = vunpack.c.l.b16 %v3817
    %v3953 = vunpack.c.l.b16 %v3818
    %v3954 = vunpack.c.l.b16 %v3819
    %v3955 = vunpack.c.l.b16 %v3820
    %v3956 = vunpack.c.l.b16 %v3821
    %v3957 = vunpack.c.l.b16 %v3822
    %v3958 = vunpack.c.l.b16 %v3823
    %v3959 = vunpack.c.l.b16 %v3824
    %v3960 = vunpack.c.l.b16 %v3825
    %v3961 = vunpack.c.l.b16 %v3826
    %v3962 = vunpack.c.l.b16 %v3827
    %v3963 = vunpack.c.l.b16 %v3828
    %v3964 = vunpack.c.l.b16 %v3829
    %v3965 = vunpack.c.l.b16 %v3830
    %v3966 = vunpack.c.l.b16 %v3831
    %v3967 = vunpack.c.l.b16 %v3832
    %v3968 = vunpack.c.l.b16 %v3833
    %v3969 = vunpack.c.l.b16 %v3834
    %v3970 = vunpack.c.l.b16 %v3835
    %v3971 = vunpack.c.l.b16 %v3836
    %v3972 = vunpack.c.l.b16 %v3837
    %v3973 = vunpack.c.l.b16 %v3838
    %v3974 = vunpack.c.l.b16 %v3839
    %v3975 = vunpack.c.l.b16 %v3840
    %v3976 = vunpack.c.l.b16 %v3841
    %v3977 = vunpack.c.l.b16 %v3842
    %v3978 = vunpack.c.l.b16 %v3843
    %v3979 = vunpack.c.l.b16 %v3844
    %v3980 = vunpack.c.l.b16 %v3845
    %v3981 = vunpack.c.l.b16 %v3846
    %v3982 = vunpack.c.l.b16 %v3847
    %v3983 = vunpack.c.l.b16 %v3848
    %v3984 = vunpack.c.l.b16 %v3849
    %v3985 = vunpack.c.l.b16 %v3850
    %v3986 = vunpack.c.l.b16 %v3851
    %v3987 = vpack.c.b16 %v3924, %v3923
    %v3988 = vpack.c.b16 %v3926, %v3925
    %v3989 = vpack.c.b16 %v3928, %v3927
    %v3990 = vpack.c.b16 %v3930, %v3929
    %v3991 = vpack.c.b16 %v3932, %v3931
    %v3992 = vpack.c.b16 %v3934, %v3933
    %v3993 = vpack.c.b16 %v3936, %v3935
    %v3994 = vpack.c.b16 %v3938, %v3937
    %v3995 = vpack.c.b16 %v3940, %v3939
    %v3996 = vpack.c.b16 %v3942, %v3941
    %v3997 = vpack.c.b16 %v3944, %v3943
    %v3998 = vpack.c.b16 %v3946, %v3945
    %v3999 = vpack.c.b16 %v3948, %v3947
    %v4000 = vpack.c.b16 %v3950, %v3949
    %v4001 = vpack.c.b16 %v3952, %v3951
    %v4002 = vpack.c.b16 %v3954, %v3953
    %v4003 = vpack.c.b16 %v3956, %v3955
    %v4004 = vpack.c.b16 %v3958, %v3957
    %v4005 = vpack.c.b16 %v3960, %v3959
    %v4006 = vpack.c.b16 %v3962, %v3961
    %v4007 = vpack.c.b16 %v3964, %v3963
    %v4008 = vpack.c.b16 %v3966, %v3965
    %v4009 = vpack.c.b16 %v3968, %v3967
    %v4010 = vpack.c.b16 %v3970, %v3969
    %v4011 = vpack.c.b16 %v3972, %v3971
    %v4012 = vpack.c.b16 %v3974, %v3973
    %v4013 = vpack.c.b16 %v3976, %v3975
    %v4014 = vpack.c.b16 %v3978, %v3977
    %v4015 = vpack.c.b16 %v3980, %v3979
    %v4016 = vpack.c.b16 %v3982, %v3981
    %v4017 = vpack.c.b16 %v3984, %v3983
    %v4018 = vpack.c.b16 %v3986, %v3985
    %4051 = vmatprep.subr.bf16.mxu0 0
    %4052 = vmatpush1.bf16.msra.mxu0 %v3994
    %4053 = vmatprep.subr.bf16.mxu0 0
    %4054 = vmatpush1.bf16.msra.mxu0 %v3993
    %4055 = vmatprep.subr.bf16.mxu0 0
    %4056 = vmatpush1.bf16.msra.mxu0 %v3992
    %4057 = vmatprep.subr.bf16.mxu0 0
    %4058 = vmatpush1.bf16.msra.mxu0 %v3991
    %4059 = vmatprep.subr.bf16.mxu0 0
    %4060 = vmatpush1.bf16.msra.mxu0 %v3990
    %4061 = vmatprep.subr.bf16.mxu0 0
    %4062 = vmatpush1.bf16.msra.mxu0 %v3989
    %4063 = vmatprep.subr.bf16.mxu0 0
    %4064 = vmatpush1.bf16.msra.mxu0 %v3988
    %4065 = vmatprep.subr.bf16.mxu0 0
    %4066 = vmatpush1.bf16.msra.mxu0 %v3987
    %4067 = vmatprep.subr.bf16.mxu0 0
    %4068 = vmatpush2.bf16.msra.mxu0 %v4002
    %4069 = vmatprep.subr.bf16.mxu0 0
    %4070 = vmatpush2.bf16.msra.mxu0 %v4001
    %4071 = vmatprep.subr.bf16.mxu0 0
    %4072 = vmatpush2.bf16.msra.mxu0 %v4000
    %4073 = vmatprep.subr.bf16.mxu0 0
    %4074 = vmatpush2.bf16.msra.mxu0 %v3999
    %4075 = vmatprep.subr.bf16.mxu0 0
    %4076 = vmatpush2.bf16.msra.mxu0 %v3998
    %4077 = vmatprep.subr.bf16.mxu0 0
    %4078 = vmatpush2.bf16.msra.mxu0 %v3997
    %4079 = vmatprep.subr.bf16.mxu0 0
    %4080 = vmatpush2.bf16.msra.mxu0 %v3996
    %4081 = vmatprep.subr.bf16.mxu0 0
    %4082 = vmatpush2.bf16.msra.mxu0 %v3995
    %4083 = vmatprep.mubr.bf16.mxu0 %v3785
    %4084 = vmatmul.mubr.bf16.gmra.mxu0 %v3784
    %v4085 = vpop.f32.mrf.mxu0
    %v4086 = vadd.f32 %v3857, %v4085
    %v4087 = vpop.f32.mrf.mxu0
    %v4088 = vpop.f32.mrf.mxu0
    %v4089 = vadd.f32 %v3857, %v4088
    %v4090 = vpop.f32.mrf.mxu0
    %4091 = vdwg.mxu0
    %4092 = vmatprep.subr.bf16.mxu0 0
    %4093 = vmatpush1.bf16.msra.mxu0 %v4010
    %4094 = vmatprep.subr.bf16.mxu0 0
    %4095 = vmatpush1.bf16.msra.mxu0 %v4009
    %4096 = vmatprep.subr.bf16.mxu0 0
    %4097 = vmatpush1.bf16.msra.mxu0 %v4008
    %4098 = vmatprep.subr.bf16.mxu0 0
    %4099 = vmatpush1.bf16.msra.mxu0 %v4007
    %4100 = vmatprep.subr.bf16.mxu0 0
    %4101 = vmatpush1.bf16.msra.mxu0 %v4006
    %4102 = vmatprep.subr.bf16.mxu0 0
    %4103 = vmatpush1.bf16.msra.mxu0 %v4005
    %4104 = vmatprep.subr.bf16.mxu0 0
    %4105 = vmatpush1.bf16.msra.mxu0 %v4004
    %4106 = vmatprep.subr.bf16.mxu0 0
    %4107 = vmatpush1.bf16.msra.mxu0 %v4003
    %4108 = vmatprep.subr.bf16.mxu0 0
    %4109 = vmatpush2.bf16.msra.mxu0 %v4018
    %4110 = vmatprep.subr.bf16.mxu0 0
    %4111 = vmatpush2.bf16.msra.mxu0 %v4017
    %4112 = vmatprep.subr.bf16.mxu0 0
    %4113 = vmatpush2.bf16.msra.mxu0 %v4016
    %4114 = vmatprep.subr.bf16.mxu0 0
    %4115 = vmatpush2.bf16.msra.mxu0 %v4015
    %4116 = vmatprep.subr.bf16.mxu0 0
    %4117 = vmatpush2.bf16.msra.mxu0 %v4014
    %4118 = vmatprep.subr.bf16.mxu0 0
    %4119 = vmatpush2.bf16.msra.mxu0 %v4013
    %4120 = vmatprep.subr.bf16.mxu0 0
    %4121 = vmatpush2.bf16.msra.mxu0 %v4012
    %4122 = vmatprep.subr.bf16.mxu0 0
    %4123 = vmatpush2.bf16.msra.mxu0 %v4011
    %4124 = vmatprep.mubr.bf16.mxu0 %v3787
    %4125 = vmatmul.mubr.bf16.gmra.mxu0 %v3786
    %v4126 = vpop.f32.mrf.mxu0
    %v4127 = vadd.f32 %v4086, %v4126
    %v4128 = vpop.f32.mrf.mxu0
    %v4129 = vpop.f32.mrf.mxu0
    %v4130 = vadd.f32 %v4089, %v4129
    %v4131 = vpop.f32.mrf.mxu0
    %4132 = vdwg.mxu0
    %4133 = vst [vmem:[%s9] sm:$0xff] %v4127
    %4134 = vst [vmem:[%s9 + $0x8] sm:$0xff] %v4130
    // Predicated region
    $region50: #{model_parallel_nn_forward.1} parent=1 // pred_check
      _
    $region51: #{model_parallel_nn_forward.1} parent=1 // pred_check_branch
      %4136 = sbr.rel (0) target = $region53
    $region52: #{model_parallel_nn_forward.1} parent=1 // pred_region
      _
    $region53: #{model_parallel_nn_forward.1} parent=1 // pred_fallthru
      _
    // Predicated region
    $region54: #{model_parallel_nn_forward.1} parent=1 // pred_check
      _
    $region55: #{model_parallel_nn_forward.1} parent=1 // pred_check_branch
      %4138 = sbr.rel (0) target = $region57
    $region56: #{model_parallel_nn_forward.1} parent=1 // pred_region
      _
    $region57: #{model_parallel_nn_forward.1} parent=1 // pred_fallthru
      _
    %4139 = vsyncpa [#allocation3], 1
    %4140 = vsyncpa [#allocation5], 1

</llo_original>
